<compile_context>
chip_gen: v7x
topology: tpu7x:2x2x1
jax: 0.10.0
libtpu: 0.0.40
codegen_flags: <defaults>
</compile_context>

<pallas_src>
import functools
import math

import jax
import jax.numpy as jnp
from jax.experimental import pallas as pl
from jax.experimental.pallas import tpu as pltpu


# ----------------------------------------------------------------------------
# In-kernel building blocks (operate on values already resident in vregs/VMEM)
# ----------------------------------------------------------------------------
def _layer_norm(y, g, b, eps):
    mu = jnp.mean(y, axis=-1, keepdims=True)
    var = jnp.mean(jnp.square(y - mu), axis=-1, keepdims=True)
    return (y - mu) * jax.lax.rsqrt(var + eps) * g + b


def _mha_sublayer(q_in, kv_in, masked, wq, bq, wkv, bkv, wo, bo, g, beta,
                  ctx_scr, *, nheads, scale, eps):
    """Fused multi-head attention + residual + LayerNorm.

    q_in: (Tq, D) f32 (also the residual), kv_in: (Tk, D) f32,
    masked: bool (Tq, Tk), True == position is masked out.
    ctx_scr: (Tq, D) bf16 VMEM scratch used to concatenate head contexts.
    Returns (Tq, D) f32.
    """
    Tq, D = q_in.shape
    dk = D // nheads

    # Projections: bf16 MXU inputs, f32 accumulation.  K and V share one matmul.
    qp = jnp.dot(q_in.astype(jnp.bfloat16), wq,
                 preferred_element_type=jnp.float32) + bq            # (Tq, D)
    kvp = jnp.dot(kv_in.astype(jnp.bfloat16), wkv,
                  preferred_element_type=jnp.float32) + bkv          # (Tk, 2D)

    # Casts hoisted out of the head loop: one full-width cast per array.
    qp16 = qp.astype(jnp.bfloat16)
    kvp16 = kvp.astype(jnp.bfloat16)

    for h in range(nheads):                                          # static
        lo = h * dk
        qh = qp16[:, lo:lo + dk]                                     # (Tq, dk)
        kh = kvp16[:, lo:lo + dk]                                    # (Tk, dk)
        vh = kvp16[:, D + lo:D + lo + dk]                            # (Tk, dk)
        # Q.K^T via dot_general contracting on the last dims: no transpose.
        s = jax.lax.dot_general(qh, kh, (((1,), (1,)), ((), ())),
                                preferred_element_type=jnp.float32) * scale
        s = jnp.where(masked, jnp.float32(-1e9), s)
        s = s - jnp.max(s, axis=-1, keepdims=True)
        p = jnp.exp(s)
        # approx=True -> EUP reciprocal (error << bf16 matmul noise floor);
        # switch to approx=False if bit-level closeness to torch is required.
        p = p * pl.reciprocal(jnp.sum(p, axis=-1, keepdims=True), approx=True)
        ctx = jnp.dot(p.astype(jnp.bfloat16), vh,
                      preferred_element_type=jnp.float32)            # (Tq, dk)
        ctx_scr[:, lo:lo + dk] = ctx.astype(jnp.bfloat16)

    # One wide output projection (full-D contraction fills the MXU depth)
    out = jnp.dot(ctx_scr[...], wo, preferred_element_type=jnp.float32) + bo
    return _layer_norm(q_in + out, g, beta, eps)


def _ffn_sublayer(y, w1, b1, w2, b2, g, beta, *, eps):
    hdn = jnp.dot(y.astype(jnp.bfloat16), w1,
                  preferred_element_type=jnp.float32) + b1
    hdn = jnp.maximum(hdn, 0.0)
    out = jnp.dot(hdn.astype(jnp.bfloat16), w2,
                  preferred_element_type=jnp.float32) + b2
    return _layer_norm(y + out, g, beta, eps)


# ----------------------------------------------------------------------------
# Fused decoder-STACK kernel: all layers, one grid step = one (batch, layer)
# ----------------------------------------------------------------------------
def _decoder_stack_kernel(y0_ref, h_ref, hmask_ref,
                          wq_ref, bq_ref, wkv_ref, bkv_ref, wo_ref, bo_ref,
                          g_ref, beta_ref, w1_ref, b1_ref, w2_ref, b2_ref,
                          o_ref, y_scr, ctx_scr, *, nheads, scale, eps):
    l = pl.program_id(1)          # layer index ("arbitrary", innermost)

    # Layer 0: load the embedded tokens into the carried activation scratch.
    @pl.when(l == 0)
    def _():
        y_scr[...] = y0_ref[0]

    y = y_scr[...]                # (T, D)     f32, carried across layers
    henc = h_ref[0]               # (Tenc, D)  f32
    T = y.shape[0]
    Tenc = henc.shape[0]

    wq, bq = wq_ref[0], bq_ref[0]
    wkv, bkv = wkv_ref[0], bkv_ref[0]
    wo, bo = wo_ref[0], bo_ref[0]
    g, beta = g_ref[0], beta_ref[0]
    w1, b1 = w1_ref[0], b1_ref[0]
    w2, b2 = w2_ref[0], b2_ref[0]

    # Causal (subsequent) mask built in-kernel: True where key pos > query pos.
    qpos = jax.lax.broadcasted_iota(jnp.int32, (T, T), 0)
    kpos = jax.lax.broadcasted_iota(jnp.int32, (T, T), 1)
    causal_masked = kpos > qpos
    # Encoder padding mask (1.0 == padded frame).
    henc_masked = jnp.broadcast_to(hmask_ref[0], (T, Tenc)) > 0.5

    # masked self-attention + residual + LayerNorm
    y = _mha_sublayer(y, y, causal_masked, wq, bq, wkv, bkv, wo, bo, g, beta,
                      ctx_scr, nheads=nheads, scale=scale, eps=eps)
    # cross-attention over encoder output (reference reuses the same attention
    # weights and the same LayerNorm for both attention blocks)
    y = _mha_sublayer(y, henc, henc_masked, wq, bq, wkv, bkv, wo, bo, g, beta,
                      ctx_scr, nheads=nheads, scale=scale, eps=eps)
    # position-wise feed-forward + residual + LayerNorm
    y = _ffn_sublayer(y, w1, b1, w2, b2, g, beta, eps=eps)

    y_scr[...] = y                # carry to next layer (stays in VMEM)

    # Only the last layer's activation is written back to HBM (bf16: halves
    # the bytes the final vocab projection has to read).
    @pl.when(l == pl.num_programs(1) - 1)
    def _():
        o_ref[0] = y.astype(o_ref.dtype)


def decoder_stack(layers, y_emb, h, hmask, *, nheads, eps=1e-5):
    """y_emb: (B, T, D) f32 embedded tokens; h: (B, Tenc, D) f32 encoder out;
    hmask: (B, 1, Tenc) f32 (1.0 == encoder padding).  Returns (B, T, D) bf16.
    """
    B, T, D = y_emb.shape
    Tenc = h.shape[1]
    L = layers["wq"].shape[0]
    F = layers["w1"].shape[2]
    dk = D // nheads
    kernel = functools.partial(_decoder_stack_kernel, nheads=nheads,
                               scale=1.0 / math.sqrt(dk), eps=eps)

    def wspec(shape):   # stacked per-layer weights: block indexed by layer l
        return pl.BlockSpec((1,) + shape, lambda b, l: (l, 0, 0))

    def bspec(shape):   # per-batch blocks: constant across the layer axis
        return pl.BlockSpec((1,) + shape, lambda b, l: (b, 0, 0))

    return pl.pallas_call(
        kernel,
        out_shape=jax.ShapeDtypeStruct((B, T, D), jnp.bfloat16),
        grid=(B, L),
        in_specs=[
            bspec((T, D)),                       # embedded tokens
            bspec((Tenc, D)),                    # encoder output
            bspec((1, Tenc)),                    # encoder pad mask
            wspec((D, D)), wspec((1, D)),        # wq, bq
            wspec((D, 2 * D)), wspec((1, 2 * D)),  # wkv, bkv
            wspec((D, D)), wspec((1, D)),        # wo, bo
            wspec((1, D)), wspec((1, D)),        # ln gamma, ln beta
            wspec((D, F)), wspec((1, F)),        # w1, b1
            wspec((F, D)), wspec((1, D)),        # w2, b2
        ],
        out_specs=pl.BlockSpec((1, T, D), lambda b, l: (b, 0, 0)),
        scratch_shapes=[
            pltpu.VMEM((T, D), jnp.float32),     # carried activation
            pltpu.VMEM((T, D), jnp.bfloat16),    # concatenated head contexts
        ],
        compiler_params=pltpu.CompilerParams(
            dimension_semantics=("parallel", "arbitrary"),
            vmem_limit_bytes=64 * 1024 * 1024),  # headroom for realistic D/F
    )(y_emb, h, hmask,
      layers["wq"], layers["bq"], layers["wkv"], layers["bkv"],
      layers["wo"], layers["bo"], layers["ln_g"], layers["ln_b"],
      layers["w1"], layers["b1"], layers["w2"], layers["b2"])


# ----------------------------------------------------------------------------
# Final vocabulary projection: tiled over rows AND the (lane-padded) vocab axis
# ----------------------------------------------------------------------------
def _proj_kernel(x_ref, w_ref, b_ref, o_ref):
    o_ref[...] = jnp.dot(x_ref[...].astype(jnp.bfloat16), w_ref[...],
                         preferred_element_type=jnp.float32) + b_ref[...]


def _pick_tile(n, candidates):
    for c in candidates:
        if n % c == 0:
            return c
    return n


def final_projection(x, w, b):
    """x: (M, D) bf16, w: (D, Np) bf16 with Np a multiple of 128, b: (1, Np)."""
    M, D = x.shape
    Np = w.shape[1]
    bm = _pick_tile(M, (256, 128, 64, 32, 16, 8))
    bn = _pick_tile(Np, (2048, 1024, 512, 256, 128))
    return pl.pallas_call(
        _proj_kernel,
        out_shape=jax.ShapeDtypeStruct((M, Np), jnp.float32),
        grid=(M // bm, Np // bn),
        in_specs=[
            pl.BlockSpec((bm, D), lambda i, j: (i, 0)),
            pl.BlockSpec((D, bn), lambda i, j: (0, j)),
            pl.BlockSpec((1, bn), lambda i, j: (0, j)),
        ],
        out_specs=pl.BlockSpec((bm, bn), lambda i, j: (i, j)),
        compiler_params=pltpu.CompilerParams(
            dimension_semantics=("parallel", "parallel")),
    )(x, w, b)


# ----------------------------------------------------------------------------
# Decoder forward (host glue: embedding gather + fused stack + vocab proj)
# ----------------------------------------------------------------------------
def decoder_forward(params, y_tokens, h, h_pad_mask, ahead):
    """y_tokens: (B, T) int32; h: (B, Tenc, D); h_pad_mask: (B, Tenc), 1 == pad.
    Returns logits (B, T, odim) f32."""
    B, T = y_tokens.shape
    D = params["emb"].shape[1]
    odim = params["odim"]

    hmask = h_pad_mask.astype(jnp.float32)[:, None, :]       # (B, 1, Tenc)
    y0 = params["emb"][y_tokens]                  # embedding (padding_idx=0)

    y = decoder_stack(params["layers"], y0, h, hmask, nheads=ahead)

    logits = final_projection(y.reshape(B * T, D), params["wf"], params["bf"])
    return logits.reshape(B, T, -1)[:, :, :odim]


# ----------------------------------------------------------------------------
# Deterministic parameter init (weights pre-stacked per layer, matmul weights
# stored in bf16; f32 MXU accumulation happens in-kernel)
# ----------------------------------------------------------------------------
def _round_up(x, m):
    return ((x + m - 1) // m) * m


def init_params(key, odim, nlayer, adim, ffdim):
    def nrm(k, shape, scale=0.05):
        return scale * jax.random.normal(k, shape, dtype=jnp.float32)

    keys = jax.random.split(key, 2 + nlayer)
    emb = nrm(keys[0], (odim, adim))
    emb = emb.at[0].set(0.0)                       # padding_idx=0

    wq, wkv, wo, w1, w2 = [], [], [], [], []
    for li in range(nlayer):
        ks = jax.random.split(keys[2 + li], 6)
        wq.append(nrm(ks[0], (adim, adim)))
        wk = nrm(ks[1], (adim, adim))
        wv = nrm(ks[2], (adim, adim))
        wkv.append(jnp.concatenate([wk, wv], axis=1))
        wo.append(nrm(ks[3], (adim, adim)))
        w1.append(nrm(ks[4], (adim, ffdim)))
        w2.append(nrm(ks[5], (ffdim, adim)))

    L = nlayer
    zeros = lambda *s: jnp.zeros(s, jnp.float32)
    layers = dict(
        wq=jnp.stack(wq).astype(jnp.bfloat16),      # (L, D, D)
        bq=zeros(L, 1, adim),
        wkv=jnp.stack(wkv).astype(jnp.bfloat16),    # (L, D, 2D)
        bkv=zeros(L, 1, 2 * adim),
        wo=jnp.stack(wo).astype(jnp.bfloat16),      # (L, D, D)  bf16 now
        bo=zeros(L, 1, adim),
        ln_g=jnp.ones((L, 1, adim), jnp.float32),
        ln_b=zeros(L, 1, adim),
        w1=jnp.stack(w1).astype(jnp.bfloat16),      # (L, D, F)
        b1=zeros(L, 1, ffdim),
        w2=jnp.stack(w2).astype(jnp.bfloat16),      # (L, F, D)
        b2=zeros(L, 1, adim),
    )

    # final projection, lane-padded to a multiple of 128 with zero columns
    odim_pad = _round_up(odim, 128)
    wf = nrm(keys[1], (adim, odim))
    wf_pad = jnp.zeros((adim, odim_pad), jnp.float32).at[:, :odim].set(wf)
    bf_pad = jnp.zeros((1, odim_pad), jnp.float32)
    return dict(emb=emb, layers=layers,
                wf=wf_pad.astype(jnp.bfloat16), bf=bf_pad, odim=odim)


# ----------------------------------------------------------------------------
if __name__ == "__main__":
    # small shapes consistent with the module
    B, T, Tenc = 2, 8, 16
    odim, nlayer, ahead, adim, ffdim = 50, 2, 4, 32, 64

    root = jax.random.PRNGKey(0)
    k_par, k_tok, k_h = jax.random.split(root, 3)

    params = init_params(k_par, odim, nlayer, adim, ffdim)
    y_tokens = jax.random.randint(k_tok, (B, T), 0, odim, dtype=jnp.int32)
    h = 0.1 * jax.random.normal(k_h, (B, Tenc, adim), dtype=jnp.float32)
    # encoder pad mask: last 4 frames of batch element 1 are padding
    h_pad_mask = jnp.zeros((B, Tenc), jnp.float32).at[1, Tenc - 4:].set(1.0)

    logits = decoder_forward(params, y_tokens, h, h_pad_mask, ahead)
    logits = jax.block_until_ready(logits)
    assert logits.shape == (B, T, odim)
    assert bool(jnp.all(jnp.isfinite(logits)))
    print("KERNEL_OK")
</pallas_src>

<mosaic_0001>
module attributes {stable_mosaic.version = 11 : i64} {
  func.func @_decoder_stack_kernel(%arg0: i32, %arg1: i32, %arg2: memref<1x8x32xf32, #tpu.memory_space<vmem>>, %arg3: memref<1x16x32xf32, #tpu.memory_space<vmem>>, %arg4: memref<1x1x16xf32, #tpu.memory_space<vmem>>, %arg5: memref<1x32x32xbf16, #tpu.memory_space<vmem>>, %arg6: memref<1x1x32xf32, #tpu.memory_space<vmem>>, %arg7: memref<1x32x64xbf16, #tpu.memory_space<vmem>>, %arg8: memref<1x1x64xf32, #tpu.memory_space<vmem>>, %arg9: memref<1x32x32xbf16, #tpu.memory_space<vmem>>, %arg10: memref<1x1x32xf32, #tpu.memory_space<vmem>>, %arg11: memref<1x1x32xf32, #tpu.memory_space<vmem>>, %arg12: memref<1x1x32xf32, #tpu.memory_space<vmem>>, %arg13: memref<1x32x64xbf16, #tpu.memory_space<vmem>>, %arg14: memref<1x1x64xf32, #tpu.memory_space<vmem>>, %arg15: memref<1x64x32xbf16, #tpu.memory_space<vmem>>, %arg16: memref<1x1x32xf32, #tpu.memory_space<vmem>>, %arg17: memref<1x8x32xbf16, #tpu.memory_space<vmem>>, %arg18: memref<8x32xf32, #tpu.memory_space<vmem>>, %arg19: memref<8x32xbf16, #tpu.memory_space<vmem>>) attributes {dimension_semantics = [#tpu.dimension_semantics<parallel>, #tpu.dimension_semantics<arbitrary>], iteration_bounds = array<i64: 2, 2>, scalar_prefetch = 0 : i64, scratch_operands = 2 : i64, tpu.core_type = #tpu.core_type<tc>, window_params = [{transform_indices = @transform_0, window_bounds = array<i64: 1, 8, 32>}, {transform_indices = @transform_1, window_bounds = array<i64: 1, 16, 32>}, {transform_indices = @transform_2, window_bounds = array<i64: 1, 1, 16>}, {transform_indices = @transform_3, window_bounds = array<i64: 1, 32, 32>}, {transform_indices = @transform_4, window_bounds = array<i64: 1, 1, 32>}, {transform_indices = @transform_5, window_bounds = array<i64: 1, 32, 64>}, {transform_indices = @transform_6, window_bounds = array<i64: 1, 1, 64>}, {transform_indices = @transform_7, window_bounds = array<i64: 1, 32, 32>}, {transform_indices = @transform_8, window_bounds = array<i64: 1, 1, 32>}, {transform_indices = @transform_9, window_bounds = array<i64: 1, 1, 32>}, {transform_indices = @transform_10, window_bounds = array<i64: 1, 1, 32>}, {transform_indices = @transform_11, window_bounds = array<i64: 1, 32, 64>}, {transform_indices = @transform_12, window_bounds = array<i64: 1, 1, 64>}, {transform_indices = @transform_13, window_bounds = array<i64: 1, 64, 32>}, {transform_indices = @transform_14, window_bounds = array<i64: 1, 1, 32>}, {transform_indices = @transform_15, window_bounds = array<i64: 1, 8, 32>}]} {
    %c0_i32 = arith.constant 0 : i32
    %0 = arith.cmpi eq, %arg1, %c0_i32 : i32
    %1 = arith.extui %0 : i1 to i32
    %c0_i32_0 = arith.constant 0 : i32
    %2 = arith.cmpi ne, %1, %c0_i32_0 : i32
    scf.if %2 {
      %c0_136 = arith.constant 0 : index
      %c0_137 = arith.constant 0 : index
      %c0_138 = arith.constant 0 : index
      %326 = vector.load %arg2[%c0_136, %c0_137, %c0_138] : memref<1x8x32xf32, #tpu.memory_space<vmem>>, vector<1x8x32xf32>
      %327 = vector.shape_cast %326 : vector<1x8x32xf32> to vector<8x32xf32>
      %c0_139 = arith.constant 0 : index
      %c0_140 = arith.constant 0 : index
      %328 = vector.load %arg18[%c0_139, %c0_140] : memref<8x32xf32, #tpu.memory_space<vmem>>, vector<8x32xf32>
      tpu.vector_store %arg18[%c0_139, %c0_140], %327 {strides = array<i32>} : memref<8x32xf32, #tpu.memory_space<vmem>>, vector<8x32xf32>,
    } else {
    }
    %c0 = arith.constant 0 : index
    %c0_1 = arith.constant 0 : index
    %3 = vector.load %arg18[%c0, %c0_1] : memref<8x32xf32, #tpu.memory_space<vmem>>, vector<8x32xf32>
    %c0_2 = arith.constant 0 : index
    %c0_3 = arith.constant 0 : index
    %c0_4 = arith.constant 0 : index
    %4 = vector.load %arg3[%c0_2, %c0_3, %c0_4] : memref<1x16x32xf32, #tpu.memory_space<vmem>>, vector<1x16x32xf32>
    %5 = vector.shape_cast %4 : vector<1x16x32xf32> to vector<16x32xf32>
    %c0_5 = arith.constant 0 : index
    %c0_6 = arith.constant 0 : index
    %c0_7 = arith.constant 0 : index
    %6 = vector.load %arg5[%c0_5, %c0_6, %c0_7] : memref<1x32x32xbf16, #tpu.memory_space<vmem>>, vector<1x32x32xbf16>
    %7 = vector.shape_cast %6 : vector<1x32x32xbf16> to vector<32x32xbf16>
    %c0_8 = arith.constant 0 : index
    %c0_9 = arith.constant 0 : index
    %c0_10 = arith.constant 0 : index
    %8 = vector.load %arg6[%c0_8, %c0_9, %c0_10] : memref<1x1x32xf32, #tpu.memory_space<vmem>>, vector<1x1x32xf32>
    %9 = vector.shape_cast %8 : vector<1x1x32xf32> to vector<1x32xf32>
    %c0_11 = arith.constant 0 : index
    %c0_12 = arith.constant 0 : index
    %c0_13 = arith.constant 0 : index
    %10 = vector.load %arg7[%c0_11, %c0_12, %c0_13] : memref<1x32x64xbf16, #tpu.memory_space<vmem>>, vector<1x32x64xbf16>
    %11 = vector.shape_cast %10 : vector<1x32x64xbf16> to vector<32x64xbf16>
    %c0_14 = arith.constant 0 : index
    %c0_15 = arith.constant 0 : index
    %c0_16 = arith.constant 0 : index
    %12 = vector.load %arg8[%c0_14, %c0_15, %c0_16] : memref<1x1x64xf32, #tpu.memory_space<vmem>>, vector<1x1x64xf32>
    %13 = vector.shape_cast %12 : vector<1x1x64xf32> to vector<1x64xf32>
    %c0_17 = arith.constant 0 : index
    %c0_18 = arith.constant 0 : index
    %c0_19 = arith.constant 0 : index
    %14 = vector.load %arg9[%c0_17, %c0_18, %c0_19] : memref<1x32x32xbf16, #tpu.memory_space<vmem>>, vector<1x32x32xbf16>
    %15 = vector.shape_cast %14 : vector<1x32x32xbf16> to vector<32x32xbf16>
    %c0_20 = arith.constant 0 : index
    %c0_21 = arith.constant 0 : index
    %c0_22 = arith.constant 0 : index
    %16 = vector.load %arg10[%c0_20, %c0_21, %c0_22] : memref<1x1x32xf32, #tpu.memory_space<vmem>>, vector<1x1x32xf32>
    %17 = vector.shape_cast %16 : vector<1x1x32xf32> to vector<1x32xf32>
    %c0_23 = arith.constant 0 : index
    %c0_24 = arith.constant 0 : index
    %c0_25 = arith.constant 0 : index
    %18 = vector.load %arg11[%c0_23, %c0_24, %c0_25] : memref<1x1x32xf32, #tpu.memory_space<vmem>>, vector<1x1x32xf32>
    %19 = vector.shape_cast %18 : vector<1x1x32xf32> to vector<1x32xf32>
    %c0_26 = arith.constant 0 : index
    %c0_27 = arith.constant 0 : index
    %c0_28 = arith.constant 0 : index
    %20 = vector.load %arg12[%c0_26, %c0_27, %c0_28] : memref<1x1x32xf32, #tpu.memory_space<vmem>>, vector<1x1x32xf32>
    %21 = vector.shape_cast %20 : vector<1x1x32xf32> to vector<1x32xf32>
    %c0_29 = arith.constant 0 : index
    %c0_30 = arith.constant 0 : index
    %c0_31 = arith.constant 0 : index
    %22 = vector.load %arg13[%c0_29, %c0_30, %c0_31] : memref<1x32x64xbf16, #tpu.memory_space<vmem>>, vector<1x32x64xbf16>
    %23 = vector.shape_cast %22 : vector<1x32x64xbf16> to vector<32x64xbf16>
    %c0_32 = arith.constant 0 : index
    %c0_33 = arith.constant 0 : index
    %c0_34 = arith.constant 0 : index
    %24 = vector.load %arg14[%c0_32, %c0_33, %c0_34] : memref<1x1x64xf32, #tpu.memory_space<vmem>>, vector<1x1x64xf32>
    %25 = vector.shape_cast %24 : vector<1x1x64xf32> to vector<1x64xf32>
    %c0_35 = arith.constant 0 : index
    %c0_36 = arith.constant 0 : index
    %c0_37 = arith.constant 0 : index
    %26 = vector.load %arg15[%c0_35, %c0_36, %c0_37] : memref<1x64x32xbf16, #tpu.memory_space<vmem>>, vector<1x64x32xbf16>
    %27 = vector.shape_cast %26 : vector<1x64x32xbf16> to vector<64x32xbf16>
    %c0_38 = arith.constant 0 : index
    %c0_39 = arith.constant 0 : index
    %c0_40 = arith.constant 0 : index
    %28 = vector.load %arg16[%c0_38, %c0_39, %c0_40] : memref<1x1x32xf32, #tpu.memory_space<vmem>>, vector<1x1x32xf32>
    %29 = vector.shape_cast %28 : vector<1x1x32xf32> to vector<1x32xf32>
    %30 = tpu.iota {dimensions = array<i32: 0>} : vector<8x8xi32>
    %31 = tpu.iota {dimensions = array<i32: 1>} : vector<8x8xi32>
    %32 = arith.cmpi sgt, %31, %30 : vector<8x8xi32>
    %c0_41 = arith.constant 0 : index
    %c0_42 = arith.constant 0 : index
    %c0_43 = arith.constant 0 : index
    %33 = vector.load %arg4[%c0_41, %c0_42, %c0_43] : memref<1x1x16xf32, #tpu.memory_space<vmem>>, vector<1x1x16xf32>
    %34 = vector.shape_cast %33 : vector<1x1x16xf32> to vector<1x16xf32>
    %35 = vector.shape_cast %34 : vector<1x16xf32> to vector<1x16xf32>
    %36 = vector.broadcast %35 : vector<1x16xf32> to vector<8x16xf32>
    %cst = arith.constant 5.000000e-01 : f32
    %37 = vector.broadcast %cst : f32 to vector<8x16xf32>
    %38 = arith.cmpf ogt, %36, %37 : vector<8x16xf32>
    %39 = arith.truncf %3 : vector<8x32xf32> to vector<8x32xbf16>
    %cst_44 = arith.constant dense<0.000000e+00> : vector<8x32xf32>
    %40 = tpu.matmul %39, %7, %cst_44 {dimension_numbers = #tpu.dot_dimension_numbers<[1], [0], [0], [1], [0, 0, 1, 1], [], []>} : vector<8x32xbf16>, vector<32x32xbf16>, vector<8x32xf32> -> vector<8x32xf32>
    %41 = vector.broadcast %9 : vector<1x32xf32> to vector<8x32xf32>
    %42 = arith.addf %40, %41 : vector<8x32xf32>
    %43 = arith.truncf %3 : vector<8x32xf32> to vector<8x32xbf16>
    %cst_45 = arith.constant dense<0.000000e+00> : vector<8x64xf32>
    %44 = tpu.matmul %43, %11, %cst_45 {dimension_numbers = #tpu.dot_dimension_numbers<[1], [0], [0], [1], [0, 0, 1, 1], [], []>} : vector<8x32xbf16>, vector<32x64xbf16>, vector<8x64xf32> -> vector<8x64xf32>
    %45 = vector.broadcast %13 : vector<1x64xf32> to vector<8x64xf32>
    %46 = arith.addf %44, %45 : vector<8x64xf32>
    %47 = arith.truncf %42 : vector<8x32xf32> to vector<8x32xbf16>
    %48 = arith.truncf %46 : vector<8x64xf32> to vector<8x64xbf16>
    %49 = vector.extract_strided_slice %47 {offsets = [0, 0], sizes = [8, 8], strides = [1, 1]} : vector<8x32xbf16> to vector<8x8xbf16>
    %50 = vector.extract_strided_slice %48 {offsets = [0, 0], sizes = [8, 8], strides = [1, 1]} : vector<8x64xbf16> to vector<8x8xbf16>
    %51 = vector.extract_strided_slice %48 {offsets = [0, 32], sizes = [8, 8], strides = [1, 1]} : vector<8x64xbf16> to vector<8x8xbf16>
    %cst_46 = arith.constant dense<0.000000e+00> : vector<8x8xf32>
    %52 = tpu.matmul %49, %50, %cst_46 {dimension_numbers = #tpu.dot_dimension_numbers<[1], [1], [0], [0], [0, 0, 1, 0], [], []>} : vector<8x8xbf16>, vector<8x8xbf16>, vector<8x8xf32> -> vector<8x8xf32>
    %cst_47 = arith.constant 0.353553385 : f32
    %53 = vector.broadcast %cst_47 : f32 to vector<8x8xf32>
    %54 = arith.mulf %52, %53 : vector<8x8xf32>
    %cst_48 = arith.constant -1.000000e+09 : f32
    %55 = vector.broadcast %cst_48 : f32 to vector<8x8xf32>
    %56 = arith.select %32, %55, %54 : vector<8x8xi1>, vector<8x8xf32>
    %cst_49 = arith.constant dense<0xFF800000> : vector<8xf32>
    %57 = vector.multi_reduction <maximumf>, %56, %cst_49 [1] : vector<8x8xf32> to vector<8xf32>
    %58 = vector.shape_cast %57 : vector<8xf32> to vector<8x1xf32>
    %59 = vector.broadcast %58 : vector<8x1xf32> to vector<8x8xf32>
    %60 = arith.subf %56, %59 : vector<8x8xf32>
    %61 = math.exp %60 : vector<8x8xf32>
    %cst_50 = arith.constant dense<0.000000e+00> : vector<8xf32>
    %62 = vector.multi_reduction <add>, %61, %cst_50 [1] : vector<8x8xf32> to vector<8xf32>
    %63 = vector.shape_cast %62 : vector<8xf32> to vector<8x1xf32>
    %64 = tpu.reciprocal %63 {approx = true} : vector<8x1xf32> -> vector<8x1xf32>
    %65 = vector.broadcast %64 : vector<8x1xf32> to vector<8x8xf32>
    %66 = arith.mulf %61, %65 : vector<8x8xf32>
    %67 = arith.truncf %66 : vector<8x8xf32> to vector<8x8xbf16>
    %cst_51 = arith.constant dense<0.000000e+00> : vector<8x8xf32>
    %68 = tpu.matmul %67, %51, %cst_51 {dimension_numbers = #tpu.dot_dimension_numbers<[1], [0], [0], [1], [0, 0, 1, 1], [], []>} : vector<8x8xbf16>, vector<8x8xbf16>, vector<8x8xf32> -> vector<8x8xf32>
    %69 = arith.truncf %68 : vector<8x8xf32> to vector<8x8xbf16>
    %c0_52 = arith.constant 0 : index
    %c0_53 = arith.constant 0 : index
    %70 = vector.load %arg19[%c0_52, %c0_53] : memref<8x32xbf16, #tpu.memory_space<vmem>>, vector<8x8xbf16>
    tpu.vector_store %arg19[%c0_52, %c0_53], %69 {strides = array<i32>} : memref<8x32xbf16, #tpu.memory_space<vmem>>, vector<8x8xbf16>,
    %71 = vector.extract_strided_slice %47 {offsets = [0, 8], sizes = [8, 8], strides = [1, 1]} : vector<8x32xbf16> to vector<8x8xbf16>
    %72 = vector.extract_strided_slice %48 {offsets = [0, 8], sizes = [8, 8], strides = [1, 1]} : vector<8x64xbf16> to vector<8x8xbf16>
    %73 = vector.extract_strided_slice %48 {offsets = [0, 40], sizes = [8, 8], strides = [1, 1]} : vector<8x64xbf16> to vector<8x8xbf16>
    %cst_54 = arith.constant dense<0.000000e+00> : vector<8x8xf32>
    %74 = tpu.matmul %71, %72, %cst_54 {dimension_numbers = #tpu.dot_dimension_numbers<[1], [1], [0], [0], [0, 0, 1, 0], [], []>} : vector<8x8xbf16>, vector<8x8xbf16>, vector<8x8xf32> -> vector<8x8xf32>
    %cst_55 = arith.constant 0.353553385 : f32
    %75 = vector.broadcast %cst_55 : f32 to vector<8x8xf32>
    %76 = arith.mulf %74, %75 : vector<8x8xf32>
    %cst_56 = arith.constant -1.000000e+09 : f32
    %77 = vector.broadcast %cst_56 : f32 to vector<8x8xf32>
    %78 = arith.select %32, %77, %76 : vector<8x8xi1>, vector<8x8xf32>
    %cst_57 = arith.constant dense<0xFF800000> : vector<8xf32>
    %79 = vector.multi_reduction <maximumf>, %78, %cst_57 [1] : vector<8x8xf32> to vector<8xf32>
    %80 = vector.shape_cast %79 : vector<8xf32> to vector<8x1xf32>
    %81 = vector.broadcast %80 : vector<8x1xf32> to vector<8x8xf32>
    %82 = arith.subf %78, %81 : vector<8x8xf32>
    %83 = math.exp %82 : vector<8x8xf32>
    %cst_58 = arith.constant dense<0.000000e+00> : vector<8xf32>
    %84 = vector.multi_reduction <add>, %83, %cst_58 [1] : vector<8x8xf32> to vector<8xf32>
    %85 = vector.shape_cast %84 : vector<8xf32> to vector<8x1xf32>
    %86 = tpu.reciprocal %85 {approx = true} : vector<8x1xf32> -> vector<8x1xf32>
    %87 = vector.broadcast %86 : vector<8x1xf32> to vector<8x8xf32>
    %88 = arith.mulf %83, %87 : vector<8x8xf32>
    %89 = arith.truncf %88 : vector<8x8xf32> to vector<8x8xbf16>
    %cst_59 = arith.constant dense<0.000000e+00> : vector<8x8xf32>
    %90 = tpu.matmul %89, %73, %cst_59 {dimension_numbers = #tpu.dot_dimension_numbers<[1], [0], [0], [1], [0, 0, 1, 1], [], []>} : vector<8x8xbf16>, vector<8x8xbf16>, vector<8x8xf32> -> vector<8x8xf32>
    %91 = arith.truncf %90 : vector<8x8xf32> to vector<8x8xbf16>
    %c0_60 = arith.constant 0 : index
    %c8 = arith.constant 8 : index
    %92 = vector.load %arg19[%c0_60, %c8] : memref<8x32xbf16, #tpu.memory_space<vmem>>, vector<8x8xbf16>
    tpu.vector_store %arg19[%c0_60, %c8], %91 {strides = array<i32>} : memref<8x32xbf16, #tpu.memory_space<vmem>>, vector<8x8xbf16>,
    %93 = vector.extract_strided_slice %47 {offsets = [0, 16], sizes = [8, 8], strides = [1, 1]} : vector<8x32xbf16> to vector<8x8xbf16>
    %94 = vector.extract_strided_slice %48 {offsets = [0, 16], sizes = [8, 8], strides = [1, 1]} : vector<8x64xbf16> to vector<8x8xbf16>
    %95 = vector.extract_strided_slice %48 {offsets = [0, 48], sizes = [8, 8], strides = [1, 1]} : vector<8x64xbf16> to vector<8x8xbf16>
    %cst_61 = arith.constant dense<0.000000e+00> : vector<8x8xf32>
    %96 = tpu.matmul %93, %94, %cst_61 {dimension_numbers = #tpu.dot_dimension_numbers<[1], [1], [0], [0], [0, 0, 1, 0], [], []>} : vector<8x8xbf16>, vector<8x8xbf16>, vector<8x8xf32> -> vector<8x8xf32>
    %cst_62 = arith.constant 0.353553385 : f32
    %97 = vector.broadcast %cst_62 : f32 to vector<8x8xf32>
    %98 = arith.mulf %96, %97 : vector<8x8xf32>
    %cst_63 = arith.constant -1.000000e+09 : f32
    %99 = vector.broadcast %cst_63 : f32 to vector<8x8xf32>
    %100 = arith.select %32, %99, %98 : vector<8x8xi1>, vector<8x8xf32>
    %cst_64 = arith.constant dense<0xFF800000> : vector<8xf32>
    %101 = vector.multi_reduction <maximumf>, %100, %cst_64 [1] : vector<8x8xf32> to vector<8xf32>
    %102 = vector.shape_cast %101 : vector<8xf32> to vector<8x1xf32>
    %103 = vector.broadcast %102 : vector<8x1xf32> to vector<8x8xf32>
    %104 = arith.subf %100, %103 : vector<8x8xf32>
    %105 = math.exp %104 : vector<8x8xf32>
    %cst_65 = arith.constant dense<0.000000e+00> : vector<8xf32>
    %106 = vector.multi_reduction <add>, %105, %cst_65 [1] : vector<8x8xf32> to vector<8xf32>
    %107 = vector.shape_cast %106 : vector<8xf32> to vector<8x1xf32>
    %108 = tpu.reciprocal %107 {approx = true} : vector<8x1xf32> -> vector<8x1xf32>
    %109 = vector.broadcast %108 : vector<8x1xf32> to vector<8x8xf32>
    %110 = arith.mulf %105, %109 : vector<8x8xf32>
    %111 = arith.truncf %110 : vector<8x8xf32> to vector<8x8xbf16>
    %cst_66 = arith.constant dense<0.000000e+00> : vector<8x8xf32>
    %112 = tpu.matmul %111, %95, %cst_66 {dimension_numbers = #tpu.dot_dimension_numbers<[1], [0], [0], [1], [0, 0, 1, 1], [], []>} : vector<8x8xbf16>, vector<8x8xbf16>, vector<8x8xf32> -> vector<8x8xf32>
    %113 = arith.truncf %112 : vector<8x8xf32> to vector<8x8xbf16>
    %c0_67 = arith.constant 0 : index
    %c16 = arith.constant 16 : index
    %114 = vector.load %arg19[%c0_67, %c16] : memref<8x32xbf16, #tpu.memory_space<vmem>>, vector<8x8xbf16>
    tpu.vector_store %arg19[%c0_67, %c16], %113 {strides = array<i32>} : memref<8x32xbf16, #tpu.memory_space<vmem>>, vector<8x8xbf16>,
    %115 = vector.extract_strided_slice %47 {offsets = [0, 24], sizes = [8, 8], strides = [1, 1]} : vector<8x32xbf16> to vector<8x8xbf16>
    %116 = vector.extract_strided_slice %48 {offsets = [0, 24], sizes = [8, 8], strides = [1, 1]} : vector<8x64xbf16> to vector<8x8xbf16>
    %117 = vector.extract_strided_slice %48 {offsets = [0, 56], sizes = [8, 8], strides = [1, 1]} : vector<8x64xbf16> to vector<8x8xbf16>
    %cst_68 = arith.constant dense<0.000000e+00> : vector<8x8xf32>
    %118 = tpu.matmul %115, %116, %cst_68 {dimension_numbers = #tpu.dot_dimension_numbers<[1], [1], [0], [0], [0, 0, 1, 0], [], []>} : vector<8x8xbf16>, vector<8x8xbf16>, vector<8x8xf32> -> vector<8x8xf32>
    %cst_69 = arith.constant 0.353553385 : f32
    %119 = vector.broadcast %cst_69 : f32 to vector<8x8xf32>
    %120 = arith.mulf %118, %119 : vector<8x8xf32>
    %cst_70 = arith.constant -1.000000e+09 : f32
    %121 = vector.broadcast %cst_70 : f32 to vector<8x8xf32>
    %122 = arith.select %32, %121, %120 : vector<8x8xi1>, vector<8x8xf32>
    %cst_71 = arith.constant dense<0xFF800000> : vector<8xf32>
    %123 = vector.multi_reduction <maximumf>, %122, %cst_71 [1] : vector<8x8xf32> to vector<8xf32>
    %124 = vector.shape_cast %123 : vector<8xf32> to vector<8x1xf32>
    %125 = vector.broadcast %124 : vector<8x1xf32> to vector<8x8xf32>
    %126 = arith.subf %122, %125 : vector<8x8xf32>
    %127 = math.exp %126 : vector<8x8xf32>
    %cst_72 = arith.constant dense<0.000000e+00> : vector<8xf32>
    %128 = vector.multi_reduction <add>, %127, %cst_72 [1] : vector<8x8xf32> to vector<8xf32>
    %129 = vector.shape_cast %128 : vector<8xf32> to vector<8x1xf32>
    %130 = tpu.reciprocal %129 {approx = true} : vector<8x1xf32> -> vector<8x1xf32>
    %131 = vector.broadcast %130 : vector<8x1xf32> to vector<8x8xf32>
    %132 = arith.mulf %127, %131 : vector<8x8xf32>
    %133 = arith.truncf %132 : vector<8x8xf32> to vector<8x8xbf16>
    %cst_73 = arith.constant dense<0.000000e+00> : vector<8x8xf32>
    %134 = tpu.matmul %133, %117, %cst_73 {dimension_numbers = #tpu.dot_dimension_numbers<[1], [0], [0], [1], [0, 0, 1, 1], [], []>} : vector<8x8xbf16>, vector<8x8xbf16>, vector<8x8xf32> -> vector<8x8xf32>
    %135 = arith.truncf %134 : vector<8x8xf32> to vector<8x8xbf16>
    %c0_74 = arith.constant 0 : index
    %c24 = arith.constant 24 : index
    %136 = vector.load %arg19[%c0_74, %c24] : memref<8x32xbf16, #tpu.memory_space<vmem>>, vector<8x8xbf16>
    tpu.vector_store %arg19[%c0_74, %c24], %135 {strides = array<i32>} : memref<8x32xbf16, #tpu.memory_space<vmem>>, vector<8x8xbf16>,
    %c0_75 = arith.constant 0 : index
    %c0_76 = arith.constant 0 : index
    %137 = vector.load %arg19[%c0_75, %c0_76] : memref<8x32xbf16, #tpu.memory_space<vmem>>, vector<8x32xbf16>
    %cst_77 = arith.constant dense<0.000000e+00> : vector<8x32xf32>
    %138 = tpu.matmul %137, %15, %cst_77 {dimension_numbers = #tpu.dot_dimension_numbers<[1], [0], [0], [1], [0, 0, 1, 1], [], []>} : vector<8x32xbf16>, vector<32x32xbf16>, vector<8x32xf32> -> vector<8x32xf32>
    %139 = vector.broadcast %17 : vector<1x32xf32> to vector<8x32xf32>
    %140 = arith.addf %138, %139 : vector<8x32xf32>
    %141 = arith.addf %3, %140 : vector<8x32xf32>
    %cst_78 = arith.constant dense<0.000000e+00> : vector<8xf32>
    %142 = vector.multi_reduction <add>, %141, %cst_78 [1] : vector<8x32xf32> to vector<8xf32>
    %143 = vector.shape_cast %142 : vector<8xf32> to vector<8x1xf32>
    %cst_79 = arith.constant 3.200000e+01 : f32
    %144 = vector.broadcast %cst_79 : f32 to vector<8x1xf32>
    %145 = arith.divf %143, %144 : vector<8x1xf32>
    %146 = vector.broadcast %145 : vector<8x1xf32> to vector<8x32xf32>
    %147 = arith.subf %141, %146 : vector<8x32xf32>
    %148 = arith.mulf %147, %147 : vector<8x32xf32>
    %cst_80 = arith.constant dense<0.000000e+00> : vector<8xf32>
    %149 = vector.multi_reduction <add>, %148, %cst_80 [1] : vector<8x32xf32> to vector<8xf32>
    %150 = vector.shape_cast %149 : vector<8xf32> to vector<8x1xf32>
    %cst_81 = arith.constant 3.200000e+01 : f32
    %151 = vector.broadcast %cst_81 : f32 to vector<8x1xf32>
    %152 = arith.divf %150, %151 : vector<8x1xf32>
    %153 = vector.broadcast %145 : vector<8x1xf32> to vector<8x32xf32>
    %154 = arith.subf %141, %153 : vector<8x32xf32>
    %cst_82 = arith.constant 9.99999974E-6 : f32
    %155 = vector.broadcast %cst_82 : f32 to vector<8x1xf32>
    %156 = arith.addf %152, %155 : vector<8x1xf32>
    %157 = math.rsqrt %156 : vector<8x1xf32>
    %158 = vector.broadcast %157 : vector<8x1xf32> to vector<8x32xf32>
    %159 = arith.mulf %154, %158 : vector<8x32xf32>
    %160 = vector.broadcast %19 : vector<1x32xf32> to vector<8x32xf32>
    %161 = arith.mulf %159, %160 : vector<8x32xf32>
    %162 = vector.broadcast %21 : vector<1x32xf32> to vector<8x32xf32>
    %163 = arith.addf %161, %162 : vector<8x32xf32>
    %164 = arith.truncf %163 : vector<8x32xf32> to vector<8x32xbf16>
    %cst_83 = arith.constant dense<0.000000e+00> : vector<8x32xf32>
    %165 = tpu.matmul %164, %7, %cst_83 {dimension_numbers = #tpu.dot_dimension_numbers<[1], [0], [0], [1], [0, 0, 1, 1], [], []>} : vector<8x32xbf16>, vector<32x32xbf16>, vector<8x32xf32> -> vector<8x32xf32>
    %166 = vector.broadcast %9 : vector<1x32xf32> to vector<8x32xf32>
    %167 = arith.addf %165, %166 : vector<8x32xf32>
    %168 = arith.truncf %5 : vector<16x32xf32> to vector<16x32xbf16>
    %cst_84 = arith.constant dense<0.000000e+00> : vector<16x64xf32>
    %169 = tpu.matmul %168, %11, %cst_84 {dimension_numbers = #tpu.dot_dimension_numbers<[1], [0], [0], [1], [0, 0, 1, 1], [], []>} : vector<16x32xbf16>, vector<32x64xbf16>, vector<16x64xf32> -> vector<16x64xf32>
    %170 = vector.broadcast %13 : vector<1x64xf32> to vector<16x64xf32>
    %171 = arith.addf %169, %170 : vector<16x64xf32>
    %172 = arith.truncf %167 : vector<8x32xf32> to vector<8x32xbf16>
    %173 = arith.truncf %171 : vector<16x64xf32> to vector<16x64xbf16>
    %174 = vector.extract_strided_slice %172 {offsets = [0, 0], sizes = [8, 8], strides = [1, 1]} : vector<8x32xbf16> to vector<8x8xbf16>
    %175 = vector.extract_strided_slice %173 {offsets = [0, 0], sizes = [16, 8], strides = [1, 1]} : vector<16x64xbf16> to vector<16x8xbf16>
    %176 = vector.extract_strided_slice %173 {offsets = [0, 32], sizes = [16, 8], strides = [1, 1]} : vector<16x64xbf16> to vector<16x8xbf16>
    %cst_85 = arith.constant dense<0.000000e+00> : vector<8x16xf32>
    %177 = tpu.matmul %174, %175, %cst_85 {dimension_numbers = #tpu.dot_dimension_numbers<[1], [1], [0], [0], [0, 0, 1, 0], [], []>} : vector<8x8xbf16>, vector<16x8xbf16>, vector<8x16xf32> -> vector<8x16xf32>
    %cst_86 = arith.constant 0.353553385 : f32
    %178 = vector.broadcast %cst_86 : f32 to vector<8x16xf32>
    %179 = arith.mulf %177, %178 : vector<8x16xf32>
    %cst_87 = arith.constant -1.000000e+09 : f32
    %180 = vector.broadcast %cst_87 : f32 to vector<8x16xf32>
    %181 = arith.select %38, %180, %179 : vector<8x16xi1>, vector<8x16xf32>
    %cst_88 = arith.constant dense<0xFF800000> : vector<8xf32>
    %182 = vector.multi_reduction <maximumf>, %181, %cst_88 [1] : vector<8x16xf32> to vector<8xf32>
    %183 = vector.shape_cast %182 : vector<8xf32> to vector<8x1xf32>
    %184 = vector.broadcast %183 : vector<8x1xf32> to vector<8x16xf32>
    %185 = arith.subf %181, %184 : vector<8x16xf32>
    %186 = math.exp %185 : vector<8x16xf32>
    %cst_89 = arith.constant dense<0.000000e+00> : vector<8xf32>
    %187 = vector.multi_reduction <add>, %186, %cst_89 [1] : vector<8x16xf32> to vector<8xf32>
    %188 = vector.shape_cast %187 : vector<8xf32> to vector<8x1xf32>
    %189 = tpu.reciprocal %188 {approx = true} : vector<8x1xf32> -> vector<8x1xf32>
    %190 = vector.broadcast %189 : vector<8x1xf32> to vector<8x16xf32>
    %191 = arith.mulf %186, %190 : vector<8x16xf32>
    %192 = arith.truncf %191 : vector<8x16xf32> to vector<8x16xbf16>
    %cst_90 = arith.constant dense<0.000000e+00> : vector<8x8xf32>
    %193 = tpu.matmul %192, %176, %cst_90 {dimension_numbers = #tpu.dot_dimension_numbers<[1], [0], [0], [1], [0, 0, 1, 1], [], []>} : vector<8x16xbf16>, vector<16x8xbf16>, vector<8x8xf32> -> vector<8x8xf32>
    %194 = arith.truncf %193 : vector<8x8xf32> to vector<8x8xbf16>
    %c0_91 = arith.constant 0 : index
    %c0_92 = arith.constant 0 : index
    %195 = vector.load %arg19[%c0_91, %c0_92] : memref<8x32xbf16, #tpu.memory_space<vmem>>, vector<8x8xbf16>
    tpu.vector_store %arg19[%c0_91, %c0_92], %194 {strides = array<i32>} : memref<8x32xbf16, #tpu.memory_space<vmem>>, vector<8x8xbf16>,
    %196 = vector.extract_strided_slice %172 {offsets = [0, 8], sizes = [8, 8], strides = [1, 1]} : vector<8x32xbf16> to vector<8x8xbf16>
    %197 = vector.extract_strided_slice %173 {offsets = [0, 8], sizes = [16, 8], strides = [1, 1]} : vector<16x64xbf16> to vector<16x8xbf16>
    %198 = vector.extract_strided_slice %173 {offsets = [0, 40], sizes = [16, 8], strides = [1, 1]} : vector<16x64xbf16> to vector<16x8xbf16>
    %cst_93 = arith.constant dense<0.000000e+00> : vector<8x16xf32>
    %199 = tpu.matmul %196, %197, %cst_93 {dimension_numbers = #tpu.dot_dimension_numbers<[1], [1], [0], [0], [0, 0, 1, 0], [], []>} : vector<8x8xbf16>, vector<16x8xbf16>, vector<8x16xf32> -> vector<8x16xf32>
    %cst_94 = arith.constant 0.353553385 : f32
    %200 = vector.broadcast %cst_94 : f32 to vector<8x16xf32>
    %201 = arith.mulf %199, %200 : vector<8x16xf32>
    %cst_95 = arith.constant -1.000000e+09 : f32
    %202 = vector.broadcast %cst_95 : f32 to vector<8x16xf32>
    %203 = arith.select %38, %202, %201 : vector<8x16xi1>, vector<8x16xf32>
    %cst_96 = arith.constant dense<0xFF800000> : vector<8xf32>
    %204 = vector.multi_reduction <maximumf>, %203, %cst_96 [1] : vector<8x16xf32> to vector<8xf32>
    %205 = vector.shape_cast %204 : vector<8xf32> to vector<8x1xf32>
    %206 = vector.broadcast %205 : vector<8x1xf32> to vector<8x16xf32>
    %207 = arith.subf %203, %206 : vector<8x16xf32>
    %208 = math.exp %207 : vector<8x16xf32>
    %cst_97 = arith.constant dense<0.000000e+00> : vector<8xf32>
    %209 = vector.multi_reduction <add>, %208, %cst_97 [1] : vector<8x16xf32> to vector<8xf32>
    %210 = vector.shape_cast %209 : vector<8xf32> to vector<8x1xf32>
    %211 = tpu.reciprocal %210 {approx = true} : vector<8x1xf32> -> vector<8x1xf32>
    %212 = vector.broadcast %211 : vector<8x1xf32> to vector<8x16xf32>
    %213 = arith.mulf %208, %212 : vector<8x16xf32>
    %214 = arith.truncf %213 : vector<8x16xf32> to vector<8x16xbf16>
    %cst_98 = arith.constant dense<0.000000e+00> : vector<8x8xf32>
    %215 = tpu.matmul %214, %198, %cst_98 {dimension_numbers = #tpu.dot_dimension_numbers<[1], [0], [0], [1], [0, 0, 1, 1], [], []>} : vector<8x16xbf16>, vector<16x8xbf16>, vector<8x8xf32> -> vector<8x8xf32>
    %216 = arith.truncf %215 : vector<8x8xf32> to vector<8x8xbf16>
    %c0_99 = arith.constant 0 : index
    %c8_100 = arith.constant 8 : index
    %217 = vector.load %arg19[%c0_99, %c8_100] : memref<8x32xbf16, #tpu.memory_space<vmem>>, vector<8x8xbf16>
    tpu.vector_store %arg19[%c0_99, %c8_100], %216 {strides = array<i32>} : memref<8x32xbf16, #tpu.memory_space<vmem>>, vector<8x8xbf16>,
    %218 = vector.extract_strided_slice %172 {offsets = [0, 16], sizes = [8, 8], strides = [1, 1]} : vector<8x32xbf16> to vector<8x8xbf16>
    %219 = vector.extract_strided_slice %173 {offsets = [0, 16], sizes = [16, 8], strides = [1, 1]} : vector<16x64xbf16> to vector<16x8xbf16>
    %220 = vector.extract_strided_slice %173 {offsets = [0, 48], sizes = [16, 8], strides = [1, 1]} : vector<16x64xbf16> to vector<16x8xbf16>
    %cst_101 = arith.constant dense<0.000000e+00> : vector<8x16xf32>
    %221 = tpu.matmul %218, %219, %cst_101 {dimension_numbers = #tpu.dot_dimension_numbers<[1], [1], [0], [0], [0, 0, 1, 0], [], []>} : vector<8x8xbf16>, vector<16x8xbf16>, vector<8x16xf32> -> vector<8x16xf32>
    %cst_102 = arith.constant 0.353553385 : f32
    %222 = vector.broadcast %cst_102 : f32 to vector<8x16xf32>
    %223 = arith.mulf %221, %222 : vector<8x16xf32>
    %cst_103 = arith.constant -1.000000e+09 : f32
    %224 = vector.broadcast %cst_103 : f32 to vector<8x16xf32>
    %225 = arith.select %38, %224, %223 : vector<8x16xi1>, vector<8x16xf32>
    %cst_104 = arith.constant dense<0xFF800000> : vector<8xf32>
    %226 = vector.multi_reduction <maximumf>, %225, %cst_104 [1] : vector<8x16xf32> to vector<8xf32>
    %227 = vector.shape_cast %226 : vector<8xf32> to vector<8x1xf32>
    %228 = vector.broadcast %227 : vector<8x1xf32> to vector<8x16xf32>
    %229 = arith.subf %225, %228 : vector<8x16xf32>
    %230 = math.exp %229 : vector<8x16xf32>
    %cst_105 = arith.constant dense<0.000000e+00> : vector<8xf32>
    %231 = vector.multi_reduction <add>, %230, %cst_105 [1] : vector<8x16xf32> to vector<8xf32>
    %232 = vector.shape_cast %231 : vector<8xf32> to vector<8x1xf32>
    %233 = tpu.reciprocal %232 {approx = true} : vector<8x1xf32> -> vector<8x1xf32>
    %234 = vector.broadcast %233 : vector<8x1xf32> to vector<8x16xf32>
    %235 = arith.mulf %230, %234 : vector<8x16xf32>
    %236 = arith.truncf %235 : vector<8x16xf32> to vector<8x16xbf16>
    %cst_106 = arith.constant dense<0.000000e+00> : vector<8x8xf32>
    %237 = tpu.matmul %236, %220, %cst_106 {dimension_numbers = #tpu.dot_dimension_numbers<[1], [0], [0], [1], [0, 0, 1, 1], [], []>} : vector<8x16xbf16>, vector<16x8xbf16>, vector<8x8xf32> -> vector<8x8xf32>
    %238 = arith.truncf %237 : vector<8x8xf32> to vector<8x8xbf16>
    %c0_107 = arith.constant 0 : index
    %c16_108 = arith.constant 16 : index
    %239 = vector.load %arg19[%c0_107, %c16_108] : memref<8x32xbf16, #tpu.memory_space<vmem>>, vector<8x8xbf16>
    tpu.vector_store %arg19[%c0_107, %c16_108], %238 {strides = array<i32>} : memref<8x32xbf16, #tpu.memory_space<vmem>>, vector<8x8xbf16>,
    %240 = vector.extract_strided_slice %172 {offsets = [0, 24], sizes = [8, 8], strides = [1, 1]} : vector<8x32xbf16> to vector<8x8xbf16>
    %241 = vector.extract_strided_slice %173 {offsets = [0, 24], sizes = [16, 8], strides = [1, 1]} : vector<16x64xbf16> to vector<16x8xbf16>
    %242 = vector.extract_strided_slice %173 {offsets = [0, 56], sizes = [16, 8], strides = [1, 1]} : vector<16x64xbf16> to vector<16x8xbf16>
    %cst_109 = arith.constant dense<0.000000e+00> : vector<8x16xf32>
    %243 = tpu.matmul %240, %241, %cst_109 {dimension_numbers = #tpu.dot_dimension_numbers<[1], [1], [0], [0], [0, 0, 1, 0], [], []>} : vector<8x8xbf16>, vector<16x8xbf16>, vector<8x16xf32> -> vector<8x16xf32>
    %cst_110 = arith.constant 0.353553385 : f32
    %244 = vector.broadcast %cst_110 : f32 to vector<8x16xf32>
    %245 = arith.mulf %243, %244 : vector<8x16xf32>
    %cst_111 = arith.constant -1.000000e+09 : f32
    %246 = vector.broadcast %cst_111 : f32 to vector<8x16xf32>
    %247 = arith.select %38, %246, %245 : vector<8x16xi1>, vector<8x16xf32>
    %cst_112 = arith.constant dense<0xFF800000> : vector<8xf32>
    %248 = vector.multi_reduction <maximumf>, %247, %cst_112 [1] : vector<8x16xf32> to vector<8xf32>
    %249 = vector.shape_cast %248 : vector<8xf32> to vector<8x1xf32>
    %250 = vector.broadcast %249 : vector<8x1xf32> to vector<8x16xf32>
    %251 = arith.subf %247, %250 : vector<8x16xf32>
    %252 = math.exp %251 : vector<8x16xf32>
    %cst_113 = arith.constant dense<0.000000e+00> : vector<8xf32>
    %253 = vector.multi_reduction <add>, %252, %cst_113 [1] : vector<8x16xf32> to vector<8xf32>
    %254 = vector.shape_cast %253 : vector<8xf32> to vector<8x1xf32>
    %255 = tpu.reciprocal %254 {approx = true} : vector<8x1xf32> -> vector<8x1xf32>
    %256 = vector.broadcast %255 : vector<8x1xf32> to vector<8x16xf32>
    %257 = arith.mulf %252, %256 : vector<8x16xf32>
    %258 = arith.truncf %257 : vector<8x16xf32> to vector<8x16xbf16>
    %cst_114 = arith.constant dense<0.000000e+00> : vector<8x8xf32>
    %259 = tpu.matmul %258, %242, %cst_114 {dimension_numbers = #tpu.dot_dimension_numbers<[1], [0], [0], [1], [0, 0, 1, 1], [], []>} : vector<8x16xbf16>, vector<16x8xbf16>, vector<8x8xf32> -> vector<8x8xf32>
    %260 = arith.truncf %259 : vector<8x8xf32> to vector<8x8xbf16>
    %c0_115 = arith.constant 0 : index
    %c24_116 = arith.constant 24 : index
    %261 = vector.load %arg19[%c0_115, %c24_116] : memref<8x32xbf16, #tpu.memory_space<vmem>>, vector<8x8xbf16>
    tpu.vector_store %arg19[%c0_115, %c24_116], %260 {strides = array<i32>} : memref<8x32xbf16, #tpu.memory_space<vmem>>, vector<8x8xbf16>,
    %c0_117 = arith.constant 0 : index
    %c0_118 = arith.constant 0 : index
    %262 = vector.load %arg19[%c0_117, %c0_118] : memref<8x32xbf16, #tpu.memory_space<vmem>>, vector<8x32xbf16>
    %cst_119 = arith.constant dense<0.000000e+00> : vector<8x32xf32>
    %263 = tpu.matmul %262, %15, %cst_119 {dimension_numbers = #tpu.dot_dimension_numbers<[1], [0], [0], [1], [0, 0, 1, 1], [], []>} : vector<8x32xbf16>, vector<32x32xbf16>, vector<8x32xf32> -> vector<8x32xf32>
    %264 = vector.broadcast %17 : vector<1x32xf32> to vector<8x32xf32>
    %265 = arith.addf %263, %264 : vector<8x32xf32>
    %266 = arith.addf %163, %265 : vector<8x32xf32>
    %cst_120 = arith.constant dense<0.000000e+00> : vector<8xf32>
    %267 = vector.multi_reduction <add>, %266, %cst_120 [1] : vector<8x32xf32> to vector<8xf32>
    %268 = vector.shape_cast %267 : vector<8xf32> to vector<8x1xf32>
    %cst_121 = arith.constant 3.200000e+01 : f32
    %269 = vector.broadcast %cst_121 : f32 to vector<8x1xf32>
    %270 = arith.divf %268, %269 : vector<8x1xf32>
    %271 = vector.broadcast %270 : vector<8x1xf32> to vector<8x32xf32>
    %272 = arith.subf %266, %271 : vector<8x32xf32>
    %273 = arith.mulf %272, %272 : vector<8x32xf32>
    %cst_122 = arith.constant dense<0.000000e+00> : vector<8xf32>
    %274 = vector.multi_reduction <add>, %273, %cst_122 [1] : vector<8x32xf32> to vector<8xf32>
    %275 = vector.shape_cast %274 : vector<8xf32> to vector<8x1xf32>
    %cst_123 = arith.constant 3.200000e+01 : f32
    %276 = vector.broadcast %cst_123 : f32 to vector<8x1xf32>
    %277 = arith.divf %275, %276 : vector<8x1xf32>
    %278 = vector.broadcast %270 : vector<8x1xf32> to vector<8x32xf32>
    %279 = arith.subf %266, %278 : vector<8x32xf32>
    %cst_124 = arith.constant 9.99999974E-6 : f32
    %280 = vector.broadcast %cst_124 : f32 to vector<8x1xf32>
    %281 = arith.addf %277, %280 : vector<8x1xf32>
    %282 = math.rsqrt %281 : vector<8x1xf32>
    %283 = vector.broadcast %282 : vector<8x1xf32> to vector<8x32xf32>
    %284 = arith.mulf %279, %283 : vector<8x32xf32>
    %285 = vector.broadcast %19 : vector<1x32xf32> to vector<8x32xf32>
    %286 = arith.mulf %284, %285 : vector<8x32xf32>
    %287 = vector.broadcast %21 : vector<1x32xf32> to vector<8x32xf32>
    %288 = arith.addf %286, %287 : vector<8x32xf32>
    %289 = arith.truncf %288 : vector<8x32xf32> to vector<8x32xbf16>
    %cst_125 = arith.constant dense<0.000000e+00> : vector<8x64xf32>
    %290 = tpu.matmul %289, %23, %cst_125 {dimension_numbers = #tpu.dot_dimension_numbers<[1], [0], [0], [1], [0, 0, 1, 1], [], []>} : vector<8x32xbf16>, vector<32x64xbf16>, vector<8x64xf32> -> vector<8x64xf32>
    %291 = vector.broadcast %25 : vector<1x64xf32> to vector<8x64xf32>
    %292 = arith.addf %290, %291 : vector<8x64xf32>
    %cst_126 = arith.constant 0.000000e+00 : f32
    %293 = vector.broadcast %cst_126 : f32 to vector<8x64xf32>
    %294 = arith.maximumf %292, %293 : vector<8x64xf32>
    %295 = arith.truncf %294 : vector<8x64xf32> to vector<8x64xbf16>
    %cst_127 = arith.constant dense<0.000000e+00> : vector<8x32xf32>
    %296 = tpu.matmul %295, %27, %cst_127 {dimension_numbers = #tpu.dot_dimension_numbers<[1], [0], [0], [1], [0, 0, 1, 1], [], []>} : vector<8x64xbf16>, vector<64x32xbf16>, vector<8x32xf32> -> vector<8x32xf32>
    %297 = vector.broadcast %29 : vector<1x32xf32> to vector<8x32xf32>
    %298 = arith.addf %296, %297 : vector<8x32xf32>
    %299 = arith.addf %288, %298 : vector<8x32xf32>
    %cst_128 = arith.constant dense<0.000000e+00> : vector<8xf32>
    %300 = vector.multi_reduction <add>, %299, %cst_128 [1] : vector<8x32xf32> to vector<8xf32>
    %301 = vector.shape_cast %300 : vector<8xf32> to vector<8x1xf32>
    %cst_129 = arith.constant 3.200000e+01 : f32
    %302 = vector.broadcast %cst_129 : f32 to vector<8x1xf32>
    %303 = arith.divf %301, %302 : vector<8x1xf32>
    %304 = vector.broadcast %303 : vector<8x1xf32> to vector<8x32xf32>
    %305 = arith.subf %299, %304 : vector<8x32xf32>
    %306 = arith.mulf %305, %305 : vector<8x32xf32>
    %cst_130 = arith.constant dense<0.000000e+00> : vector<8xf32>
    %307 = vector.multi_reduction <add>, %306, %cst_130 [1] : vector<8x32xf32> to vector<8xf32>
    %308 = vector.shape_cast %307 : vector<8xf32> to vector<8x1xf32>
    %cst_131 = arith.constant 3.200000e+01 : f32
    %309 = vector.broadcast %cst_131 : f32 to vector<8x1xf32>
    %310 = arith.divf %308, %309 : vector<8x1xf32>
    %311 = vector.broadcast %303 : vector<8x1xf32> to vector<8x32xf32>
    %312 = arith.subf %299, %311 : vector<8x32xf32>
    %cst_132 = arith.constant 9.99999974E-6 : f32
    %313 = vector.broadcast %cst_132 : f32 to vector<8x1xf32>
    %314 = arith.addf %310, %313 : vector<8x1xf32>
    %315 = math.rsqrt %314 : vector<8x1xf32>
    %316 = vector.broadcast %315 : vector<8x1xf32> to vector<8x32xf32>
    %317 = arith.mulf %312, %316 : vector<8x32xf32>
    %318 = vector.broadcast %19 : vector<1x32xf32> to vector<8x32xf32>
    %319 = arith.mulf %317, %318 : vector<8x32xf32>
    %320 = vector.broadcast %21 : vector<1x32xf32> to vector<8x32xf32>
    %321 = arith.addf %319, %320 : vector<8x32xf32>
    %c0_133 = arith.constant 0 : index
    %c0_134 = arith.constant 0 : index
    %322 = vector.load %arg18[%c0_133, %c0_134] : memref<8x32xf32, #tpu.memory_space<vmem>>, vector<8x32xf32>
    tpu.vector_store %arg18[%c0_133, %c0_134], %321 {strides = array<i32>} : memref<8x32xf32, #tpu.memory_space<vmem>>, vector<8x32xf32>,
    %c1_i32 = arith.constant 1 : i32
    %323 = arith.cmpi eq, %arg1, %c1_i32 : i32
    %324 = arith.extui %323 : i1 to i32
    %c0_i32_135 = arith.constant 0 : i32
    %325 = arith.cmpi ne, %324, %c0_i32_135 : i32
    scf.if %325 {
      %326 = arith.truncf %321 : vector<8x32xf32> to vector<8x32xbf16>
      %c0_136 = arith.constant 0 : index
      %c0_137 = arith.constant 0 : index
      %c0_138 = arith.constant 0 : index
      %327 = vector.load %arg17[%c0_136, %c0_137, %c0_138] : memref<1x8x32xbf16, #tpu.memory_space<vmem>>, vector<1x8x32xbf16>
      %328 = vector.shape_cast %327 : vector<1x8x32xbf16> to vector<8x32xbf16>
      %329 = vector.shape_cast %326 : vector<8x32xbf16> to vector<1x8x32xbf16>
      tpu.vector_store %arg17[%c0_136, %c0_137, %c0_138], %329 {strides = array<i32>} : memref<1x8x32xbf16, #tpu.memory_space<vmem>>, vector<1x8x32xbf16>,
    } else {
    }
    return
  }
  func.func @transform_0(%arg0: i32, %arg1: i32) -> (i32, i32, i32) {
    %c0_i32 = arith.constant 0 : i32
    %c0_i32_0 = arith.constant 0 : i32
    %c0_i32_1 = arith.constant 0 : i32
    return %arg0, %c0_i32, %c0_i32_0 : i32, i32, i32
  }
  func.func @transform_1(%arg0: i32, %arg1: i32) -> (i32, i32, i32) {
    %c0_i32 = arith.constant 0 : i32
    %c0_i32_0 = arith.constant 0 : i32
    %c0_i32_1 = arith.constant 0 : i32
    return %arg0, %c0_i32, %c0_i32_0 : i32, i32, i32
  }
  func.func @transform_2(%arg0: i32, %arg1: i32) -> (i32, i32, i32) {
    %c0_i32 = arith.constant 0 : i32
    %c0_i32_0 = arith.constant 0 : i32
    %c0_i32_1 = arith.constant 0 : i32
    return %arg0, %c0_i32, %c0_i32_0 : i32, i32, i32
  }
  func.func @transform_3(%arg0: i32, %arg1: i32) -> (i32, i32, i32) {
    %c0_i32 = arith.constant 0 : i32
    %c0_i32_0 = arith.constant 0 : i32
    %c0_i32_1 = arith.constant 0 : i32
    return %arg1, %c0_i32, %c0_i32_0 : i32, i32, i32
  }
  func.func @transform_4(%arg0: i32, %arg1: i32) -> (i32, i32, i32) {
    %c0_i32 = arith.constant 0 : i32
    %c0_i32_0 = arith.constant 0 : i32
    %c0_i32_1 = arith.constant 0 : i32
    return %arg1, %c0_i32, %c0_i32_0 : i32, i32, i32
  }
  func.func @transform_5(%arg0: i32, %arg1: i32) -> (i32, i32, i32) {
    %c0_i32 = arith.constant 0 : i32
    %c0_i32_0 = arith.constant 0 : i32
    %c0_i32_1 = arith.constant 0 : i32
    return %arg1, %c0_i32, %c0_i32_0 : i32, i32, i32
  }
  func.func @transform_6(%arg0: i32, %arg1: i32) -> (i32, i32, i32) {
    %c0_i32 = arith.constant 0 : i32
    %c0_i32_0 = arith.constant 0 : i32
    %c0_i32_1 = arith.constant 0 : i32
    return %arg1, %c0_i32, %c0_i32_0 : i32, i32, i32
  }
  func.func @transform_7(%arg0: i32, %arg1: i32) -> (i32, i32, i32) {
    %c0_i32 = arith.constant 0 : i32
    %c0_i32_0 = arith.constant 0 : i32
    %c0_i32_1 = arith.constant 0 : i32
    return %arg1, %c0_i32, %c0_i32_0 : i32, i32, i32
  }
  func.func @transform_8(%arg0: i32, %arg1: i32) -> (i32, i32, i32) {
    %c0_i32 = arith.constant 0 : i32
    %c0_i32_0 = arith.constant 0 : i32
    %c0_i32_1 = arith.constant 0 : i32
    return %arg1, %c0_i32, %c0_i32_0 : i32, i32, i32
  }
  func.func @transform_9(%arg0: i32, %arg1: i32) -> (i32, i32, i32) {
    %c0_i32 = arith.constant 0 : i32
    %c0_i32_0 = arith.constant 0 : i32
    %c0_i32_1 = arith.constant 0 : i32
    return %arg1, %c0_i32, %c0_i32_0 : i32, i32, i32
  }
  func.func @transform_10(%arg0: i32, %arg1: i32) -> (i32, i32, i32) {
    %c0_i32 = arith.constant 0 : i32
    %c0_i32_0 = arith.constant 0 : i32
    %c0_i32_1 = arith.constant 0 : i32
    return %arg1, %c0_i32, %c0_i32_0 : i32, i32, i32
  }
  func.func @transform_11(%arg0: i32, %arg1: i32) -> (i32, i32, i32) {
    %c0_i32 = arith.constant 0 : i32
    %c0_i32_0 = arith.constant 0 : i32
    %c0_i32_1 = arith.constant 0 : i32
    return %arg1, %c0_i32, %c0_i32_0 : i32, i32, i32
  }
  func.func @transform_12(%arg0: i32, %arg1: i32) -> (i32, i32, i32) {
    %c0_i32 = arith.constant 0 : i32
    %c0_i32_0 = arith.constant 0 : i32
    %c0_i32_1 = arith.constant 0 : i32
    return %arg1, %c0_i32, %c0_i32_0 : i32, i32, i32
  }
  func.func @transform_13(%arg0: i32, %arg1: i32) -> (i32, i32, i32) {
    %c0_i32 = arith.constant 0 : i32
    %c0_i32_0 = arith.constant 0 : i32
    %c0_i32_1 = arith.constant 0 : i32
    return %arg1, %c0_i32, %c0_i32_0 : i32, i32, i32
  }
  func.func @transform_14(%arg0: i32, %arg1: i32) -> (i32, i32, i32) {
    %c0_i32 = arith.constant 0 : i32
    %c0_i32_0 = arith.constant 0 : i32
    %c0_i32_1 = arith.constant 0 : i32
    return %arg1, %c0_i32, %c0_i32_0 : i32, i32, i32
  }
  func.func @transform_15(%arg0: i32, %arg1: i32) -> (i32, i32, i32) {
    %c0_i32 = arith.constant 0 : i32
    %c0_i32_0 = arith.constant 0 : i32
    %c0_i32_1 = arith.constant 0 : i32
    return %arg0, %c0_i32, %c0_i32_0 : i32, i32, i32
  }
}

</mosaic_0001>

<llo_original>
// kernel: tpu_custom_call.1
$region0: #{tpu_custom_call.1}
  #allocation0 [shape = 'u32[]', space=smem, size = 0x4, offset = 0x4, fixed_abs, tag = 'smem constant byte address 0x4 - core index']
  #allocation1 [shape = 'u32[144,128]{1,0:T(1,128)}', space=vmem, size = 0x12000, scoped, tag = 'internal scratch']
  #allocation2 [shape = 'f32[8,32]{1,0:T(8,128)}', space=vmem, size = 0x1000, scoped, tag = 'scratch operand']
  #allocation3 [shape = 'bf16[8,32]{1,0:T(8,128)(2,1)}', space=vmem, size = 0x800, scoped, tag = 'scratch operand']
  %s0 = inlined_call_operand.hbm [shape: f32[2,8,32], index: 0, kind: input, shape index: {}]
  %s1 = inlined_call_operand.hbm [shape: f32[2,16,32], index: 1, kind: input, shape index: {}]
  %s2 = inlined_call_operand.hbm [shape: f32[2,1,16], index: 2, kind: input, shape index: {}]
  %s3 = inlined_call_operand.hbm [shape: bf16[2,32,32], index: 3, kind: input, shape index: {}]
  %s4 = inlined_call_operand.hbm [shape: f32[2,1,32], index: 4, kind: input, shape index: {}]
  %s5 = inlined_call_operand.hbm [shape: bf16[2,32,64], index: 5, kind: input, shape index: {}]
  %s6 = inlined_call_operand.hbm [shape: f32[2,1,64], index: 6, kind: input, shape index: {}]
  %s7 = inlined_call_operand.hbm [shape: bf16[2,32,32], index: 7, kind: input, shape index: {}]
  %s8 = inlined_call_operand.hbm [shape: f32[2,1,32], index: 8, kind: input, shape index: {}]
  %s9 = inlined_call_operand.hbm [shape: f32[2,1,32], index: 9, kind: input, shape index: {}]
  %s10 = inlined_call_operand.hbm [shape: f32[2,1,32], index: 10, kind: input, shape index: {}]
  %s11 = inlined_call_operand.hbm [shape: bf16[2,32,64], index: 11, kind: input, shape index: {}]
  %s12 = inlined_call_operand.hbm [shape: f32[2,1,64], index: 12, kind: input, shape index: {}]
  %s13 = inlined_call_operand.hbm [shape: bf16[2,64,32], index: 13, kind: input, shape index: {}]
  %s14 = inlined_call_operand.hbm [shape: f32[2,1,32], index: 14, kind: input, shape index: {}]
  %s15 = inlined_call_operand.hbm [shape: bf16[2,8,32], index: 15, kind: output, shape index: {}]
  %s16 = sld [smem:[#allocation0]]
  $region161: #{tpu_custom_call.1} parent=0
    _
  %s18 = ssub.s32 1, %s16
  %s19 = scalar_select 0, %s18, %s16
  $region1: #{tpu_custom_call.1} parent=0
    #allocation4 [shape = 'u8[8192]{0}', space=vmem, size = 0x2000, scoped, tag = 'input window, operand 0']
    #allocation5 [shape = 's32[2]{0}', space=sflag, size = 0x8, scoped, tag = 'scoped memory for tpu_custom_call.1']
    #allocation6 [shape = 's32[2]{0}', space=sflag, size = 0x8, scoped, tag = 'scoped memory for tpu_custom_call.1']
    #allocation7 [shape = 'u8[16384]{0}', space=vmem, size = 0x4000, scoped, tag = 'input window, operand 1']
    #allocation8 [shape = 's32[2]{0}', space=sflag, size = 0x8, scoped, tag = 'scoped memory for tpu_custom_call.1']
    #allocation9 [shape = 'u8[1024]{0}', space=vmem, size = 0x400, scoped, tag = 'input window, operand 2']
    #allocation10 [shape = 'u8[16384]{0}', space=vmem, size = 0x4000, scoped, tag = 'input window, operand 3']
    #allocation11 [shape = 's32[2]{0}', space=sflag, size = 0x8, scoped, tag = 'scoped memory for tpu_custom_call.1']
    #allocation12 [shape = 'u8[1024]{0}', space=vmem, size = 0x400, scoped, tag = 'input window, operand 4']
    #allocation13 [shape = 'u8[16384]{0}', space=vmem, size = 0x4000, scoped, tag = 'input window, operand 5']
    #allocation14 [shape = 's32[2]{0}', space=sflag, size = 0x8, scoped, tag = 'scoped memory for tpu_custom_call.1']
    #allocation15 [shape = 'u8[1024]{0}', space=vmem, size = 0x400, scoped, tag = 'input window, operand 6']
    #allocation16 [shape = 'u8[16384]{0}', space=vmem, size = 0x4000, scoped, tag = 'input window, operand 7']
    #allocation17 [shape = 's32[2]{0}', space=sflag, size = 0x8, scoped, tag = 'scoped memory for tpu_custom_call.1']
    #allocation18 [shape = 'u8[1024]{0}', space=vmem, size = 0x400, scoped, tag = 'input window, operand 8']
    #allocation19 [shape = 'u8[1024]{0}', space=vmem, size = 0x400, scoped, tag = 'input window, operand 9']
    #allocation20 [shape = 's32[2]{0}', space=sflag, size = 0x8, scoped, tag = 'scoped memory for tpu_custom_call.1']
    #allocation21 [shape = 'u8[1024]{0}', space=vmem, size = 0x400, scoped, tag = 'input window, operand 10']
    #allocation22 [shape = 'u8[16384]{0}', space=vmem, size = 0x4000, scoped, tag = 'input window, operand 11']
    #allocation23 [shape = 's32[2]{0}', space=sflag, size = 0x8, scoped, tag = 'scoped memory for tpu_custom_call.1']
    #allocation24 [shape = 'u8[1024]{0}', space=vmem, size = 0x400, scoped, tag = 'input window, operand 12']
    #allocation25 [shape = 'u8[32768]{0}', space=vmem, size = 0x8000, scoped, tag = 'input window, operand 13']
    #allocation26 [shape = 's32[2]{0}', space=sflag, size = 0x8, scoped, tag = 'scoped memory for tpu_custom_call.1']
    #allocation27 [shape = 'u8[1024]{0}', space=vmem, size = 0x400, scoped, tag = 'input window, operand 14']
    #allocation28 [shape = 'u8[4096]{0}', space=vmem, size = 0x1000, scoped, tag = 'output window, operand 0']
    %20 = vsyncpa [#allocation5], 0
    %s21 = scalar_lea.sflag [#allocation5], 1
    %22 = vsyncpa %s21, 0
    %23 = vsyncpa [#allocation8], 0
    %s24 = scalar_lea.sflag [#allocation8], 1
    %25 = vsyncpa %s24, 0
    %26 = vsyncpa [#allocation11], 0
    %s27 = scalar_lea.sflag [#allocation11], 1
    %28 = vsyncpa %s27, 0
    %29 = vsyncpa [#allocation14], 0
    %s30 = scalar_lea.sflag [#allocation14], 1
    %31 = vsyncpa %s30, 0
    %32 = vsyncpa [#allocation17], 0
    %s33 = scalar_lea.sflag [#allocation17], 1
    %34 = vsyncpa %s33, 0
    %35 = vsyncpa [#allocation20], 0
    %s36 = scalar_lea.sflag [#allocation20], 1
    %37 = vsyncpa %s36, 0
    %38 = vsyncpa [#allocation23], 0
    %s39 = scalar_lea.sflag [#allocation23], 1
    %40 = vsyncpa %s39, 0
    %41 = vsyncpa [#allocation26], 0
    %s42 = scalar_lea.sflag [#allocation26], 1
    %43 = vsyncpa %s42, 0
    %44 = vsyncpa [#allocation6], 0
    %s45 = scalar_lea.sflag [#allocation6], 1
    %46 = vsyncpa %s45, 0
    loop: start=0, step=1, limit=6
    $region2: #{tpu_custom_call.1} parent=1 // loop_pre_header
      _
    $region3: #{tpu_custom_call.1} parent=1 // loop_header
      %s48 = sphi 0, %s52
      %p49 = scmp.ge.s32.totalorder %s48, 6
      %s55 = sphi 0, %s67
      %s56 = sphi 0, %s63
      %s57 = sphi 0, %s55
      %s58 = sphi 0, %s56
      %s59 = sphi 0, %s57
      %s60 = sphi 0, %s58
      %s70 = sphi 0, %s72
      %s73 = sphi 0, %s70
      %s74 = sphi 0, %s73
      %s90 = sphi 0, %s74
      %s96 = sphi 0, %s98
      %s99 = sphi 0, %s96
      %s100 = sphi 0, %s99
      %s116 = sphi 0, %s100
      %s122 = sphi 0, %s124
      %s125 = sphi 0, %s122
      %s126 = sphi 0, %s125
      %s142 = sphi 0, %s126
      %s148 = sphi 0, %s150
      %s151 = sphi 0, %s148
      %s152 = sphi 0, %s151
      %s168 = sphi 0, %s152
      %s174 = sphi 0, %s176
      %s177 = sphi 0, %s174
      %s178 = sphi 0, %s177
      %s194 = sphi 0, %s178
      %s200 = sphi 0, %s202
      %s203 = sphi 0, %s200
      %s204 = sphi 0, %s203
      %s220 = sphi 0, %s204
      %s226 = sphi 0, %s228
      %s229 = sphi 0, %s226
      %s230 = sphi 0, %s229
      %s246 = sphi 0, %s230
      %s252 = sphi 0, %s254
      %s255 = sphi 0, %s252
      %s256 = sphi 0, %s255
      %s272 = sphi 0, %s256
      %s278 = sphi 0, %s280
      %s281 = sphi 0, %s278
      %s282 = sphi 0, %s281
      %s298 = sphi 0, %s282
      %s304 = sphi 0, %s306
      %s307 = sphi 0, %s304
      %s308 = sphi 0, %s307
      %s324 = sphi 0, %s308
      %s330 = sphi 0, %s332
      %s333 = sphi 0, %s330
      %s334 = sphi 0, %s333
      %s350 = sphi 0, %s334
      %s356 = sphi 0, %s358
      %s359 = sphi 0, %s356
      %s360 = sphi 0, %s359
      %s376 = sphi 0, %s360
      %s382 = sphi 0, %s384
      %s385 = sphi 0, %s382
      %s386 = sphi 0, %s385
      %s402 = sphi 0, %s386
      %s408 = sphi 0, %s410
      %s411 = sphi 0, %s408
      %s412 = sphi 0, %s411
      %s428 = sphi 0, %s412
      %s434 = sphi 0, %s436
      %s437 = sphi 0, %s434
      %s438 = sphi 0, %s437
      %s454 = sphi 0, %s438
      %s460 = sphi 0, %s462
      %s463 = sphi 0, %s460
      %s464 = sphi 0, %s463
      %s480 = sphi 0, %s464
    $region4: #{tpu_custom_call.1} parent=1 // loop_header_branch
      %51 = sbr.rel (%p49) target = $region8
    $region5: #{tpu_custom_call.1} parent=1 // loop_body
      %s53 = ssub.s32 %s48, 1
      %s54 = ssub.s32 %s48, 2
      %s61 = sadd.s32 1, %s56
      %p62 = scmp.ge.s32.totalorder %s61, 2
      %s63 = scalar_select %p62, 0, %s61
      %s64 = sadd.s32 1, %s55
      %s65 = scalar_select %p62, %s64, %s55
      %p66 = scmp.ge.s32.totalorder %s65, 2
      %s67 = scalar_select %p66, 0, %s65
      %s68 = ssub.s32 %s55, %s67
      %p69 = scmp.eq.s32.totalorder %s68, 0
      %s71 = sadd.s32 %s70, 1
      %s72 = scalar_select %p69, %s70, %s71
      %p75 = pneg %p69
      %p76 = scmp.eq.s32.totalorder %s48, 3
      %p77 = por %p75, %p76
      %p78 = scmp.ne.s32.totalorder %s70, %s73
      %p79 = scmp.eq.s32.totalorder %s48, 0
      %p80 = por %p78, %p79
      %p81 = scmp.ne.s32.totalorder %s70, %s73
      %p82 = scmp.eq.s32.totalorder %s53, 3
      %p83 = por %p81, %p82
      %p84 = scmp.ne.s32.totalorder %s73, %s74
      %p85 = scmp.eq.s32.totalorder %s53, 0
      %p86 = por %p84, %p85
      %p87 = scmp.ne.s32.totalorder %s73, %s74
      %p88 = scmp.eq.s32.totalorder %s54, 3
      %p89 = por %p87, %p88
      %p91 = scmp.ne.s32.totalorder %s74, %s90
      %p92 = scmp.eq.s32.totalorder %s54, 0
      %p93 = por %p91, %p92
      %s94 = ssub.s32 %s55, %s67
      %p95 = scmp.eq.s32.totalorder %s94, 0
      %s97 = sadd.s32 %s96, 1
      %s98 = scalar_select %p95, %s96, %s97
      %p101 = pneg %p95
      %p102 = scmp.eq.s32.totalorder %s48, 3
      %p103 = por %p101, %p102
      %p104 = scmp.ne.s32.totalorder %s96, %s99
      %p105 = scmp.eq.s32.totalorder %s48, 0
      %p106 = por %p104, %p105
      %p107 = scmp.ne.s32.totalorder %s96, %s99
      %p108 = scmp.eq.s32.totalorder %s53, 3
      %p109 = por %p107, %p108
      %p110 = scmp.ne.s32.totalorder %s99, %s100
      %p111 = scmp.eq.s32.totalorder %s53, 0
      %p112 = por %p110, %p111
      %p113 = scmp.ne.s32.totalorder %s99, %s100
      %p114 = scmp.eq.s32.totalorder %s54, 3
      %p115 = por %p113, %p114
      %p117 = scmp.ne.s32.totalorder %s100, %s116
      %p118 = scmp.eq.s32.totalorder %s54, 0
      %p119 = por %p117, %p118
      %s120 = ssub.s32 %s55, %s67
      %p121 = scmp.eq.s32.totalorder %s120, 0
      %s123 = sadd.s32 %s122, 1
      %s124 = scalar_select %p121, %s122, %s123
      %p127 = pneg %p121
      %p128 = scmp.eq.s32.totalorder %s48, 3
      %p129 = por %p127, %p128
      %p130 = scmp.ne.s32.totalorder %s122, %s125
      %p131 = scmp.eq.s32.totalorder %s48, 0
      %p132 = por %p130, %p131
      %p133 = scmp.ne.s32.totalorder %s122, %s125
      %p134 = scmp.eq.s32.totalorder %s53, 3
      %p135 = por %p133, %p134
      %p136 = scmp.ne.s32.totalorder %s125, %s126
      %p137 = scmp.eq.s32.totalorder %s53, 0
      %p138 = por %p136, %p137
      %p139 = scmp.ne.s32.totalorder %s125, %s126
      %p140 = scmp.eq.s32.totalorder %s54, 3
      %p141 = por %p139, %p140
      %p143 = scmp.ne.s32.totalorder %s126, %s142
      %p144 = scmp.eq.s32.totalorder %s54, 0
      %p145 = por %p143, %p144
      %s146 = ssub.s32 %s56, %s63
      %p147 = scmp.eq.s32.totalorder %s146, 0
      %s149 = sadd.s32 %s148, 1
      %s150 = scalar_select %p147, %s148, %s149
      %p153 = pneg %p147
      %p154 = scmp.eq.s32.totalorder %s48, 3
      %p155 = por %p153, %p154
      %p156 = scmp.ne.s32.totalorder %s148, %s151
      %p157 = scmp.eq.s32.totalorder %s48, 0
      %p158 = por %p156, %p157
      %p159 = scmp.ne.s32.totalorder %s148, %s151
      %p160 = scmp.eq.s32.totalorder %s53, 3
      %p161 = por %p159, %p160
      %p162 = scmp.ne.s32.totalorder %s151, %s152
      %p163 = scmp.eq.s32.totalorder %s53, 0
      %p164 = por %p162, %p163
      %p165 = scmp.ne.s32.totalorder %s151, %s152
      %p166 = scmp.eq.s32.totalorder %s54, 3
      %p167 = por %p165, %p166
      %p169 = scmp.ne.s32.totalorder %s152, %s168
      %p170 = scmp.eq.s32.totalorder %s54, 0
      %p171 = por %p169, %p170
      %s172 = ssub.s32 %s56, %s63
      %p173 = scmp.eq.s32.totalorder %s172, 0
      %s175 = sadd.s32 %s174, 1
      %s176 = scalar_select %p173, %s174, %s175
      %p179 = pneg %p173
      %p180 = scmp.eq.s32.totalorder %s48, 3
      %p181 = por %p179, %p180
      %p182 = scmp.ne.s32.totalorder %s174, %s177
      %p183 = scmp.eq.s32.totalorder %s48, 0
      %p184 = por %p182, %p183
      %p185 = scmp.ne.s32.totalorder %s174, %s177
      %p186 = scmp.eq.s32.totalorder %s53, 3
      %p187 = por %p185, %p186
      %p188 = scmp.ne.s32.totalorder %s177, %s178
      %p189 = scmp.eq.s32.totalorder %s53, 0
      %p190 = por %p188, %p189
      %p191 = scmp.ne.s32.totalorder %s177, %s178
      %p192 = scmp.eq.s32.totalorder %s54, 3
      %p193 = por %p191, %p192
      %p195 = scmp.ne.s32.totalorder %s178, %s194
      %p196 = scmp.eq.s32.totalorder %s54, 0
      %p197 = por %p195, %p196
      %s198 = ssub.s32 %s56, %s63
      %p199 = scmp.eq.s32.totalorder %s198, 0
      %s201 = sadd.s32 %s200, 1
      %s202 = scalar_select %p199, %s200, %s201
      %p205 = pneg %p199
      %p206 = scmp.eq.s32.totalorder %s48, 3
      %p207 = por %p205, %p206
      %p208 = scmp.ne.s32.totalorder %s200, %s203
      %p209 = scmp.eq.s32.totalorder %s48, 0
      %p210 = por %p208, %p209
      %p211 = scmp.ne.s32.totalorder %s200, %s203
      %p212 = scmp.eq.s32.totalorder %s53, 3
      %p213 = por %p211, %p212
      %p214 = scmp.ne.s32.totalorder %s203, %s204
      %p215 = scmp.eq.s32.totalorder %s53, 0
      %p216 = por %p214, %p215
      %p217 = scmp.ne.s32.totalorder %s203, %s204
      %p218 = scmp.eq.s32.totalorder %s54, 3
      %p219 = por %p217, %p218
      %p221 = scmp.ne.s32.totalorder %s204, %s220
      %p222 = scmp.eq.s32.totalorder %s54, 0
      %p223 = por %p221, %p222
      %s224 = ssub.s32 %s56, %s63
      %p225 = scmp.eq.s32.totalorder %s224, 0
      %s227 = sadd.s32 %s226, 1
      %s228 = scalar_select %p225, %s226, %s227
      %p231 = pneg %p225
      %p232 = scmp.eq.s32.totalorder %s48, 3
      %p233 = por %p231, %p232
      %p234 = scmp.ne.s32.totalorder %s226, %s229
      %p235 = scmp.eq.s32.totalorder %s48, 0
      %p236 = por %p234, %p235
      %p237 = scmp.ne.s32.totalorder %s226, %s229
      %p238 = scmp.eq.s32.totalorder %s53, 3
      %p239 = por %p237, %p238
      %p240 = scmp.ne.s32.totalorder %s229, %s230
      %p241 = scmp.eq.s32.totalorder %s53, 0
      %p242 = por %p240, %p241
      %p243 = scmp.ne.s32.totalorder %s229, %s230
      %p244 = scmp.eq.s32.totalorder %s54, 3
      %p245 = por %p243, %p244
      %p247 = scmp.ne.s32.totalorder %s230, %s246
      %p248 = scmp.eq.s32.totalorder %s54, 0
      %p249 = por %p247, %p248
      %s250 = ssub.s32 %s56, %s63
      %p251 = scmp.eq.s32.totalorder %s250, 0
      %s253 = sadd.s32 %s252, 1
      %s254 = scalar_select %p251, %s252, %s253
      %p257 = pneg %p251
      %p258 = scmp.eq.s32.totalorder %s48, 3
      %p259 = por %p257, %p258
      %p260 = scmp.ne.s32.totalorder %s252, %s255
      %p261 = scmp.eq.s32.totalorder %s48, 0
      %p262 = por %p260, %p261
      %p263 = scmp.ne.s32.totalorder %s252, %s255
      %p264 = scmp.eq.s32.totalorder %s53, 3
      %p265 = por %p263, %p264
      %p266 = scmp.ne.s32.totalorder %s255, %s256
      %p267 = scmp.eq.s32.totalorder %s53, 0
      %p268 = por %p266, %p267
      %p269 = scmp.ne.s32.totalorder %s255, %s256
      %p270 = scmp.eq.s32.totalorder %s54, 3
      %p271 = por %p269, %p270
      %p273 = scmp.ne.s32.totalorder %s256, %s272
      %p274 = scmp.eq.s32.totalorder %s54, 0
      %p275 = por %p273, %p274
      %s276 = ssub.s32 %s56, %s63
      %p277 = scmp.eq.s32.totalorder %s276, 0
      %s279 = sadd.s32 %s278, 1
      %s280 = scalar_select %p277, %s278, %s279
      %p283 = pneg %p277
      %p284 = scmp.eq.s32.totalorder %s48, 3
      %p285 = por %p283, %p284
      %p286 = scmp.ne.s32.totalorder %s278, %s281
      %p287 = scmp.eq.s32.totalorder %s48, 0
      %p288 = por %p286, %p287
      %p289 = scmp.ne.s32.totalorder %s278, %s281
      %p290 = scmp.eq.s32.totalorder %s53, 3
      %p291 = por %p289, %p290
      %p292 = scmp.ne.s32.totalorder %s281, %s282
      %p293 = scmp.eq.s32.totalorder %s53, 0
      %p294 = por %p292, %p293
      %p295 = scmp.ne.s32.totalorder %s281, %s282
      %p296 = scmp.eq.s32.totalorder %s54, 3
      %p297 = por %p295, %p296
      %p299 = scmp.ne.s32.totalorder %s282, %s298
      %p300 = scmp.eq.s32.totalorder %s54, 0
      %p301 = por %p299, %p300
      %s302 = ssub.s32 %s56, %s63
      %p303 = scmp.eq.s32.totalorder %s302, 0
      %s305 = sadd.s32 %s304, 1
      %s306 = scalar_select %p303, %s304, %s305
      %p309 = pneg %p303
      %p310 = scmp.eq.s32.totalorder %s48, 3
      %p311 = por %p309, %p310
      %p312 = scmp.ne.s32.totalorder %s304, %s307
      %p313 = scmp.eq.s32.totalorder %s48, 0
      %p314 = por %p312, %p313
      %p315 = scmp.ne.s32.totalorder %s304, %s307
      %p316 = scmp.eq.s32.totalorder %s53, 3
      %p317 = por %p315, %p316
      %p318 = scmp.ne.s32.totalorder %s307, %s308
      %p319 = scmp.eq.s32.totalorder %s53, 0
      %p320 = por %p318, %p319
      %p321 = scmp.ne.s32.totalorder %s307, %s308
      %p322 = scmp.eq.s32.totalorder %s54, 3
      %p323 = por %p321, %p322
      %p325 = scmp.ne.s32.totalorder %s308, %s324
      %p326 = scmp.eq.s32.totalorder %s54, 0
      %p327 = por %p325, %p326
      %s328 = ssub.s32 %s56, %s63
      %p329 = scmp.eq.s32.totalorder %s328, 0
      %s331 = sadd.s32 %s330, 1
      %s332 = scalar_select %p329, %s330, %s331
      %p335 = pneg %p329
      %p336 = scmp.eq.s32.totalorder %s48, 3
      %p337 = por %p335, %p336
      %p338 = scmp.ne.s32.totalorder %s330, %s333
      %p339 = scmp.eq.s32.totalorder %s48, 0
      %p340 = por %p338, %p339
      %p341 = scmp.ne.s32.totalorder %s330, %s333
      %p342 = scmp.eq.s32.totalorder %s53, 3
      %p343 = por %p341, %p342
      %p344 = scmp.ne.s32.totalorder %s333, %s334
      %p345 = scmp.eq.s32.totalorder %s53, 0
      %p346 = por %p344, %p345
      %p347 = scmp.ne.s32.totalorder %s333, %s334
      %p348 = scmp.eq.s32.totalorder %s54, 3
      %p349 = por %p347, %p348
      %p351 = scmp.ne.s32.totalorder %s334, %s350
      %p352 = scmp.eq.s32.totalorder %s54, 0
      %p353 = por %p351, %p352
      %s354 = ssub.s32 %s56, %s63
      %p355 = scmp.eq.s32.totalorder %s354, 0
      %s357 = sadd.s32 %s356, 1
      %s358 = scalar_select %p355, %s356, %s357
      %p361 = pneg %p355
      %p362 = scmp.eq.s32.totalorder %s48, 3
      %p363 = por %p361, %p362
      %p364 = scmp.ne.s32.totalorder %s356, %s359
      %p365 = scmp.eq.s32.totalorder %s48, 0
      %p366 = por %p364, %p365
      %p367 = scmp.ne.s32.totalorder %s356, %s359
      %p368 = scmp.eq.s32.totalorder %s53, 3
      %p369 = por %p367, %p368
      %p370 = scmp.ne.s32.totalorder %s359, %s360
      %p371 = scmp.eq.s32.totalorder %s53, 0
      %p372 = por %p370, %p371
      %p373 = scmp.ne.s32.totalorder %s359, %s360
      %p374 = scmp.eq.s32.totalorder %s54, 3
      %p375 = por %p373, %p374
      %p377 = scmp.ne.s32.totalorder %s360, %s376
      %p378 = scmp.eq.s32.totalorder %s54, 0
      %p379 = por %p377, %p378
      %s380 = ssub.s32 %s56, %s63
      %p381 = scmp.eq.s32.totalorder %s380, 0
      %s383 = sadd.s32 %s382, 1
      %s384 = scalar_select %p381, %s382, %s383
      %p387 = pneg %p381
      %p388 = scmp.eq.s32.totalorder %s48, 3
      %p389 = por %p387, %p388
      %p390 = scmp.ne.s32.totalorder %s382, %s385
      %p391 = scmp.eq.s32.totalorder %s48, 0
      %p392 = por %p390, %p391
      %p393 = scmp.ne.s32.totalorder %s382, %s385
      %p394 = scmp.eq.s32.totalorder %s53, 3
      %p395 = por %p393, %p394
      %p396 = scmp.ne.s32.totalorder %s385, %s386
      %p397 = scmp.eq.s32.totalorder %s53, 0
      %p398 = por %p396, %p397
      %p399 = scmp.ne.s32.totalorder %s385, %s386
      %p400 = scmp.eq.s32.totalorder %s54, 3
      %p401 = por %p399, %p400
      %p403 = scmp.ne.s32.totalorder %s386, %s402
      %p404 = scmp.eq.s32.totalorder %s54, 0
      %p405 = por %p403, %p404
      %s406 = ssub.s32 %s56, %s63
      %p407 = scmp.eq.s32.totalorder %s406, 0
      %s409 = sadd.s32 %s408, 1
      %s410 = scalar_select %p407, %s408, %s409
      %p413 = pneg %p407
      %p414 = scmp.eq.s32.totalorder %s48, 3
      %p415 = por %p413, %p414
      %p416 = scmp.ne.s32.totalorder %s408, %s411
      %p417 = scmp.eq.s32.totalorder %s48, 0
      %p418 = por %p416, %p417
      %p419 = scmp.ne.s32.totalorder %s408, %s411
      %p420 = scmp.eq.s32.totalorder %s53, 3
      %p421 = por %p419, %p420
      %p422 = scmp.ne.s32.totalorder %s411, %s412
      %p423 = scmp.eq.s32.totalorder %s53, 0
      %p424 = por %p422, %p423
      %p425 = scmp.ne.s32.totalorder %s411, %s412
      %p426 = scmp.eq.s32.totalorder %s54, 3
      %p427 = por %p425, %p426
      %p429 = scmp.ne.s32.totalorder %s412, %s428
      %p430 = scmp.eq.s32.totalorder %s54, 0
      %p431 = por %p429, %p430
      %s432 = ssub.s32 %s56, %s63
      %p433 = scmp.eq.s32.totalorder %s432, 0
      %s435 = sadd.s32 %s434, 1
      %s436 = scalar_select %p433, %s434, %s435
      %p439 = pneg %p433
      %p440 = scmp.eq.s32.totalorder %s48, 3
      %p441 = por %p439, %p440
      %p442 = scmp.ne.s32.totalorder %s434, %s437
      %p443 = scmp.eq.s32.totalorder %s48, 0
      %p444 = por %p442, %p443
      %p445 = scmp.ne.s32.totalorder %s434, %s437
      %p446 = scmp.eq.s32.totalorder %s53, 3
      %p447 = por %p445, %p446
      %p448 = scmp.ne.s32.totalorder %s437, %s438
      %p449 = scmp.eq.s32.totalorder %s53, 0
      %p450 = por %p448, %p449
      %p451 = scmp.ne.s32.totalorder %s437, %s438
      %p452 = scmp.eq.s32.totalorder %s54, 3
      %p453 = por %p451, %p452
      %p455 = scmp.ne.s32.totalorder %s438, %s454
      %p456 = scmp.eq.s32.totalorder %s54, 0
      %p457 = por %p455, %p456
      %s458 = ssub.s32 %s55, %s67
      %p459 = scmp.eq.s32.totalorder %s458, 0
      %s461 = sadd.s32 %s460, 1
      %s462 = scalar_select %p459, %s460, %s461
      %p465 = pneg %p459
      %p466 = scmp.eq.s32.totalorder %s48, 3
      %p467 = por %p465, %p466
      %p468 = scmp.ne.s32.totalorder %s460, %s463
      %p469 = scmp.eq.s32.totalorder %s48, 0
      %p470 = por %p468, %p469
      %p471 = scmp.ne.s32.totalorder %s460, %s463
      %p472 = scmp.eq.s32.totalorder %s53, 3
      %p473 = por %p471, %p472
      %p474 = scmp.ne.s32.totalorder %s463, %s464
      %p475 = scmp.eq.s32.totalorder %s53, 0
      %p476 = por %p474, %p475
      %p477 = scmp.ne.s32.totalorder %s463, %s464
      %p478 = scmp.eq.s32.totalorder %s54, 3
      %p479 = por %p477, %p478
      %p481 = scmp.ne.s32.totalorder %s464, %s480
      %p482 = scmp.eq.s32.totalorder %s54, 0
      %p483 = por %p481, %p482
      %p484 = scmp.le.s32.totalorder 1, %s48
      %p485 = scmp.lt.s32.totalorder %s48, 5
      %p486 = pnand %p484, %p485
      %p487 = pneg %p486
      // Predicated region
      $region9: #{tpu_custom_call.1} parent=5 // pred_check
        _
      $region10: #{tpu_custom_call.1} parent=5 // pred_check_branch
        %489 = sbr.rel (%p486) target = $region12
      $region11: #{tpu_custom_call.1} parent=5 // pred_region
        %s490 = ssub.s32 %s48, 1
      $region12: #{tpu_custom_call.1} parent=5 // pred_fallthru
        _
      %p491 = scmp.lt.s32.totalorder %s48, 4
      // Predicated region
      $region13: #{tpu_custom_call.1} parent=5 // pred_check
        %p492 = pneg %p491
      $region14: #{tpu_custom_call.1} parent=5 // pred_check_branch
        %494 = sbr.rel (%p492) target = $region16
      $region15: #{tpu_custom_call.1} parent=5 // pred_region
        // Predicated region
        $region17: #{tpu_custom_call.1} parent=15 // pred_check
          %p495 = pneg %p80
        $region18: #{tpu_custom_call.1} parent=15 // pred_check_branch
          %497 = sbr.rel (%p495) target = $region20
        $region19: #{tpu_custom_call.1} parent=15 // pred_region
          %s498 = sand.u32 %s70, 1
          %s499 = scalar_lea.sflag [#allocation5], %s498
          %s500 = sand.u32 %s70, 1
          %s501 = smul.addr %s500, 8
          %s502 = scalar_lea.vmem [#allocation4], %s501
          %s504 = ssub.s32 128, 128
          %505 = vsyncadd %s499, %s504
          %s506 = smul.addr %s55, 128
          %s507 = scalar_lea.hbm %s0, %s506
          %s509 = sshll.u32 %s502, 4
          %s510 = int_to_ptr.vmem [resolvable:$true] %s509
          %512 = dma.hbm_to_vmem [thread:$0]  %s507, 128, %s510, %s499
        $region20: #{tpu_custom_call.1} parent=15 // pred_fallthru
          _
        // Predicated region
        $region21: #{tpu_custom_call.1} parent=15 // pred_check
          %p513 = pneg %p106
        $region22: #{tpu_custom_call.1} parent=15 // pred_check_branch
          %515 = sbr.rel (%p513) target = $region24
        $region23: #{tpu_custom_call.1} parent=15 // pred_region
          %s516 = sand.u32 %s48, 1
          %s517 = scalar_lea.sflag [#allocation8], %s516
          %s518 = sand.u32 %s96, 1
          %s519 = smul.addr %s518, 16
          %s520 = scalar_lea.vmem [#allocation7], %s519
          %s522 = ssub.s32 256, 256
          %523 = vsyncadd %s517, %s522
          %s524 = smul.addr %s55, 2
          %s525 = smul.addr %s524, 128
          %s526 = scalar_lea.hbm %s1, %s525
          %s527 = sshll.u32 %s520, 4
          %s528 = int_to_ptr.vmem [resolvable:$true] %s527
          %533 = dma.hbm_to_vmem [thread:$0]  %s526, 256, %s528, %s517, 128, 128, 8
        $region24: #{tpu_custom_call.1} parent=15 // pred_fallthru
          _
        // Predicated region
        $region25: #{tpu_custom_call.1} parent=15 // pred_check
          %p534 = pneg %p132
        $region26: #{tpu_custom_call.1} parent=15 // pred_check_branch
          %536 = sbr.rel (%p534) target = $region28
        $region27: #{tpu_custom_call.1} parent=15 // pred_region
          %s537 = sand.u32 %s48, 1
          %s538 = scalar_lea.sflag [#allocation8], %s537
          %s539 = sand.u32 %s122, 1
          %s540 = scalar_lea.vmem [#allocation9], %s539
          %s542 = ssub.s32 16, 16
          %543 = vsyncadd %s538, %s542
          %s544 = smul.addr %s55, 16
          %s545 = scalar_lea.hbm %s2, %s544
          %s547 = sshll.u32 %s540, 4
          %s548 = int_to_ptr.vmem [resolvable:$true] %s547
          %550 = dma.hbm_to_vmem [thread:$0]  %s545, 16, %s548, %s538
        $region28: #{tpu_custom_call.1} parent=15 // pred_fallthru
          _
        // Predicated region
        $region29: #{tpu_custom_call.1} parent=15 // pred_check
          %p551 = pneg %p158
        $region30: #{tpu_custom_call.1} parent=15 // pred_check_branch
          %553 = sbr.rel (%p551) target = $region32
        $region31: #{tpu_custom_call.1} parent=15 // pred_region
          %s554 = sand.u32 %s48, 1
          %s555 = scalar_lea.sflag [#allocation11], %s554
          %s556 = sand.u32 %s148, 1
          %s557 = smul.addr %s556, 16
          %s558 = scalar_lea.vmem [#allocation10], %s557
          %s560 = ssub.s32 256, 256
          %561 = vsyncadd %s555, %s560
          %s562 = smul.addr %s56, 4
          %s563 = smul.addr %s562, 64
          %s564 = scalar_lea.hbm %s3, %s563
          %s565 = sshll.u32 %s558, 4
          %s566 = int_to_ptr.vmem [resolvable:$true] %s565
          %571 = dma.hbm_to_vmem [thread:$0]  %s564, 256, %s566, %s555, 64, 64, 4
        $region32: #{tpu_custom_call.1} parent=15 // pred_fallthru
          _
        // Predicated region
        $region33: #{tpu_custom_call.1} parent=15 // pred_check
          %p572 = pneg %p184
        $region34: #{tpu_custom_call.1} parent=15 // pred_check_branch
          %574 = sbr.rel (%p572) target = $region36
        $region35: #{tpu_custom_call.1} parent=15 // pred_region
          %s575 = sand.u32 %s48, 1
          %s576 = scalar_lea.sflag [#allocation11], %s575
          %s577 = sand.u32 %s174, 1
          %s578 = scalar_lea.vmem [#allocation12], %s577
          %s580 = ssub.s32 16, 16
          %581 = vsyncadd %s576, %s580
          %s582 = smul.addr %s56, 16
          %s583 = scalar_lea.hbm %s4, %s582
          %s585 = sshll.u32 %s578, 4
          %s586 = int_to_ptr.vmem [resolvable:$true] %s585
          %588 = dma.hbm_to_vmem [thread:$0]  %s583, 16, %s586, %s576
        $region36: #{tpu_custom_call.1} parent=15 // pred_fallthru
          _
        // Predicated region
        $region37: #{tpu_custom_call.1} parent=15 // pred_check
          %p589 = pneg %p210
        $region38: #{tpu_custom_call.1} parent=15 // pred_check_branch
          %591 = sbr.rel (%p589) target = $region40
        $region39: #{tpu_custom_call.1} parent=15 // pred_region
          %s592 = sand.u32 %s48, 1
          %s593 = scalar_lea.sflag [#allocation14], %s592
          %s594 = sand.u32 %s200, 1
          %s595 = smul.addr %s594, 16
          %s596 = scalar_lea.vmem [#allocation13], %s595
          %s598 = ssub.s32 256, 256
          %599 = vsyncadd %s593, %s598
          %s600 = smul.addr %s56, 4
          %s601 = smul.addr %s600, 64
          %s602 = scalar_lea.hbm %s5, %s601
          %s603 = sshll.u32 %s596, 4
          %s604 = int_to_ptr.vmem [resolvable:$true] %s603
          %609 = dma.hbm_to_vmem [thread:$0]  %s602, 256, %s604, %s593, 64, 64, 4
        $region40: #{tpu_custom_call.1} parent=15 // pred_fallthru
          _
        // Predicated region
        $region41: #{tpu_custom_call.1} parent=15 // pred_check
          %p610 = pneg %p236
        $region42: #{tpu_custom_call.1} parent=15 // pred_check_branch
          %612 = sbr.rel (%p610) target = $region44
        $region43: #{tpu_custom_call.1} parent=15 // pred_region
          %s613 = sand.u32 %s48, 1
          %s614 = scalar_lea.sflag [#allocation14], %s613
          %s615 = sand.u32 %s226, 1
          %s616 = scalar_lea.vmem [#allocation15], %s615
          %s618 = ssub.s32 16, 16
          %619 = vsyncadd %s614, %s618
          %s620 = smul.addr %s56, 16
          %s621 = scalar_lea.hbm %s6, %s620
          %s623 = sshll.u32 %s616, 4
          %s624 = int_to_ptr.vmem [resolvable:$true] %s623
          %626 = dma.hbm_to_vmem [thread:$0]  %s621, 16, %s624, %s614
        $region44: #{tpu_custom_call.1} parent=15 // pred_fallthru
          _
        // Predicated region
        $region45: #{tpu_custom_call.1} parent=15 // pred_check
          %p627 = pneg %p262
        $region46: #{tpu_custom_call.1} parent=15 // pred_check_branch
          %629 = sbr.rel (%p627) target = $region48
        $region47: #{tpu_custom_call.1} parent=15 // pred_region
          %s630 = sand.u32 %s48, 1
          %s631 = scalar_lea.sflag [#allocation17], %s630
          %s632 = sand.u32 %s252, 1
          %s633 = smul.addr %s632, 16
          %s634 = scalar_lea.vmem [#allocation16], %s633
          %s636 = ssub.s32 256, 256
          %637 = vsyncadd %s631, %s636
          %s638 = smul.addr %s56, 4
          %s639 = smul.addr %s638, 64
          %s640 = scalar_lea.hbm %s7, %s639
          %s641 = sshll.u32 %s634, 4
          %s642 = int_to_ptr.vmem [resolvable:$true] %s641
          %647 = dma.hbm_to_vmem [thread:$0]  %s640, 256, %s642, %s631, 64, 64, 4
        $region48: #{tpu_custom_call.1} parent=15 // pred_fallthru
          _
        // Predicated region
        $region49: #{tpu_custom_call.1} parent=15 // pred_check
          %p648 = pneg %p288
        $region50: #{tpu_custom_call.1} parent=15 // pred_check_branch
          %650 = sbr.rel (%p648) target = $region52
        $region51: #{tpu_custom_call.1} parent=15 // pred_region
          %s651 = sand.u32 %s48, 1
          %s652 = scalar_lea.sflag [#allocation17], %s651
          %s653 = sand.u32 %s278, 1
          %s654 = scalar_lea.vmem [#allocation18], %s653
          %s656 = ssub.s32 16, 16
          %657 = vsyncadd %s652, %s656
          %s658 = smul.addr %s56, 16
          %s659 = scalar_lea.hbm %s8, %s658
          %s661 = sshll.u32 %s654, 4
          %s662 = int_to_ptr.vmem [resolvable:$true] %s661
          %664 = dma.hbm_to_vmem [thread:$0]  %s659, 16, %s662, %s652
        $region52: #{tpu_custom_call.1} parent=15 // pred_fallthru
          _
        // Predicated region
        $region53: #{tpu_custom_call.1} parent=15 // pred_check
          %p665 = pneg %p314
        $region54: #{tpu_custom_call.1} parent=15 // pred_check_branch
          %667 = sbr.rel (%p665) target = $region56
        $region55: #{tpu_custom_call.1} parent=15 // pred_region
          %s668 = sand.u32 %s48, 1
          %s669 = scalar_lea.sflag [#allocation20], %s668
          %s670 = sand.u32 %s304, 1
          %s671 = scalar_lea.vmem [#allocation19], %s670
          %s673 = ssub.s32 16, 16
          %674 = vsyncadd %s669, %s673
          %s675 = smul.addr %s56, 16
          %s676 = scalar_lea.hbm %s9, %s675
          %s678 = sshll.u32 %s671, 4
          %s679 = int_to_ptr.vmem [resolvable:$true] %s678
          %681 = dma.hbm_to_vmem [thread:$0]  %s676, 16, %s679, %s669
        $region56: #{tpu_custom_call.1} parent=15 // pred_fallthru
          _
        // Predicated region
        $region57: #{tpu_custom_call.1} parent=15 // pred_check
          %p682 = pneg %p340
        $region58: #{tpu_custom_call.1} parent=15 // pred_check_branch
          %684 = sbr.rel (%p682) target = $region60
        $region59: #{tpu_custom_call.1} parent=15 // pred_region
          %s685 = sand.u32 %s48, 1
          %s686 = scalar_lea.sflag [#allocation20], %s685
          %s687 = sand.u32 %s330, 1
          %s688 = scalar_lea.vmem [#allocation21], %s687
          %s690 = ssub.s32 16, 16
          %691 = vsyncadd %s686, %s690
          %s692 = smul.addr %s56, 16
          %s693 = scalar_lea.hbm %s10, %s692
          %s695 = sshll.u32 %s688, 4
          %s696 = int_to_ptr.vmem [resolvable:$true] %s695
          %698 = dma.hbm_to_vmem [thread:$0]  %s693, 16, %s696, %s686
        $region60: #{tpu_custom_call.1} parent=15 // pred_fallthru
          _
        // Predicated region
        $region61: #{tpu_custom_call.1} parent=15 // pred_check
          %p699 = pneg %p366
        $region62: #{tpu_custom_call.1} parent=15 // pred_check_branch
          %701 = sbr.rel (%p699) target = $region64
        $region63: #{tpu_custom_call.1} parent=15 // pred_region
          %s702 = sand.u32 %s48, 1
          %s703 = scalar_lea.sflag [#allocation23], %s702
          %s704 = sand.u32 %s356, 1
          %s705 = smul.addr %s704, 16
          %s706 = scalar_lea.vmem [#allocation22], %s705
          %s708 = ssub.s32 256, 256
          %709 = vsyncadd %s703, %s708
          %s710 = smul.addr %s56, 4
          %s711 = smul.addr %s710, 64
          %s712 = scalar_lea.hbm %s11, %s711
          %s713 = sshll.u32 %s706, 4
          %s714 = int_to_ptr.vmem [resolvable:$true] %s713
          %719 = dma.hbm_to_vmem [thread:$0]  %s712, 256, %s714, %s703, 64, 64, 4
        $region64: #{tpu_custom_call.1} parent=15 // pred_fallthru
          _
        // Predicated region
        $region65: #{tpu_custom_call.1} parent=15 // pred_check
          %p720 = pneg %p392
        $region66: #{tpu_custom_call.1} parent=15 // pred_check_branch
          %722 = sbr.rel (%p720) target = $region68
        $region67: #{tpu_custom_call.1} parent=15 // pred_region
          %s723 = sand.u32 %s48, 1
          %s724 = scalar_lea.sflag [#allocation23], %s723
          %s725 = sand.u32 %s382, 1
          %s726 = scalar_lea.vmem [#allocation24], %s725
          %s728 = ssub.s32 16, 16
          %729 = vsyncadd %s724, %s728
          %s730 = smul.addr %s56, 16
          %s731 = scalar_lea.hbm %s12, %s730
          %s733 = sshll.u32 %s726, 4
          %s734 = int_to_ptr.vmem [resolvable:$true] %s733
          %736 = dma.hbm_to_vmem [thread:$0]  %s731, 16, %s734, %s724
        $region68: #{tpu_custom_call.1} parent=15 // pred_fallthru
          _
        // Predicated region
        $region69: #{tpu_custom_call.1} parent=15 // pred_check
          %p737 = pneg %p418
        $region70: #{tpu_custom_call.1} parent=15 // pred_check_branch
          %739 = sbr.rel (%p737) target = $region72
        $region71: #{tpu_custom_call.1} parent=15 // pred_region
          %s740 = sand.u32 %s48, 1
          %s741 = scalar_lea.sflag [#allocation26], %s740
          %s742 = sand.u32 %s408, 1
          %s743 = smul.addr %s742, 32
          %s744 = scalar_lea.vmem [#allocation25], %s743
          %s746 = ssub.s32 512, 512
          %747 = vsyncadd %s741, %s746
          %s748 = smul.addr %s56, 8
          %s749 = smul.addr %s748, 64
          %s750 = scalar_lea.hbm %s13, %s749
          %s751 = sshll.u32 %s744, 4
          %s752 = int_to_ptr.vmem [resolvable:$true] %s751
          %757 = dma.hbm_to_vmem [thread:$0]  %s750, 512, %s752, %s741, 64, 64, 4
        $region72: #{tpu_custom_call.1} parent=15 // pred_fallthru
          _
        // Predicated region
        $region73: #{tpu_custom_call.1} parent=15 // pred_check
          %p758 = pneg %p444
        $region74: #{tpu_custom_call.1} parent=15 // pred_check_branch
          %760 = sbr.rel (%p758) target = $region76
        $region75: #{tpu_custom_call.1} parent=15 // pred_region
          %s761 = sand.u32 %s48, 1
          %s762 = scalar_lea.sflag [#allocation26], %s761
          %s763 = sand.u32 %s434, 1
          %s764 = scalar_lea.vmem [#allocation27], %s763
          %s766 = ssub.s32 16, 16
          %767 = vsyncadd %s762, %s766
          %s768 = smul.addr %s56, 16
          %s769 = scalar_lea.hbm %s14, %s768
          %s771 = sshll.u32 %s764, 4
          %s772 = int_to_ptr.vmem [resolvable:$true] %s771
          %774 = dma.hbm_to_vmem [thread:$0]  %s769, 16, %s772, %s762
        $region76: #{tpu_custom_call.1} parent=15 // pred_fallthru
          _
      $region16: #{tpu_custom_call.1} parent=5 // pred_fallthru
        _
      %p775 = scmp.le.s32.totalorder 1, %s48
      %p776 = scmp.lt.s32.totalorder %s48, 5
      %p777 = pnand %p775, %p776
      %p778 = pneg %p777
      // Predicated region
      $region77: #{tpu_custom_call.1} parent=5 // pred_check
        _
      $region78: #{tpu_custom_call.1} parent=5 // pred_check_branch
        %780 = sbr.rel (%p777) target = $region80
      $region79: #{tpu_custom_call.1} parent=5 // pred_region
        %s781 = ssub.s32 %s48, 1
        %s782 = sand.u32 %s73, 1
        %s783 = scalar_lea.sflag [#allocation5], %s782
        %s784 = sand.u32 %s73, 1
        %s785 = smul.addr %s784, 8
        %s786 = scalar_lea.vmem [#allocation4], %s785
        // Predicated region
        $region81: #{tpu_custom_call.1} parent=79 // pred_check
          %p787 = pneg %p86
        $region82: #{tpu_custom_call.1} parent=79 // pred_check_branch
          %789 = sbr.rel (%p787) target = $region84
        $region83: #{tpu_custom_call.1} parent=79 // pred_region
          %790 = dma.done %s783, 128
        $region84: #{tpu_custom_call.1} parent=79 // pred_fallthru
          _
        %s791 = sand.u32 %s53, 1
        %s792 = scalar_lea.sflag [#allocation8], %s791
        %s793 = sand.u32 %s99, 1
        %s794 = smul.addr %s793, 16
        %s795 = scalar_lea.vmem [#allocation7], %s794
        // Predicated region
        $region85: #{tpu_custom_call.1} parent=79 // pred_check
          %p796 = pneg %p112
        $region86: #{tpu_custom_call.1} parent=79 // pred_check_branch
          %798 = sbr.rel (%p796) target = $region88
        $region87: #{tpu_custom_call.1} parent=79 // pred_region
          %799 = dma.done %s792, 256
        $region88: #{tpu_custom_call.1} parent=79 // pred_fallthru
          _
        %s800 = sand.u32 %s53, 1
        %s801 = scalar_lea.sflag [#allocation8], %s800
        %s802 = sand.u32 %s125, 1
        %s803 = scalar_lea.vmem [#allocation9], %s802
        // Predicated region
        $region89: #{tpu_custom_call.1} parent=79 // pred_check
          %p804 = pneg %p138
        $region90: #{tpu_custom_call.1} parent=79 // pred_check_branch
          %806 = sbr.rel (%p804) target = $region92
        $region91: #{tpu_custom_call.1} parent=79 // pred_region
          %807 = dma.done %s801, 16
        $region92: #{tpu_custom_call.1} parent=79 // pred_fallthru
          _
        %s808 = sand.u32 %s53, 1
        %s809 = scalar_lea.sflag [#allocation11], %s808
        %s810 = sand.u32 %s151, 1
        %s811 = smul.addr %s810, 16
        %s812 = scalar_lea.vmem [#allocation10], %s811
        // Predicated region
        $region93: #{tpu_custom_call.1} parent=79 // pred_check
          %p813 = pneg %p164
        $region94: #{tpu_custom_call.1} parent=79 // pred_check_branch
          %815 = sbr.rel (%p813) target = $region96
        $region95: #{tpu_custom_call.1} parent=79 // pred_region
          %816 = dma.done %s809, 256
        $region96: #{tpu_custom_call.1} parent=79 // pred_fallthru
          _
        %s817 = sand.u32 %s53, 1
        %s818 = scalar_lea.sflag [#allocation11], %s817
        %s819 = sand.u32 %s177, 1
        %s820 = scalar_lea.vmem [#allocation12], %s819
        // Predicated region
        $region97: #{tpu_custom_call.1} parent=79 // pred_check
          %p821 = pneg %p190
        $region98: #{tpu_custom_call.1} parent=79 // pred_check_branch
          %823 = sbr.rel (%p821) target = $region100
        $region99: #{tpu_custom_call.1} parent=79 // pred_region
          %824 = dma.done %s818, 16
        $region100: #{tpu_custom_call.1} parent=79 // pred_fallthru
          _
        %s825 = sand.u32 %s53, 1
        %s826 = scalar_lea.sflag [#allocation14], %s825
        %s827 = sand.u32 %s203, 1
        %s828 = smul.addr %s827, 16
        %s829 = scalar_lea.vmem [#allocation13], %s828
        // Predicated region
        $region101: #{tpu_custom_call.1} parent=79 // pred_check
          %p830 = pneg %p216
        $region102: #{tpu_custom_call.1} parent=79 // pred_check_branch
          %832 = sbr.rel (%p830) target = $region104
        $region103: #{tpu_custom_call.1} parent=79 // pred_region
          %833 = dma.done %s826, 256
        $region104: #{tpu_custom_call.1} parent=79 // pred_fallthru
          _
        %s834 = sand.u32 %s53, 1
        %s835 = scalar_lea.sflag [#allocation14], %s834
        %s836 = sand.u32 %s229, 1
        %s837 = scalar_lea.vmem [#allocation15], %s836
        // Predicated region
        $region105: #{tpu_custom_call.1} parent=79 // pred_check
          %p838 = pneg %p242
        $region106: #{tpu_custom_call.1} parent=79 // pred_check_branch
          %840 = sbr.rel (%p838) target = $region108
        $region107: #{tpu_custom_call.1} parent=79 // pred_region
          %841 = dma.done %s835, 16
        $region108: #{tpu_custom_call.1} parent=79 // pred_fallthru
          _
        %s842 = sand.u32 %s53, 1
        %s843 = scalar_lea.sflag [#allocation17], %s842
        %s844 = sand.u32 %s255, 1
        %s845 = smul.addr %s844, 16
        %s846 = scalar_lea.vmem [#allocation16], %s845
        // Predicated region
        $region109: #{tpu_custom_call.1} parent=79 // pred_check
          %p847 = pneg %p268
        $region110: #{tpu_custom_call.1} parent=79 // pred_check_branch
          %849 = sbr.rel (%p847) target = $region112
        $region111: #{tpu_custom_call.1} parent=79 // pred_region
          %850 = dma.done %s843, 256
        $region112: #{tpu_custom_call.1} parent=79 // pred_fallthru
          _
        %s851 = sand.u32 %s53, 1
        %s852 = scalar_lea.sflag [#allocation17], %s851
        %s853 = sand.u32 %s281, 1
        %s854 = scalar_lea.vmem [#allocation18], %s853
        // Predicated region
        $region113: #{tpu_custom_call.1} parent=79 // pred_check
          %p855 = pneg %p294
        $region114: #{tpu_custom_call.1} parent=79 // pred_check_branch
          %857 = sbr.rel (%p855) target = $region116
        $region115: #{tpu_custom_call.1} parent=79 // pred_region
          %858 = dma.done %s852, 16
        $region116: #{tpu_custom_call.1} parent=79 // pred_fallthru
          _
        %s859 = sand.u32 %s53, 1
        %s860 = scalar_lea.sflag [#allocation20], %s859
        %s861 = sand.u32 %s307, 1
        %s862 = scalar_lea.vmem [#allocation19], %s861
        // Predicated region
        $region117: #{tpu_custom_call.1} parent=79 // pred_check
          %p863 = pneg %p320
        $region118: #{tpu_custom_call.1} parent=79 // pred_check_branch
          %865 = sbr.rel (%p863) target = $region120
        $region119: #{tpu_custom_call.1} parent=79 // pred_region
          %866 = dma.done %s860, 16
        $region120: #{tpu_custom_call.1} parent=79 // pred_fallthru
          _
        %s867 = sand.u32 %s53, 1
        %s868 = scalar_lea.sflag [#allocation20], %s867
        %s869 = sand.u32 %s333, 1
        %s870 = scalar_lea.vmem [#allocation21], %s869
        // Predicated region
        $region121: #{tpu_custom_call.1} parent=79 // pred_check
          %p871 = pneg %p346
        $region122: #{tpu_custom_call.1} parent=79 // pred_check_branch
          %873 = sbr.rel (%p871) target = $region124
        $region123: #{tpu_custom_call.1} parent=79 // pred_region
          %874 = dma.done %s868, 16
        $region124: #{tpu_custom_call.1} parent=79 // pred_fallthru
          _
        %s875 = sand.u32 %s53, 1
        %s876 = scalar_lea.sflag [#allocation23], %s875
        %s877 = sand.u32 %s359, 1
        %s878 = smul.addr %s877, 16
        %s879 = scalar_lea.vmem [#allocation22], %s878
        // Predicated region
        $region125: #{tpu_custom_call.1} parent=79 // pred_check
          %p880 = pneg %p372
        $region126: #{tpu_custom_call.1} parent=79 // pred_check_branch
          %882 = sbr.rel (%p880) target = $region128
        $region127: #{tpu_custom_call.1} parent=79 // pred_region
          %883 = dma.done %s876, 256
        $region128: #{tpu_custom_call.1} parent=79 // pred_fallthru
          _
        %s884 = sand.u32 %s53, 1
        %s885 = scalar_lea.sflag [#allocation23], %s884
        %s886 = sand.u32 %s385, 1
        %s887 = scalar_lea.vmem [#allocation24], %s886
        // Predicated region
        $region129: #{tpu_custom_call.1} parent=79 // pred_check
          %p888 = pneg %p398
        $region130: #{tpu_custom_call.1} parent=79 // pred_check_branch
          %890 = sbr.rel (%p888) target = $region132
        $region131: #{tpu_custom_call.1} parent=79 // pred_region
          %891 = dma.done %s885, 16
        $region132: #{tpu_custom_call.1} parent=79 // pred_fallthru
          _
        %s892 = sand.u32 %s53, 1
        %s893 = scalar_lea.sflag [#allocation26], %s892
        %s894 = sand.u32 %s411, 1
        %s895 = smul.addr %s894, 32
        %s896 = scalar_lea.vmem [#allocation25], %s895
        // Predicated region
        $region133: #{tpu_custom_call.1} parent=79 // pred_check
          %p897 = pneg %p424
        $region134: #{tpu_custom_call.1} parent=79 // pred_check_branch
          %899 = sbr.rel (%p897) target = $region136
        $region135: #{tpu_custom_call.1} parent=79 // pred_region
          %900 = dma.done %s893, 512
        $region136: #{tpu_custom_call.1} parent=79 // pred_fallthru
          _
        %s901 = sand.u32 %s53, 1
        %s902 = scalar_lea.sflag [#allocation26], %s901
        %s903 = sand.u32 %s437, 1
        %s904 = scalar_lea.vmem [#allocation27], %s903
        // Predicated region
        $region137: #{tpu_custom_call.1} parent=79 // pred_check
          %p905 = pneg %p450
        $region138: #{tpu_custom_call.1} parent=79 // pred_check_branch
          %907 = sbr.rel (%p905) target = $region140
        $region139: #{tpu_custom_call.1} parent=79 // pred_region
          %908 = dma.done %s902, 16
        $region140: #{tpu_custom_call.1} parent=79 // pred_fallthru
          _
        %s909 = sand.u32 %s73, 1
        %s910 = scalar_lea.sflag [#allocation5], %s909
        %s911 = sand.u32 %s73, 1
        %s912 = smul.addr %s911, 8
        %s913 = scalar_lea.vmem [#allocation4], %s912
        %p914 = pneg %p86
        %p915 = pneg %p83
        %s916 = sand.u32 %s53, 1
        %s917 = scalar_lea.sflag [#allocation8], %s916
        %s918 = sand.u32 %s99, 1
        %s919 = smul.addr %s918, 16
        %s920 = scalar_lea.vmem [#allocation7], %s919
        %p921 = pneg %p112
        %p922 = pneg %p109
        %s923 = sand.u32 %s53, 1
        %s924 = scalar_lea.sflag [#allocation8], %s923
        %s925 = sand.u32 %s125, 1
        %s926 = scalar_lea.vmem [#allocation9], %s925
        %p927 = pneg %p138
        %p928 = pneg %p135
        %s929 = sand.u32 %s53, 1
        %s930 = scalar_lea.sflag [#allocation11], %s929
        %s931 = sand.u32 %s151, 1
        %s932 = smul.addr %s931, 16
        %s933 = scalar_lea.vmem [#allocation10], %s932
        %p934 = pneg %p164
        %p935 = pneg %p161
        %s936 = sand.u32 %s53, 1
        %s937 = scalar_lea.sflag [#allocation11], %s936
        %s938 = sand.u32 %s177, 1
        %s939 = scalar_lea.vmem [#allocation12], %s938
        %p940 = pneg %p190
        %p941 = pneg %p187
        %s942 = sand.u32 %s53, 1
        %s943 = scalar_lea.sflag [#allocation14], %s942
        %s944 = sand.u32 %s203, 1
        %s945 = smul.addr %s944, 16
        %s946 = scalar_lea.vmem [#allocation13], %s945
        %p947 = pneg %p216
        %p948 = pneg %p213
        %s949 = sand.u32 %s53, 1
        %s950 = scalar_lea.sflag [#allocation14], %s949
        %s951 = sand.u32 %s229, 1
        %s952 = scalar_lea.vmem [#allocation15], %s951
        %p953 = pneg %p242
        %p954 = pneg %p239
        %s955 = sand.u32 %s53, 1
        %s956 = scalar_lea.sflag [#allocation17], %s955
        %s957 = sand.u32 %s255, 1
        %s958 = smul.addr %s957, 16
        %s959 = scalar_lea.vmem [#allocation16], %s958
        %p960 = pneg %p268
        %p961 = pneg %p265
        %s962 = sand.u32 %s53, 1
        %s963 = scalar_lea.sflag [#allocation17], %s962
        %s964 = sand.u32 %s281, 1
        %s965 = scalar_lea.vmem [#allocation18], %s964
        %p966 = pneg %p294
        %p967 = pneg %p291
        %s968 = sand.u32 %s53, 1
        %s969 = scalar_lea.sflag [#allocation20], %s968
        %s970 = sand.u32 %s307, 1
        %s971 = scalar_lea.vmem [#allocation19], %s970
        %p972 = pneg %p320
        %p973 = pneg %p317
        %s974 = sand.u32 %s53, 1
        %s975 = scalar_lea.sflag [#allocation20], %s974
        %s976 = sand.u32 %s333, 1
        %s977 = scalar_lea.vmem [#allocation21], %s976
        %p978 = pneg %p346
        %p979 = pneg %p343
        %s980 = sand.u32 %s53, 1
        %s981 = scalar_lea.sflag [#allocation23], %s980
        %s982 = sand.u32 %s359, 1
        %s983 = smul.addr %s982, 16
        %s984 = scalar_lea.vmem [#allocation22], %s983
        %p985 = pneg %p372
        %p986 = pneg %p369
        %s987 = sand.u32 %s53, 1
        %s988 = scalar_lea.sflag [#allocation23], %s987
        %s989 = sand.u32 %s385, 1
        %s990 = scalar_lea.vmem [#allocation24], %s989
        %p991 = pneg %p398
        %p992 = pneg %p395
        %s993 = sand.u32 %s53, 1
        %s994 = scalar_lea.sflag [#allocation26], %s993
        %s995 = sand.u32 %s411, 1
        %s996 = smul.addr %s995, 32
        %s997 = scalar_lea.vmem [#allocation25], %s996
        %p998 = pneg %p424
        %p999 = pneg %p421
        %s1000 = sand.u32 %s53, 1
        %s1001 = scalar_lea.sflag [#allocation26], %s1000
        %s1002 = sand.u32 %s437, 1
        %s1003 = scalar_lea.vmem [#allocation27], %s1002
        %p1004 = pneg %p450
        %p1005 = pneg %p447
        %p1006 = pneg %p476
        %p1007 = pneg %p473
        %s1008 = sand.u32 %s463, 1
        %s1009 = scalar_lea.sflag [#allocation6], %s1008
        %s1010 = sand.u32 %s463, 1
        %s1011 = smul.addr %s1010, 4
        %s1012 = scalar_lea.vmem [#allocation28], %s1011
        %p1014 = scmp.eq.s32.totalorder %s58, 0
        // Predicated region
        $region141: #{tpu_custom_call.1} parent=79 // pred_check
          %p1015 = pneg %p1014
        $region142: #{tpu_custom_call.1} parent=79 // pred_check_branch
          %1017 = sbr.rel (%p1015) target = $region144
        $region143: #{tpu_custom_call.1} parent=79 // pred_region
          %v1018 = vld [vmem:[%s786] sm:$0xff]
          %vm1019 = vcmask 261120
          %1020 = vst.msk [vmem:[#allocation2] sm:$0xff] %vm1019, %v1018
        $region144: #{tpu_custom_call.1} parent=79 // pred_fallthru
          _
        %v1021 = vld [vmem:[#allocation2] sm:$0xff]
        %v1022 = vld [vmem:[%s795] sm:$0xff]
        %v1023 = vld [vmem:[%s795 + $0x8] sm:$0xff]
        %v1024 = vld [vmem:[%s812] sm:$0xf]
        %v1025 = vld [vmem:[%s812 + $0x4] sm:$0xf]
        %v1026 = vld [vmem:[%s812 + $0x8] sm:$0xf]
        %v1027 = vld [vmem:[%s812 + $0xc] sm:$0xf]
        %v1028 = vld [vmem:[%s820] sm:$0x1]
        %v1029 = vld [vmem:[%s829] sm:$0xf]
        %v1030 = vld [vmem:[%s829 + $0x4] sm:$0xf]
        %v1031 = vld [vmem:[%s829 + $0x8] sm:$0xf]
        %v1032 = vld [vmem:[%s829 + $0xc] sm:$0xf]
        %v1033 = vld [vmem:[%s837] sm:$0x1]
        %v1034 = vld [vmem:[%s846] sm:$0xf]
        %v1035 = vld [vmem:[%s846 + $0x4] sm:$0xf]
        %v1036 = vld [vmem:[%s846 + $0x8] sm:$0xf]
        %v1037 = vld [vmem:[%s846 + $0xc] sm:$0xf]
        %v1038 = vld [vmem:[%s854] sm:$0x1]
        %v1039 = vld [vmem:[%s862] sm:$0x1]
        %v1040 = vld [vmem:[%s870] sm:$0x1]
        %v1041 = vld [vmem:[%s879] sm:$0xf]
        %v1042 = vld [vmem:[%s879 + $0x4] sm:$0xf]
        %v1043 = vld [vmem:[%s879 + $0x8] sm:$0xf]
        %v1044 = vld [vmem:[%s879 + $0xc] sm:$0xf]
        %v1045 = vld [vmem:[%s887] sm:$0x1]
        %v1046 = vld [vmem:[%s896] sm:$0xf]
        %v1047 = vld [vmem:[%s896 + $0x4] sm:$0xf]
        %v1048 = vld [vmem:[%s896 + $0x8] sm:$0xf]
        %v1049 = vld [vmem:[%s896 + $0xc] sm:$0xf]
        %v1050 = vld [vmem:[%s896 + $0x10] sm:$0xf]
        %v1051 = vld [vmem:[%s896 + $0x14] sm:$0xf]
        %v1052 = vld [vmem:[%s896 + $0x18] sm:$0xf]
        %v1053 = vld [vmem:[%s896 + $0x1c] sm:$0xf]
        %v1054 = vld [vmem:[%s904] sm:$0x1]
        %v1055 = vlaneseq
        %v1056 = vshrl.u32 %v1055, 7
        %v1057 = vlaneseq
        %v1058 = vand.u32 %v1057, 127
        %vm1059 = vcmp.gt.s32.totalorder %v1058, %v1056
        %v1060 = vld [vmem:[%s803] sm:$0x1]
        %v1062 = vlaneseq
        %v1063 = vshrl.u32 %v1062, 7
        %v1064 = vsub.s32 0, %v1063
        %v1065 = vrot.slane %v1060, %v1064
        %vm1067 = vcmp.gt.f32.partialorder %v1065, 0.5
        %v1068 = vpack.c.bf16 %v1021, %v1021
        %v1070 = vlaneseq
        %v1071 = vshrl.u32 %v1070, 7
        %v1072 = vsub.s32 0, %v1071
        %v1073 = vrot.slane %v1028, %v1072
        %v1079 = vunpack.c.l.b16 %v1024
        %v1080 = vunpack.c.l.b16 %v1025
        %v1081 = vunpack.c.l.b16 %v1026
        %v1082 = vunpack.c.l.b16 %v1027
        %v1083 = vpack.c.b16 %v1080, %v1079
        %v1084 = vpack.c.b16 %v1082, %v1081
        %vm1087 = vcmask 261120
        %v1089 = vsel %vm1087, %v1068, 0
        %1091 = vmatprep.subr.bf16.mxu0 0
        %1092 = vmatpush1.bf16.msra.mxu0 %v1083
        %1093 = vmatprep.subr.bf16.mxu0 0
        %1094 = vmatpush1.bf16.msra.mxu0 %v1084
        %1095 = vmatprep.subr.bf16.mxu0 0
        %1096 = vmatpush1.bf16.msra.mxu0 0
        %1097 = vmatprep.subr.bf16.mxu0 0
        %1098 = vmatpush1.bf16.msra.mxu0 0
        %1099 = vmatprep.subr.bf16.mxu0 0
        %1100 = vmatpush1.bf16.msra.mxu0 0
        %1101 = vmatprep.subr.bf16.mxu0 0
        %1102 = vmatpush1.bf16.msra.mxu0 0
        %1103 = vmatprep.subr.bf16.mxu0 0
        %1104 = vmatpush1.bf16.msra.mxu0 0
        %1105 = vmatprep.subr.bf16.mxu0 0
        %1106 = vmatpush1.bf16.msra.mxu0 0
        %1107 = vmatprep.subr.bf16.mxu0 0
        %1108 = vmatpush1.bf16.msra.mxu0 0
        %1109 = vmatprep.subr.bf16.mxu0 0
        %1110 = vmatpush1.bf16.msra.mxu0 0
        %1111 = vmatprep.subr.bf16.mxu0 0
        %1112 = vmatpush1.bf16.msra.mxu0 0
        %1113 = vmatprep.subr.bf16.mxu0 0
        %1114 = vmatpush1.bf16.msra.mxu0 0
        %1115 = vmatprep.subr.bf16.mxu0 0
        %1116 = vmatpush1.bf16.msra.mxu0 0
        %1117 = vmatprep.subr.bf16.mxu0 0
        %1118 = vmatpush1.bf16.msra.mxu0 0
        %1119 = vmatprep.subr.bf16.mxu0 0
        %1120 = vmatpush1.bf16.msra.mxu0 0
        %1121 = vmatprep.subr.bf16.mxu0 0
        %1122 = vmatpush1.bf16.msra.mxu0 0
        %1123 = vmatprep.mubr.bf16.mxu0 0
        %1124 = vmatmul.mubr.bf16.gmra.mrb[0].mxu0 %v1089
        %v1125 = vpop.f32.mrb[0].mxu0
        %v1126 = vadd.f32 %v1073, %v1125
        %v1127 = vpop.f32.mrb[0].mxu0
        %v1128 = vpop.f32.mrb[0].mxu0
        %v1129 = vpop.f32.mrb[0].mxu0
        %1130 = vdwg.mxu0
        %v1132 = vlaneseq
        %v1133 = vshrl.u32 %v1132, 7
        %v1134 = vsub.s32 0, %v1133
        %v1135 = vrot.slane %v1033, %v1134
        %v1141 = vunpack.c.l.b16 %v1029
        %v1142 = vunpack.c.l.b16 %v1030
        %v1143 = vunpack.c.l.b16 %v1031
        %v1144 = vunpack.c.l.b16 %v1032
        %v1145 = vpack.c.b16 %v1142, %v1141
        %v1146 = vpack.c.b16 %v1144, %v1143
        %1149 = vmatprep.subr.bf16.mxu0 0
        %1150 = vmatpush1.bf16.msra.mxu0 %v1145
        %1151 = vmatprep.subr.bf16.mxu0 0
        %1152 = vmatpush1.bf16.msra.mxu0 %v1146
        %1153 = vmatprep.subr.bf16.mxu0 0
        %1154 = vmatpush1.bf16.msra.mxu0 0
        %1155 = vmatprep.subr.bf16.mxu0 0
        %1156 = vmatpush1.bf16.msra.mxu0 0
        %1157 = vmatprep.subr.bf16.mxu0 0
        %1158 = vmatpush1.bf16.msra.mxu0 0
        %1159 = vmatprep.subr.bf16.mxu0 0
        %1160 = vmatpush1.bf16.msra.mxu0 0
        %1161 = vmatprep.subr.bf16.mxu0 0
        %1162 = vmatpush1.bf16.msra.mxu0 0
        %1163 = vmatprep.subr.bf16.mxu0 0
        %1164 = vmatpush1.bf16.msra.mxu0 0
        %1165 = vmatprep.subr.bf16.mxu0 0
        %1166 = vmatpush1.bf16.msra.mxu0 0
        %1167 = vmatprep.subr.bf16.mxu0 0
        %1168 = vmatpush1.bf16.msra.mxu0 0
        %1169 = vmatprep.subr.bf16.mxu0 0
        %1170 = vmatpush1.bf16.msra.mxu0 0
        %1171 = vmatprep.subr.bf16.mxu0 0
        %1172 = vmatpush1.bf16.msra.mxu0 0
        %1173 = vmatprep.subr.bf16.mxu0 0
        %1174 = vmatpush1.bf16.msra.mxu0 0
        %1175 = vmatprep.subr.bf16.mxu0 0
        %1176 = vmatpush1.bf16.msra.mxu0 0
        %1177 = vmatprep.subr.bf16.mxu0 0
        %1178 = vmatpush1.bf16.msra.mxu0 0
        %1179 = vmatprep.subr.bf16.mxu0 0
        %1180 = vmatpush1.bf16.msra.mxu0 0
        %1181 = vmatprep.mubr.bf16.mxu0 0
        %1182 = vmatmul.mubr.bf16.gmra.mrb[0].mxu0 %v1089
        %v1183 = vpop.f32.mrb[0].mxu0
        %v1184 = vadd.f32 %v1135, %v1183
        %v1185 = vpop.f32.mrb[0].mxu0
        %v1186 = vpop.f32.mrb[0].mxu0
        %v1187 = vpop.f32.mrb[0].mxu0
        %1188 = vdwg.mxu0
        %v1189 = vpack.c.bf16 %v1126, %v1126
        %v1190 = vpack.c.bf16 %v1184, %v1184
        %vm1191 = vcmask 64512
        %v1193 = vsel %vm1191, %v1189, 0
        %v1196 = vsel %vm1191, %v1190, 0
        %1198 = vmatprep.subr.bf16.mxu0 0
        %1199 = vmatpush1.bf16.xpose.msra.mxu0 %v1196
        %1200 = vmatprep.subr.bf16.mxu0 0
        %1201 = vmatpush1.bf16.xpose.msra.mxu0 0
        %1202 = vmatprep.subr.bf16.mxu0 0
        %1203 = vmatpush1.bf16.xpose.msra.mxu0 0
        %1204 = vmatprep.subr.bf16.mxu0 0
        %1205 = vmatpush1.bf16.xpose.msra.mxu0 0
        %1206 = vmatprep.subr.bf16.mxu0 0
        %1207 = vmatpush1.bf16.xpose.msra.mxu0 0
        %1208 = vmatprep.subr.bf16.mxu0 0
        %1209 = vmatpush1.bf16.xpose.msra.mxu0 0
        %1210 = vmatprep.subr.bf16.mxu0 0
        %1211 = vmatpush1.bf16.xpose.msra.mxu0 0
        %1212 = vmatprep.subr.bf16.mxu0 0
        %1213 = vmatpush1.bf16.xpose.msra.mxu0 0
        %1214 = vmatprep.subr.bf16.mxu0 0
        %1215 = vmatpush1.bf16.xpose.msra.mxu0 0
        %1216 = vmatprep.subr.bf16.mxu0 0
        %1217 = vmatpush1.bf16.xpose.msra.mxu0 0
        %1218 = vmatprep.subr.bf16.mxu0 0
        %1219 = vmatpush1.bf16.xpose.msra.mxu0 0
        %1220 = vmatprep.subr.bf16.mxu0 0
        %1221 = vmatpush1.bf16.xpose.msra.mxu0 0
        %1222 = vmatprep.subr.bf16.mxu0 0
        %1223 = vmatpush1.bf16.xpose.msra.mxu0 0
        %1224 = vmatprep.subr.bf16.mxu0 0
        %1225 = vmatpush1.bf16.xpose.msra.mxu0 0
        %1226 = vmatprep.subr.bf16.mxu0 0
        %1227 = vmatpush1.bf16.xpose.msra.mxu0 0
        %1228 = vmatprep.subr.bf16.mxu0 0
        %1229 = vmatpush1.bf16.xpose.msra.mxu0 0
        %1230 = vmatprep.mubr.bf16.mxu0 0
        %1231 = vmatmul.mubr.bf16.gmra.mrb[0].mxu0 %v1193
        %v1232 = vpop.f32.mrb[0].mxu0
        %v1233 = vadd.f32 0.0, %v1232
        %v1234 = vpop.f32.mrb[0].mxu0
        %v1235 = vpop.f32.mrb[0].mxu0
        %v1236 = vpop.f32.mrb[0].mxu0
        %1237 = vdwg.mxu0
        %v1238 = vmul.f32 %v1233, 0.35355338
        %v1239 = vsel %vm1059, -1e+09, %v1238
        %v1240 = vsel %vm1191, %v1239, -inf
        %1241 = vmax.xlane.f32.xlu0 %v1240
        %v1242 = vpop.xlane.xlu0 %1241
        %v1243 = vsub.f32 %v1239, %v1242
        %v1244 = vmul.f32 %v1243, 1.442695
        %v1245 = vpow.pop %v1244
        %v1246 = vsel %vm1191, %v1245, 0.0
        %1247 = vadd.xlane.f32.xlu0 %v1246
        %v1248 = vpop.xlane.xlu0 %1247
        %v1249 = vrcp.pop %v1248
        %v1250 = vmul.f32 %v1245, %v1249
        %v1251 = vpack.c.bf16 %v1250, %v1250
        %1253 = vrot.lane.b32.xlu0 %v1190, 96
        %v1254 = vpop.permute.xlu0 %1253
        %v1256 = vsel %vm1191, %v1251, 0
        %vm1258 = vcmask 1043456
        %v1260 = vsel %vm1258, %v1254, 0
        %1262 = vmatprep.subr.bf16.mxu0 0
        %1263 = vmatpush1.bf16.msra.mxu0 %v1260
        %1264 = vmatprep.subr.bf16.mxu0 0
        %1265 = vmatpush1.bf16.msra.mxu0 0
        %1266 = vmatprep.subr.bf16.mxu0 0
        %1267 = vmatpush1.bf16.msra.mxu0 0
        %1268 = vmatprep.subr.bf16.mxu0 0
        %1269 = vmatpush1.bf16.msra.mxu0 0
        %1270 = vmatprep.subr.bf16.mxu0 0
        %1271 = vmatpush1.bf16.msra.mxu0 0
        %1272 = vmatprep.subr.bf16.mxu0 0
        %1273 = vmatpush1.bf16.msra.mxu0 0
        %1274 = vmatprep.subr.bf16.mxu0 0
        %1275 = vmatpush1.bf16.msra.mxu0 0
        %1276 = vmatprep.subr.bf16.mxu0 0
        %1277 = vmatpush1.bf16.msra.mxu0 0
        %1278 = vmatprep.subr.bf16.mxu0 0
        %1279 = vmatpush1.bf16.msra.mxu0 0
        %1280 = vmatprep.subr.bf16.mxu0 0
        %1281 = vmatpush1.bf16.msra.mxu0 0
        %1282 = vmatprep.subr.bf16.mxu0 0
        %1283 = vmatpush1.bf16.msra.mxu0 0
        %1284 = vmatprep.subr.bf16.mxu0 0
        %1285 = vmatpush1.bf16.msra.mxu0 0
        %1286 = vmatprep.subr.bf16.mxu0 0
        %1287 = vmatpush1.bf16.msra.mxu0 0
        %1288 = vmatprep.subr.bf16.mxu0 0
        %1289 = vmatpush1.bf16.msra.mxu0 0
        %1290 = vmatprep.subr.bf16.mxu0 0
        %1291 = vmatpush1.bf16.msra.mxu0 0
        %1292 = vmatprep.subr.bf16.mxu0 0
        %1293 = vmatpush1.bf16.msra.mxu0 0
        %1294 = vmatprep.mubr.bf16.mxu0 0
        %1295 = vmatmul.mubr.bf16.gmra.mrb[0].mxu0 %v1256
        %v1296 = vpop.f32.mrb[0].mxu0
        %v1297 = vadd.f32 0.0, %v1296
        %v1298 = vpop.f32.mrb[0].mxu0
        %v1299 = vpop.f32.mrb[0].mxu0
        %v1300 = vpop.f32.mrb[0].mxu0
        %1301 = vdwg.mxu0
        %v1302 = vpack.c.bf16 %v1297, %v1297
        %vm1303 = vcmask 60416
        %1304 = vst.msk [vmem:[#allocation3] sm:$0xf] %vm1303, %v1302
        %1306 = vrot.lane.b32.xlu0 %v1189, 120
        %v1307 = vpop.permute.xlu0 %1306
        %1308 = vrot.lane.b32.xlu0 %v1190, 120
        %v1309 = vpop.permute.xlu0 %1308
        %v1311 = vsel %vm1191, %v1307, 0
        %v1314 = vsel %vm1191, %v1309, 0
        %1316 = vmatprep.subr.bf16.mxu0 0
        %1317 = vmatpush1.bf16.xpose.msra.mxu0 %v1314
        %1318 = vmatprep.subr.bf16.mxu0 0
        %1319 = vmatpush1.bf16.xpose.msra.mxu0 0
        %1320 = vmatprep.subr.bf16.mxu0 0
        %1321 = vmatpush1.bf16.xpose.msra.mxu0 0
        %1322 = vmatprep.subr.bf16.mxu0 0
        %1323 = vmatpush1.bf16.xpose.msra.mxu0 0
        %1324 = vmatprep.subr.bf16.mxu0 0
        %1325 = vmatpush1.bf16.xpose.msra.mxu0 0
        %1326 = vmatprep.subr.bf16.mxu0 0
        %1327 = vmatpush1.bf16.xpose.msra.mxu0 0
        %1328 = vmatprep.subr.bf16.mxu0 0
        %1329 = vmatpush1.bf16.xpose.msra.mxu0 0
        %1330 = vmatprep.subr.bf16.mxu0 0
        %1331 = vmatpush1.bf16.xpose.msra.mxu0 0
        %1332 = vmatprep.subr.bf16.mxu0 0
        %1333 = vmatpush1.bf16.xpose.msra.mxu0 0
        %1334 = vmatprep.subr.bf16.mxu0 0
        %1335 = vmatpush1.bf16.xpose.msra.mxu0 0
        %1336 = vmatprep.subr.bf16.mxu0 0
        %1337 = vmatpush1.bf16.xpose.msra.mxu0 0
        %1338 = vmatprep.subr.bf16.mxu0 0
        %1339 = vmatpush1.bf16.xpose.msra.mxu0 0
        %1340 = vmatprep.subr.bf16.mxu0 0
        %1341 = vmatpush1.bf16.xpose.msra.mxu0 0
        %1342 = vmatprep.subr.bf16.mxu0 0
        %1343 = vmatpush1.bf16.xpose.msra.mxu0 0
        %1344 = vmatprep.subr.bf16.mxu0 0
        %1345 = vmatpush1.bf16.xpose.msra.mxu0 0
        %1346 = vmatprep.subr.bf16.mxu0 0
        %1347 = vmatpush1.bf16.xpose.msra.mxu0 0
        %1348 = vmatprep.mubr.bf16.mxu0 0
        %1349 = vmatmul.mubr.bf16.gmra.mrb[0].mxu0 %v1311
        %v1350 = vpop.f32.mrb[0].mxu0
        %v1351 = vadd.f32 0.0, %v1350
        %v1352 = vpop.f32.mrb[0].mxu0
        %v1353 = vpop.f32.mrb[0].mxu0
        %v1354 = vpop.f32.mrb[0].mxu0
        %1355 = vdwg.mxu0
        %v1356 = vmul.f32 %v1351, 0.35355338
        %v1357 = vsel %vm1059, -1e+09, %v1356
        %v1358 = vsel %vm1191, %v1357, -inf
        %1359 = vmax.xlane.f32.xlu0 %v1358
        %v1360 = vpop.xlane.xlu0 %1359
        %v1361 = vsub.f32 %v1357, %v1360
        %v1362 = vmul.f32 %v1361, 1.442695
        %v1363 = vpow.pop %v1362
        %v1364 = vsel %vm1191, %v1363, 0.0
        %1365 = vadd.xlane.f32.xlu0 %v1364
        %v1366 = vpop.xlane.xlu0 %1365
        %v1367 = vrcp.pop %v1366
        %v1368 = vmul.f32 %v1363, %v1367
        %v1369 = vpack.c.bf16 %v1368, %v1368
        %1370 = vrot.lane.b32.xlu0 %v1190, 88
        %v1371 = vpop.permute.xlu0 %1370
        %v1373 = vsel %vm1191, %v1369, 0
        %v1376 = vsel %vm1258, %v1371, 0
        %1378 = vmatprep.subr.bf16.mxu0 0
        %1379 = vmatpush1.bf16.msra.mxu0 %v1376
        %1380 = vmatprep.subr.bf16.mxu0 0
        %1381 = vmatpush1.bf16.msra.mxu0 0
        %1382 = vmatprep.subr.bf16.mxu0 0
        %1383 = vmatpush1.bf16.msra.mxu0 0
        %1384 = vmatprep.subr.bf16.mxu0 0
        %1385 = vmatpush1.bf16.msra.mxu0 0
        %1386 = vmatprep.subr.bf16.mxu0 0
        %1387 = vmatpush1.bf16.msra.mxu0 0
        %1388 = vmatprep.subr.bf16.mxu0 0
        %1389 = vmatpush1.bf16.msra.mxu0 0
        %1390 = vmatprep.subr.bf16.mxu0 0
        %1391 = vmatpush1.bf16.msra.mxu0 0
        %1392 = vmatprep.subr.bf16.mxu0 0
        %1393 = vmatpush1.bf16.msra.mxu0 0
        %1394 = vmatprep.subr.bf16.mxu0 0
        %1395 = vmatpush1.bf16.msra.mxu0 0
        %1396 = vmatprep.subr.bf16.mxu0 0
        %1397 = vmatpush1.bf16.msra.mxu0 0
        %1398 = vmatprep.subr.bf16.mxu0 0
        %1399 = vmatpush1.bf16.msra.mxu0 0
        %1400 = vmatprep.subr.bf16.mxu0 0
        %1401 = vmatpush1.bf16.msra.mxu0 0
        %1402 = vmatprep.subr.bf16.mxu0 0
        %1403 = vmatpush1.bf16.msra.mxu0 0
        %1404 = vmatprep.subr.bf16.mxu0 0
        %1405 = vmatpush1.bf16.msra.mxu0 0
        %1406 = vmatprep.subr.bf16.mxu0 0
        %1407 = vmatpush1.bf16.msra.mxu0 0
        %1408 = vmatprep.subr.bf16.mxu0 0
        %1409 = vmatpush1.bf16.msra.mxu0 0
        %1410 = vmatprep.mubr.bf16.mxu0 0
        %1411 = vmatmul.mubr.bf16.gmra.mrb[0].mxu0 %v1373
        %v1412 = vpop.f32.mrb[0].mxu0
        %v1413 = vadd.f32 0.0, %v1412
        %v1414 = vpop.f32.mrb[0].mxu0
        %v1415 = vpop.f32.mrb[0].mxu0
        %v1416 = vpop.f32.mrb[0].mxu0
        %1417 = vdwg.mxu0
        %v1418 = vpack.c.bf16 %v1413, %v1413
        %v1420 = vunpack.c.l.b16 %v1418
        %v1421 = vpack.c.b16 %v1420, %v1420
        %1422 = vrot.lane.b32.xlu0 %v1421, 8
        %v1423 = vpop.permute.xlu0 %1422
        %vm1425 = vcmask 126016
        %1426 = vst.msk [vmem:[#allocation3] sm:$0xf] %vm1425, %v1423
        %1427 = vrot.lane.b32.xlu0 %v1189, 112
        %v1428 = vpop.permute.xlu0 %1427
        %1429 = vrot.lane.b32.xlu0 %v1190, 112
        %v1430 = vpop.permute.xlu0 %1429
        %v1432 = vsel %vm1191, %v1428, 0
        %v1435 = vsel %vm1191, %v1430, 0
        %1437 = vmatprep.subr.bf16.mxu0 0
        %1438 = vmatpush1.bf16.xpose.msra.mxu0 %v1435
        %1439 = vmatprep.subr.bf16.mxu0 0
        %1440 = vmatpush1.bf16.xpose.msra.mxu0 0
        %1441 = vmatprep.subr.bf16.mxu0 0
        %1442 = vmatpush1.bf16.xpose.msra.mxu0 0
        %1443 = vmatprep.subr.bf16.mxu0 0
        %1444 = vmatpush1.bf16.xpose.msra.mxu0 0
        %1445 = vmatprep.subr.bf16.mxu0 0
        %1446 = vmatpush1.bf16.xpose.msra.mxu0 0
        %1447 = vmatprep.subr.bf16.mxu0 0
        %1448 = vmatpush1.bf16.xpose.msra.mxu0 0
        %1449 = vmatprep.subr.bf16.mxu0 0
        %1450 = vmatpush1.bf16.xpose.msra.mxu0 0
        %1451 = vmatprep.subr.bf16.mxu0 0
        %1452 = vmatpush1.bf16.xpose.msra.mxu0 0
        %1453 = vmatprep.subr.bf16.mxu0 0
        %1454 = vmatpush1.bf16.xpose.msra.mxu0 0
        %1455 = vmatprep.subr.bf16.mxu0 0
        %1456 = vmatpush1.bf16.xpose.msra.mxu0 0
        %1457 = vmatprep.subr.bf16.mxu0 0
        %1458 = vmatpush1.bf16.xpose.msra.mxu0 0
        %1459 = vmatprep.subr.bf16.mxu0 0
        %1460 = vmatpush1.bf16.xpose.msra.mxu0 0
        %1461 = vmatprep.subr.bf16.mxu0 0
        %1462 = vmatpush1.bf16.xpose.msra.mxu0 0
        %1463 = vmatprep.subr.bf16.mxu0 0
        %1464 = vmatpush1.bf16.xpose.msra.mxu0 0
        %1465 = vmatprep.subr.bf16.mxu0 0
        %1466 = vmatpush1.bf16.xpose.msra.mxu0 0
        %1467 = vmatprep.subr.bf16.mxu0 0
        %1468 = vmatpush1.bf16.xpose.msra.mxu0 0
        %1469 = vmatprep.mubr.bf16.mxu0 0
        %1470 = vmatmul.mubr.bf16.gmra.mrb[0].mxu0 %v1432
        %v1471 = vpop.f32.mrb[0].mxu0
        %v1472 = vadd.f32 0.0, %v1471
        %v1473 = vpop.f32.mrb[0].mxu0
        %v1474 = vpop.f32.mrb[0].mxu0
        %v1475 = vpop.f32.mrb[0].mxu0
        %1476 = vdwg.mxu0
        %v1477 = vmul.f32 %v1472, 0.35355338
        %v1478 = vsel %vm1059, -1e+09, %v1477
        %v1479 = vsel %vm1191, %v1478, -inf
        %1480 = vmax.xlane.f32.xlu0 %v1479
        %v1481 = vpop.xlane.xlu0 %1480
        %v1482 = vsub.f32 %v1478, %v1481
        %v1483 = vmul.f32 %v1482, 1.442695
        %v1484 = vpow.pop %v1483
        %v1485 = vsel %vm1191, %v1484, 0.0
        %1486 = vadd.xlane.f32.xlu0 %v1485
        %v1487 = vpop.xlane.xlu0 %1486
        %v1488 = vrcp.pop %v1487
        %v1489 = vmul.f32 %v1484, %v1488
        %v1490 = vpack.c.bf16 %v1489, %v1489
        %1491 = vrot.lane.b32.xlu0 %v1190, 80
        %v1492 = vpop.permute.xlu0 %1491
        %v1494 = vsel %vm1191, %v1490, 0
        %v1497 = vsel %vm1258, %v1492, 0
        %1499 = vmatprep.subr.bf16.mxu0 0
        %1500 = vmatpush1.bf16.msra.mxu0 %v1497
        %1501 = vmatprep.subr.bf16.mxu0 0
        %1502 = vmatpush1.bf16.msra.mxu0 0
        %1503 = vmatprep.subr.bf16.mxu0 0
        %1504 = vmatpush1.bf16.msra.mxu0 0
        %1505 = vmatprep.subr.bf16.mxu0 0
        %1506 = vmatpush1.bf16.msra.mxu0 0
        %1507 = vmatprep.subr.bf16.mxu0 0
        %1508 = vmatpush1.bf16.msra.mxu0 0
        %1509 = vmatprep.subr.bf16.mxu0 0
        %1510 = vmatpush1.bf16.msra.mxu0 0
        %1511 = vmatprep.subr.bf16.mxu0 0
        %1512 = vmatpush1.bf16.msra.mxu0 0
        %1513 = vmatprep.subr.bf16.mxu0 0
        %1514 = vmatpush1.bf16.msra.mxu0 0
        %1515 = vmatprep.subr.bf16.mxu0 0
        %1516 = vmatpush1.bf16.msra.mxu0 0
        %1517 = vmatprep.subr.bf16.mxu0 0
        %1518 = vmatpush1.bf16.msra.mxu0 0
        %1519 = vmatprep.subr.bf16.mxu0 0
        %1520 = vmatpush1.bf16.msra.mxu0 0
        %1521 = vmatprep.subr.bf16.mxu0 0
        %1522 = vmatpush1.bf16.msra.mxu0 0
        %1523 = vmatprep.subr.bf16.mxu0 0
        %1524 = vmatpush1.bf16.msra.mxu0 0
        %1525 = vmatprep.subr.bf16.mxu0 0
        %1526 = vmatpush1.bf16.msra.mxu0 0
        %1527 = vmatprep.subr.bf16.mxu0 0
        %1528 = vmatpush1.bf16.msra.mxu0 0
        %1529 = vmatprep.subr.bf16.mxu0 0
        %1530 = vmatpush1.bf16.msra.mxu0 0
        %1531 = vmatprep.mubr.bf16.mxu0 0
        %1532 = vmatmul.mubr.bf16.gmra.mrb[0].mxu0 %v1494
        %v1533 = vpop.f32.mrb[0].mxu0
        %v1534 = vadd.f32 0.0, %v1533
        %v1535 = vpop.f32.mrb[0].mxu0
        %v1536 = vpop.f32.mrb[0].mxu0
        %v1537 = vpop.f32.mrb[0].mxu0
        %1538 = vdwg.mxu0
        %v1539 = vpack.c.bf16 %v1534, %v1534
        %v1541 = vunpack.c.l.b16 %v1539
        %v1542 = vpack.c.b16 %v1541, %v1541
        %1543 = vrot.lane.b32.xlu0 %v1542, 16
        %v1544 = vpop.permute.xlu0 %1543
        %vm1546 = vcmask 191616
        %1547 = vst.msk [vmem:[#allocation3] sm:$0xf] %vm1546, %v1544
        %1548 = vrot.lane.b32.xlu0 %v1189, 104
        %v1549 = vpop.permute.xlu0 %1548
        %1550 = vrot.lane.b32.xlu0 %v1190, 104
        %v1551 = vpop.permute.xlu0 %1550
        %v1553 = vsel %vm1191, %v1549, 0
        %v1556 = vsel %vm1191, %v1551, 0
        %1558 = vmatprep.subr.bf16.mxu0 0
        %1559 = vmatpush1.bf16.xpose.msra.mxu0 %v1556
        %1560 = vmatprep.subr.bf16.mxu0 0
        %1561 = vmatpush1.bf16.xpose.msra.mxu0 0
        %1562 = vmatprep.subr.bf16.mxu0 0
        %1563 = vmatpush1.bf16.xpose.msra.mxu0 0
        %1564 = vmatprep.subr.bf16.mxu0 0
        %1565 = vmatpush1.bf16.xpose.msra.mxu0 0
        %1566 = vmatprep.subr.bf16.mxu0 0
        %1567 = vmatpush1.bf16.xpose.msra.mxu0 0
        %1568 = vmatprep.subr.bf16.mxu0 0
        %1569 = vmatpush1.bf16.xpose.msra.mxu0 0
        %1570 = vmatprep.subr.bf16.mxu0 0
        %1571 = vmatpush1.bf16.xpose.msra.mxu0 0
        %1572 = vmatprep.subr.bf16.mxu0 0
        %1573 = vmatpush1.bf16.xpose.msra.mxu0 0
        %1574 = vmatprep.subr.bf16.mxu0 0
        %1575 = vmatpush1.bf16.xpose.msra.mxu0 0
        %1576 = vmatprep.subr.bf16.mxu0 0
        %1577 = vmatpush1.bf16.xpose.msra.mxu0 0
        %1578 = vmatprep.subr.bf16.mxu0 0
        %1579 = vmatpush1.bf16.xpose.msra.mxu0 0
        %1580 = vmatprep.subr.bf16.mxu0 0
        %1581 = vmatpush1.bf16.xpose.msra.mxu0 0
        %1582 = vmatprep.subr.bf16.mxu0 0
        %1583 = vmatpush1.bf16.xpose.msra.mxu0 0
        %1584 = vmatprep.subr.bf16.mxu0 0
        %1585 = vmatpush1.bf16.xpose.msra.mxu0 0
        %1586 = vmatprep.subr.bf16.mxu0 0
        %1587 = vmatpush1.bf16.xpose.msra.mxu0 0
        %1588 = vmatprep.subr.bf16.mxu0 0
        %1589 = vmatpush1.bf16.xpose.msra.mxu0 0
        %1590 = vmatprep.mubr.bf16.mxu0 0
        %1591 = vmatmul.mubr.bf16.gmra.mrb[0].mxu0 %v1553
        %v1592 = vpop.f32.mrb[0].mxu0
        %v1593 = vadd.f32 0.0, %v1592
        %v1594 = vpop.f32.mrb[0].mxu0
        %v1595 = vpop.f32.mrb[0].mxu0
        %v1596 = vpop.f32.mrb[0].mxu0
        %1597 = vdwg.mxu0
        %v1598 = vmul.f32 %v1593, 0.35355338
        %v1599 = vsel %vm1059, -1e+09, %v1598
        %v1600 = vsel %vm1191, %v1599, -inf
        %1601 = vmax.xlane.f32.xlu0 %v1600
        %v1602 = vpop.xlane.xlu0 %1601
        %v1603 = vsub.f32 %v1599, %v1602
        %v1604 = vmul.f32 %v1603, 1.442695
        %v1605 = vpow.pop %v1604
        %v1606 = vsel %vm1191, %v1605, 0.0
        %1607 = vadd.xlane.f32.xlu0 %v1606
        %v1608 = vpop.xlane.xlu0 %1607
        %v1609 = vrcp.pop %v1608
        %v1610 = vmul.f32 %v1605, %v1609
        %v1611 = vpack.c.bf16 %v1610, %v1610
        %1612 = vrot.lane.b32.xlu0 %v1190, 72
        %v1613 = vpop.permute.xlu0 %1612
        %v1615 = vsel %vm1191, %v1611, 0
        %v1618 = vsel %vm1258, %v1613, 0
        %1620 = vmatprep.subr.bf16.mxu0 0
        %1621 = vmatpush1.bf16.msra.mxu0 %v1618
        %1622 = vmatprep.subr.bf16.mxu0 0
        %1623 = vmatpush1.bf16.msra.mxu0 0
        %1624 = vmatprep.subr.bf16.mxu0 0
        %1625 = vmatpush1.bf16.msra.mxu0 0
        %1626 = vmatprep.subr.bf16.mxu0 0
        %1627 = vmatpush1.bf16.msra.mxu0 0
        %1628 = vmatprep.subr.bf16.mxu0 0
        %1629 = vmatpush1.bf16.msra.mxu0 0
        %1630 = vmatprep.subr.bf16.mxu0 0
        %1631 = vmatpush1.bf16.msra.mxu0 0
        %1632 = vmatprep.subr.bf16.mxu0 0
        %1633 = vmatpush1.bf16.msra.mxu0 0
        %1634 = vmatprep.subr.bf16.mxu0 0
        %1635 = vmatpush1.bf16.msra.mxu0 0
        %1636 = vmatprep.subr.bf16.mxu0 0
        %1637 = vmatpush1.bf16.msra.mxu0 0
        %1638 = vmatprep.subr.bf16.mxu0 0
        %1639 = vmatpush1.bf16.msra.mxu0 0
        %1640 = vmatprep.subr.bf16.mxu0 0
        %1641 = vmatpush1.bf16.msra.mxu0 0
        %1642 = vmatprep.subr.bf16.mxu0 0
        %1643 = vmatpush1.bf16.msra.mxu0 0
        %1644 = vmatprep.subr.bf16.mxu0 0
        %1645 = vmatpush1.bf16.msra.mxu0 0
        %1646 = vmatprep.subr.bf16.mxu0 0
        %1647 = vmatpush1.bf16.msra.mxu0 0
        %1648 = vmatprep.subr.bf16.mxu0 0
        %1649 = vmatpush1.bf16.msra.mxu0 0
        %1650 = vmatprep.subr.bf16.mxu0 0
        %1651 = vmatpush1.bf16.msra.mxu0 0
        %1652 = vmatprep.mubr.bf16.mxu0 0
        %1653 = vmatmul.mubr.bf16.gmra.mrb[0].mxu0 %v1615
        %v1654 = vpop.f32.mrb[0].mxu0
        %v1655 = vadd.f32 0.0, %v1654
        %v1656 = vpop.f32.mrb[0].mxu0
        %v1657 = vpop.f32.mrb[0].mxu0
        %v1658 = vpop.f32.mrb[0].mxu0
        %1659 = vdwg.mxu0
        %v1660 = vpack.c.bf16 %v1655, %v1655
        %v1662 = vunpack.c.l.b16 %v1660
        %v1663 = vpack.c.b16 %v1662, %v1662
        %1664 = vrot.lane.b32.xlu0 %v1663, 24
        %v1665 = vpop.permute.xlu0 %1664
        %vm1667 = vcmask 257216
        %1668 = vst.msk [vmem:[#allocation3] sm:$0xf] %vm1667, %v1665
        %v1669 = vld [vmem:[#allocation3] sm:$0xf]
        %v1671 = vlaneseq
        %v1672 = vshrl.u32 %v1671, 7
        %v1673 = vsub.s32 0, %v1672
        %v1674 = vrot.slane %v1038, %v1673
        %v1680 = vunpack.c.l.b16 %v1034
        %v1681 = vunpack.c.l.b16 %v1035
        %v1682 = vunpack.c.l.b16 %v1036
        %v1683 = vunpack.c.l.b16 %v1037
        %v1684 = vpack.c.b16 %v1681, %v1680
        %v1685 = vpack.c.b16 %v1683, %v1682
        %v1689 = vsel %vm1087, %v1669, 0
        %1691 = vmatprep.subr.bf16.mxu0 0
        %1692 = vmatpush1.bf16.msra.mxu0 %v1684
        %1693 = vmatprep.subr.bf16.mxu0 0
        %1694 = vmatpush1.bf16.msra.mxu0 %v1685
        %1695 = vmatprep.subr.bf16.mxu0 0
        %1696 = vmatpush1.bf16.msra.mxu0 0
        %1697 = vmatprep.subr.bf16.mxu0 0
        %1698 = vmatpush1.bf16.msra.mxu0 0
        %1699 = vmatprep.subr.bf16.mxu0 0
        %1700 = vmatpush1.bf16.msra.mxu0 0
        %1701 = vmatprep.subr.bf16.mxu0 0
        %1702 = vmatpush1.bf16.msra.mxu0 0
        %1703 = vmatprep.subr.bf16.mxu0 0
        %1704 = vmatpush1.bf16.msra.mxu0 0
        %1705 = vmatprep.subr.bf16.mxu0 0
        %1706 = vmatpush1.bf16.msra.mxu0 0
        %1707 = vmatprep.subr.bf16.mxu0 0
        %1708 = vmatpush1.bf16.msra.mxu0 0
        %1709 = vmatprep.subr.bf16.mxu0 0
        %1710 = vmatpush1.bf16.msra.mxu0 0
        %1711 = vmatprep.subr.bf16.mxu0 0
        %1712 = vmatpush1.bf16.msra.mxu0 0
        %1713 = vmatprep.subr.bf16.mxu0 0
        %1714 = vmatpush1.bf16.msra.mxu0 0
        %1715 = vmatprep.subr.bf16.mxu0 0
        %1716 = vmatpush1.bf16.msra.mxu0 0
        %1717 = vmatprep.subr.bf16.mxu0 0
        %1718 = vmatpush1.bf16.msra.mxu0 0
        %1719 = vmatprep.subr.bf16.mxu0 0
        %1720 = vmatpush1.bf16.msra.mxu0 0
        %1721 = vmatprep.subr.bf16.mxu0 0
        %1722 = vmatpush1.bf16.msra.mxu0 0
        %1723 = vmatprep.mubr.bf16.mxu0 0
        %1724 = vmatmul.mubr.bf16.gmra.mrb[0].mxu0 %v1689
        %v1725 = vpop.f32.mrb[0].mxu0
        %v1726 = vadd.f32 %v1674, %v1725
        %v1727 = vpop.f32.mrb[0].mxu0
        %v1728 = vpop.f32.mrb[0].mxu0
        %v1729 = vpop.f32.mrb[0].mxu0
        %1730 = vdwg.mxu0
        %v1731 = vadd.f32 %v1021, %v1726
        %v1732 = vsel %vm1087, %v1731, 0.0
        %1733 = vadd.xlane.f32.xlu0 %v1732
        %v1734 = vpop.xlane.xlu0 %1733
        %v1735 = vrcp.pop 32.0
        %v1736 = vmul.f32 %v1734, %v1735
        %v1737 = vsub.f32 %v1731, %v1736
        %v1738 = vmul.f32 %v1737, %v1737
        %v1739 = vsel %vm1087, %v1738, 0.0
        %1740 = vadd.xlane.f32.xlu0 %v1739
        %v1741 = vpop.xlane.xlu0 %1740
        %v1742 = vmul.f32 %v1741, %v1735
        %v1743 = vadd.f32 %v1742, 1e-05
        %v1744 = vrsqrt.pop %v1743
        %v1745 = vmul.f32 %v1737, %v1744
        %v1747 = vlaneseq
        %v1748 = vshrl.u32 %v1747, 7
        %v1749 = vsub.s32 0, %v1748
        %v1750 = vrot.slane %v1039, %v1749
        %v1752 = vmul.f32 %v1745, %v1750
        %v1754 = vlaneseq
        %v1755 = vshrl.u32 %v1754, 7
        %v1756 = vsub.s32 0, %v1755
        %v1757 = vrot.slane %v1040, %v1756
        %v1759 = vadd.f32 %v1752, %v1757
        %v1760 = vpack.c.bf16 %v1759, %v1759
        %v1762 = vsel %vm1087, %v1760, 0
        %1764 = vmatprep.subr.bf16.mxu0 0
        %1765 = vmatpush1.bf16.msra.mxu0 %v1083
        %1766 = vmatprep.subr.bf16.mxu0 0
        %1767 = vmatpush1.bf16.msra.mxu0 %v1084
        %1768 = vmatprep.subr.bf16.mxu0 0
        %1769 = vmatpush1.bf16.msra.mxu0 0
        %1770 = vmatprep.subr.bf16.mxu0 0
        %1771 = vmatpush1.bf16.msra.mxu0 0
        %1772 = vmatprep.subr.bf16.mxu0 0
        %1773 = vmatpush1.bf16.msra.mxu0 0
        %1774 = vmatprep.subr.bf16.mxu0 0
        %1775 = vmatpush1.bf16.msra.mxu0 0
        %1776 = vmatprep.subr.bf16.mxu0 0
        %1777 = vmatpush1.bf16.msra.mxu0 0
        %1778 = vmatprep.subr.bf16.mxu0 0
        %1779 = vmatpush1.bf16.msra.mxu0 0
        %1780 = vmatprep.subr.bf16.mxu0 0
        %1781 = vmatpush1.bf16.msra.mxu0 0
        %1782 = vmatprep.subr.bf16.mxu0 0
        %1783 = vmatpush1.bf16.msra.mxu0 0
        %1784 = vmatprep.subr.bf16.mxu0 0
        %1785 = vmatpush1.bf16.msra.mxu0 0
        %1786 = vmatprep.subr.bf16.mxu0 0
        %1787 = vmatpush1.bf16.msra.mxu0 0
        %1788 = vmatprep.subr.bf16.mxu0 0
        %1789 = vmatpush1.bf16.msra.mxu0 0
        %1790 = vmatprep.subr.bf16.mxu0 0
        %1791 = vmatpush1.bf16.msra.mxu0 0
        %1792 = vmatprep.subr.bf16.mxu0 0
        %1793 = vmatpush1.bf16.msra.mxu0 0
        %1794 = vmatprep.subr.bf16.mxu0 0
        %1795 = vmatpush1.bf16.msra.mxu0 0
        %1796 = vmatprep.mubr.bf16.mxu0 0
        %1797 = vmatmul.mubr.bf16.gmra.mrb[0].mxu0 %v1762
        %v1798 = vpop.f32.mrb[0].mxu0
        %v1799 = vadd.f32 %v1073, %v1798
        %v1800 = vpop.f32.mrb[0].mxu0
        %v1801 = vpop.f32.mrb[0].mxu0
        %v1802 = vpop.f32.mrb[0].mxu0
        %1803 = vdwg.mxu0
        %v1804 = vpack.c.bf16 %v1023, %v1022
        %v1806 = vsel %vm1087, %v1804, 0
        %1808 = vmatprep.subr.bf16.mxu0 0
        %1809 = vmatpush1.bf16.msra.mxu0 %v1145
        %1810 = vmatprep.subr.bf16.mxu0 0
        %1811 = vmatpush1.bf16.msra.mxu0 %v1146
        %1812 = vmatprep.subr.bf16.mxu0 0
        %1813 = vmatpush1.bf16.msra.mxu0 0
        %1814 = vmatprep.subr.bf16.mxu0 0
        %1815 = vmatpush1.bf16.msra.mxu0 0
        %1816 = vmatprep.subr.bf16.mxu0 0
        %1817 = vmatpush1.bf16.msra.mxu0 0
        %1818 = vmatprep.subr.bf16.mxu0 0
        %1819 = vmatpush1.bf16.msra.mxu0 0
        %1820 = vmatprep.subr.bf16.mxu0 0
        %1821 = vmatpush1.bf16.msra.mxu0 0
        %1822 = vmatprep.subr.bf16.mxu0 0
        %1823 = vmatpush1.bf16.msra.mxu0 0
        %1824 = vmatprep.subr.bf16.mxu0 0
        %1825 = vmatpush1.bf16.msra.mxu0 0
        %1826 = vmatprep.subr.bf16.mxu0 0
        %1827 = vmatpush1.bf16.msra.mxu0 0
        %1828 = vmatprep.subr.bf16.mxu0 0
        %1829 = vmatpush1.bf16.msra.mxu0 0
        %1830 = vmatprep.subr.bf16.mxu0 0
        %1831 = vmatpush1.bf16.msra.mxu0 0
        %1832 = vmatprep.subr.bf16.mxu0 0
        %1833 = vmatpush1.bf16.msra.mxu0 0
        %1834 = vmatprep.subr.bf16.mxu0 0
        %1835 = vmatpush1.bf16.msra.mxu0 0
        %1836 = vmatprep.subr.bf16.mxu0 0
        %1837 = vmatpush1.bf16.msra.mxu0 0
        %1838 = vmatprep.subr.bf16.mxu0 0
        %1839 = vmatpush1.bf16.msra.mxu0 0
        %1840 = vmatprep.mubr.bf16.mxu0 0
        %1841 = vmatmul.mubr.bf16.gmra.mrb[0].mxu0 %v1806
        %v1842 = vpop.f32.mrb[0].mxu0
        %v1843 = vadd.f32 %v1135, %v1842
        %v1844 = vpop.f32.mrb[0].mxu0
        %v1845 = vpop.f32.mrb[0].mxu0
        %v1846 = vadd.f32 %v1135, %v1845
        %v1847 = vpop.f32.mrb[0].mxu0
        %1848 = vdwg.mxu0
        %v1849 = vpack.c.bf16 %v1799, %v1799
        %v1850 = vpack.c.bf16 %v1846, %v1843
        %v1852 = vsel %vm1191, %v1849, 0
        %v1855 = vsel %vm1191, %v1850, 0
        %1857 = vmatprep.subr.bf16.mxu0 0
        %1858 = vmatpush1.bf16.xpose.msra.mxu0 %v1855
        %1859 = vmatprep.subr.bf16.mxu0 0
        %1860 = vmatpush1.bf16.xpose.msra.mxu0 0
        %1861 = vmatprep.subr.bf16.mxu0 0
        %1862 = vmatpush1.bf16.xpose.msra.mxu0 0
        %1863 = vmatprep.subr.bf16.mxu0 0
        %1864 = vmatpush1.bf16.xpose.msra.mxu0 0
        %1865 = vmatprep.subr.bf16.mxu0 0
        %1866 = vmatpush1.bf16.xpose.msra.mxu0 0
        %1867 = vmatprep.subr.bf16.mxu0 0
        %1868 = vmatpush1.bf16.xpose.msra.mxu0 0
        %1869 = vmatprep.subr.bf16.mxu0 0
        %1870 = vmatpush1.bf16.xpose.msra.mxu0 0
        %1871 = vmatprep.subr.bf16.mxu0 0
        %1872 = vmatpush1.bf16.xpose.msra.mxu0 0
        %1873 = vmatprep.subr.bf16.mxu0 0
        %1874 = vmatpush1.bf16.xpose.msra.mxu0 0
        %1875 = vmatprep.subr.bf16.mxu0 0
        %1876 = vmatpush1.bf16.xpose.msra.mxu0 0
        %1877 = vmatprep.subr.bf16.mxu0 0
        %1878 = vmatpush1.bf16.xpose.msra.mxu0 0
        %1879 = vmatprep.subr.bf16.mxu0 0
        %1880 = vmatpush1.bf16.xpose.msra.mxu0 0
        %1881 = vmatprep.subr.bf16.mxu0 0
        %1882 = vmatpush1.bf16.xpose.msra.mxu0 0
        %1883 = vmatprep.subr.bf16.mxu0 0
        %1884 = vmatpush1.bf16.xpose.msra.mxu0 0
        %1885 = vmatprep.subr.bf16.mxu0 0
        %1886 = vmatpush1.bf16.xpose.msra.mxu0 0
        %1887 = vmatprep.subr.bf16.mxu0 0
        %1888 = vmatpush1.bf16.xpose.msra.mxu0 0
        %1889 = vmatprep.mubr.bf16.mxu0 0
        %1890 = vmatmul.mubr.bf16.gmra.mrb[0].mxu0 %v1852
        %v1891 = vpop.f32.mrb[0].mxu0
        %v1892 = vadd.f32 0.0, %v1891
        %v1893 = vpop.f32.mrb[0].mxu0
        %v1894 = vpop.f32.mrb[0].mxu0
        %v1895 = vpop.f32.mrb[0].mxu0
        %1896 = vdwg.mxu0
        %v1897 = vmul.f32 %v1892, 0.35355338
        %v1898 = vsel %vm1067, -1e+09, %v1897
        %vm1899 = vcmask 130048
        %v1900 = vsel %vm1899, %v1898, -inf
        %1901 = vmax.xlane.f32.xlu0 %v1900
        %v1902 = vpop.xlane.xlu0 %1901
        %v1903 = vsub.f32 %v1898, %v1902
        %v1904 = vmul.f32 %v1903, 1.442695
        %v1905 = vpow.pop %v1904
        %v1906 = vsel %vm1899, %v1905, 0.0
        %1907 = vadd.xlane.f32.xlu0 %v1906
        %v1908 = vpop.xlane.xlu0 %1907
        %v1909 = vrcp.pop %v1908
        %v1910 = vmul.f32 %v1905, %v1909
        %v1911 = vpack.c.bf16 %v1910, %v1910
        %1913 = vrot.lane.b32.xlu0 %v1850, 96
        %v1914 = vpop.permute.xlu0 %1913
        %v1917 = vsel %vm1899, %v1911, 0
        %1919 = vmatprep.subr.bf16.mxu0 0
        %1920 = vmatpush1.bf16.msra.mxu0 %v1914
        %1921 = vmatprep.subr.bf16.mxu0 0
        %1922 = vmatpush1.bf16.msra.mxu0 0
        %1923 = vmatprep.subr.bf16.mxu0 0
        %1924 = vmatpush1.bf16.msra.mxu0 0
        %1925 = vmatprep.subr.bf16.mxu0 0
        %1926 = vmatpush1.bf16.msra.mxu0 0
        %1927 = vmatprep.subr.bf16.mxu0 0
        %1928 = vmatpush1.bf16.msra.mxu0 0
        %1929 = vmatprep.subr.bf16.mxu0 0
        %1930 = vmatpush1.bf16.msra.mxu0 0
        %1931 = vmatprep.subr.bf16.mxu0 0
        %1932 = vmatpush1.bf16.msra.mxu0 0
        %1933 = vmatprep.subr.bf16.mxu0 0
        %1934 = vmatpush1.bf16.msra.mxu0 0
        %1935 = vmatprep.subr.bf16.mxu0 0
        %1936 = vmatpush1.bf16.msra.mxu0 0
        %1937 = vmatprep.subr.bf16.mxu0 0
        %1938 = vmatpush1.bf16.msra.mxu0 0
        %1939 = vmatprep.subr.bf16.mxu0 0
        %1940 = vmatpush1.bf16.msra.mxu0 0
        %1941 = vmatprep.subr.bf16.mxu0 0
        %1942 = vmatpush1.bf16.msra.mxu0 0
        %1943 = vmatprep.subr.bf16.mxu0 0
        %1944 = vmatpush1.bf16.msra.mxu0 0
        %1945 = vmatprep.subr.bf16.mxu0 0
        %1946 = vmatpush1.bf16.msra.mxu0 0
        %1947 = vmatprep.subr.bf16.mxu0 0
        %1948 = vmatpush1.bf16.msra.mxu0 0
        %1949 = vmatprep.subr.bf16.mxu0 0
        %1950 = vmatpush1.bf16.msra.mxu0 0
        %1951 = vmatprep.mubr.bf16.mxu0 0
        %1952 = vmatmul.mubr.bf16.gmra.mrb[0].mxu0 %v1917
        %v1953 = vpop.f32.mrb[0].mxu0
        %v1954 = vadd.f32 0.0, %v1953
        %v1955 = vpop.f32.mrb[0].mxu0
        %v1956 = vpop.f32.mrb[0].mxu0
        %v1957 = vpop.f32.mrb[0].mxu0
        %1958 = vdwg.mxu0
        %v1959 = vpack.c.bf16 %v1954, %v1954
        %1960 = vst.msk [vmem:[#allocation3] sm:$0xf] %vm1303, %v1959
        %1962 = vrot.lane.b32.xlu0 %v1849, 120
        %v1963 = vpop.permute.xlu0 %1962
        %1964 = vrot.lane.b32.xlu0 %v1850, 120
        %v1965 = vpop.permute.xlu0 %1964
        %v1967 = vsel %vm1191, %v1963, 0
        %v1970 = vsel %vm1191, %v1965, 0
        %1972 = vmatprep.subr.bf16.mxu0 0
        %1973 = vmatpush1.bf16.xpose.msra.mxu0 %v1970
        %1974 = vmatprep.subr.bf16.mxu0 0
        %1975 = vmatpush1.bf16.xpose.msra.mxu0 0
        %1976 = vmatprep.subr.bf16.mxu0 0
        %1977 = vmatpush1.bf16.xpose.msra.mxu0 0
        %1978 = vmatprep.subr.bf16.mxu0 0
        %1979 = vmatpush1.bf16.xpose.msra.mxu0 0
        %1980 = vmatprep.subr.bf16.mxu0 0
        %1981 = vmatpush1.bf16.xpose.msra.mxu0 0
        %1982 = vmatprep.subr.bf16.mxu0 0
        %1983 = vmatpush1.bf16.xpose.msra.mxu0 0
        %1984 = vmatprep.subr.bf16.mxu0 0
        %1985 = vmatpush1.bf16.xpose.msra.mxu0 0
        %1986 = vmatprep.subr.bf16.mxu0 0
        %1987 = vmatpush1.bf16.xpose.msra.mxu0 0
        %1988 = vmatprep.subr.bf16.mxu0 0
        %1989 = vmatpush1.bf16.xpose.msra.mxu0 0
        %1990 = vmatprep.subr.bf16.mxu0 0
        %1991 = vmatpush1.bf16.xpose.msra.mxu0 0
        %1992 = vmatprep.subr.bf16.mxu0 0
        %1993 = vmatpush1.bf16.xpose.msra.mxu0 0
        %1994 = vmatprep.subr.bf16.mxu0 0
        %1995 = vmatpush1.bf16.xpose.msra.mxu0 0
        %1996 = vmatprep.subr.bf16.mxu0 0
        %1997 = vmatpush1.bf16.xpose.msra.mxu0 0
        %1998 = vmatprep.subr.bf16.mxu0 0
        %1999 = vmatpush1.bf16.xpose.msra.mxu0 0
        %2000 = vmatprep.subr.bf16.mxu0 0
        %2001 = vmatpush1.bf16.xpose.msra.mxu0 0
        %2002 = vmatprep.subr.bf16.mxu0 0
        %2003 = vmatpush1.bf16.xpose.msra.mxu0 0
        %2004 = vmatprep.mubr.bf16.mxu0 0
        %2005 = vmatmul.mubr.bf16.gmra.mrb[0].mxu0 %v1967
        %v2006 = vpop.f32.mrb[0].mxu0
        %v2007 = vadd.f32 0.0, %v2006
        %v2008 = vpop.f32.mrb[0].mxu0
        %v2009 = vpop.f32.mrb[0].mxu0
        %v2010 = vpop.f32.mrb[0].mxu0
        %2011 = vdwg.mxu0
        %v2012 = vmul.f32 %v2007, 0.35355338
        %v2013 = vsel %vm1067, -1e+09, %v2012
        %v2014 = vsel %vm1899, %v2013, -inf
        %2015 = vmax.xlane.f32.xlu0 %v2014
        %v2016 = vpop.xlane.xlu0 %2015
        %v2017 = vsub.f32 %v2013, %v2016
        %v2018 = vmul.f32 %v2017, 1.442695
        %v2019 = vpow.pop %v2018
        %v2020 = vsel %vm1899, %v2019, 0.0
        %2021 = vadd.xlane.f32.xlu0 %v2020
        %v2022 = vpop.xlane.xlu0 %2021
        %v2023 = vrcp.pop %v2022
        %v2024 = vmul.f32 %v2019, %v2023
        %v2025 = vpack.c.bf16 %v2024, %v2024
        %2026 = vrot.lane.b32.xlu0 %v1850, 88
        %v2027 = vpop.permute.xlu0 %2026
        %v2030 = vsel %vm1899, %v2025, 0
        %2032 = vmatprep.subr.bf16.mxu0 0
        %2033 = vmatpush1.bf16.msra.mxu0 %v2027
        %2034 = vmatprep.subr.bf16.mxu0 0
        %2035 = vmatpush1.bf16.msra.mxu0 0
        %2036 = vmatprep.subr.bf16.mxu0 0
        %2037 = vmatpush1.bf16.msra.mxu0 0
        %2038 = vmatprep.subr.bf16.mxu0 0
        %2039 = vmatpush1.bf16.msra.mxu0 0
        %2040 = vmatprep.subr.bf16.mxu0 0
        %2041 = vmatpush1.bf16.msra.mxu0 0
        %2042 = vmatprep.subr.bf16.mxu0 0
        %2043 = vmatpush1.bf16.msra.mxu0 0
        %2044 = vmatprep.subr.bf16.mxu0 0
        %2045 = vmatpush1.bf16.msra.mxu0 0
        %2046 = vmatprep.subr.bf16.mxu0 0
        %2047 = vmatpush1.bf16.msra.mxu0 0
        %2048 = vmatprep.subr.bf16.mxu0 0
        %2049 = vmatpush1.bf16.msra.mxu0 0
        %2050 = vmatprep.subr.bf16.mxu0 0
        %2051 = vmatpush1.bf16.msra.mxu0 0
        %2052 = vmatprep.subr.bf16.mxu0 0
        %2053 = vmatpush1.bf16.msra.mxu0 0
        %2054 = vmatprep.subr.bf16.mxu0 0
        %2055 = vmatpush1.bf16.msra.mxu0 0
        %2056 = vmatprep.subr.bf16.mxu0 0
        %2057 = vmatpush1.bf16.msra.mxu0 0
        %2058 = vmatprep.subr.bf16.mxu0 0
        %2059 = vmatpush1.bf16.msra.mxu0 0
        %2060 = vmatprep.subr.bf16.mxu0 0
        %2061 = vmatpush1.bf16.msra.mxu0 0
        %2062 = vmatprep.subr.bf16.mxu0 0
        %2063 = vmatpush1.bf16.msra.mxu0 0
        %2064 = vmatprep.mubr.bf16.mxu0 0
        %2065 = vmatmul.mubr.bf16.gmra.mrb[0].mxu0 %v2030
        %v2066 = vpop.f32.mrb[0].mxu0
        %v2067 = vadd.f32 0.0, %v2066
        %v2068 = vpop.f32.mrb[0].mxu0
        %v2069 = vpop.f32.mrb[0].mxu0
        %v2070 = vpop.f32.mrb[0].mxu0
        %2071 = vdwg.mxu0
        %v2072 = vpack.c.bf16 %v2067, %v2067
        %v2074 = vunpack.c.l.b16 %v2072
        %v2075 = vpack.c.b16 %v2074, %v2074
        %2076 = vrot.lane.b32.xlu0 %v2075, 8
        %v2077 = vpop.permute.xlu0 %2076
        %2079 = vst.msk [vmem:[#allocation3] sm:$0xf] %vm1425, %v2077
        %2080 = vrot.lane.b32.xlu0 %v1849, 112
        %v2081 = vpop.permute.xlu0 %2080
        %2082 = vrot.lane.b32.xlu0 %v1850, 112
        %v2083 = vpop.permute.xlu0 %2082
        %v2085 = vsel %vm1191, %v2081, 0
        %v2088 = vsel %vm1191, %v2083, 0
        %2090 = vmatprep.subr.bf16.mxu0 0
        %2091 = vmatpush1.bf16.xpose.msra.mxu0 %v2088
        %2092 = vmatprep.subr.bf16.mxu0 0
        %2093 = vmatpush1.bf16.xpose.msra.mxu0 0
        %2094 = vmatprep.subr.bf16.mxu0 0
        %2095 = vmatpush1.bf16.xpose.msra.mxu0 0
        %2096 = vmatprep.subr.bf16.mxu0 0
        %2097 = vmatpush1.bf16.xpose.msra.mxu0 0
        %2098 = vmatprep.subr.bf16.mxu0 0
        %2099 = vmatpush1.bf16.xpose.msra.mxu0 0
        %2100 = vmatprep.subr.bf16.mxu0 0
        %2101 = vmatpush1.bf16.xpose.msra.mxu0 0
        %2102 = vmatprep.subr.bf16.mxu0 0
        %2103 = vmatpush1.bf16.xpose.msra.mxu0 0
        %2104 = vmatprep.subr.bf16.mxu0 0
        %2105 = vmatpush1.bf16.xpose.msra.mxu0 0
        %2106 = vmatprep.subr.bf16.mxu0 0
        %2107 = vmatpush1.bf16.xpose.msra.mxu0 0
        %2108 = vmatprep.subr.bf16.mxu0 0
        %2109 = vmatpush1.bf16.xpose.msra.mxu0 0
        %2110 = vmatprep.subr.bf16.mxu0 0
        %2111 = vmatpush1.bf16.xpose.msra.mxu0 0
        %2112 = vmatprep.subr.bf16.mxu0 0
        %2113 = vmatpush1.bf16.xpose.msra.mxu0 0
        %2114 = vmatprep.subr.bf16.mxu0 0
        %2115 = vmatpush1.bf16.xpose.msra.mxu0 0
        %2116 = vmatprep.subr.bf16.mxu0 0
        %2117 = vmatpush1.bf16.xpose.msra.mxu0 0
        %2118 = vmatprep.subr.bf16.mxu0 0
        %2119 = vmatpush1.bf16.xpose.msra.mxu0 0
        %2120 = vmatprep.subr.bf16.mxu0 0
        %2121 = vmatpush1.bf16.xpose.msra.mxu0 0
        %2122 = vmatprep.mubr.bf16.mxu0 0
        %2123 = vmatmul.mubr.bf16.gmra.mrb[0].mxu0 %v2085
        %v2124 = vpop.f32.mrb[0].mxu0
        %v2125 = vadd.f32 0.0, %v2124
        %v2126 = vpop.f32.mrb[0].mxu0
        %v2127 = vpop.f32.mrb[0].mxu0
        %v2128 = vpop.f32.mrb[0].mxu0
        %2129 = vdwg.mxu0
        %v2130 = vmul.f32 %v2125, 0.35355338
        %v2131 = vsel %vm1067, -1e+09, %v2130
        %v2132 = vsel %vm1899, %v2131, -inf
        %2133 = vmax.xlane.f32.xlu0 %v2132
        %v2134 = vpop.xlane.xlu0 %2133
        %v2135 = vsub.f32 %v2131, %v2134
        %v2136 = vmul.f32 %v2135, 1.442695
        %v2137 = vpow.pop %v2136
        %v2138 = vsel %vm1899, %v2137, 0.0
        %2139 = vadd.xlane.f32.xlu0 %v2138
        %v2140 = vpop.xlane.xlu0 %2139
        %v2141 = vrcp.pop %v2140
        %v2142 = vmul.f32 %v2137, %v2141
        %v2143 = vpack.c.bf16 %v2142, %v2142
        %2144 = vrot.lane.b32.xlu0 %v1850, 80
        %v2145 = vpop.permute.xlu0 %2144
        %v2148 = vsel %vm1899, %v2143, 0
        %2150 = vmatprep.subr.bf16.mxu0 0
        %2151 = vmatpush1.bf16.msra.mxu0 %v2145
        %2152 = vmatprep.subr.bf16.mxu0 0
        %2153 = vmatpush1.bf16.msra.mxu0 0
        %2154 = vmatprep.subr.bf16.mxu0 0
        %2155 = vmatpush1.bf16.msra.mxu0 0
        %2156 = vmatprep.subr.bf16.mxu0 0
        %2157 = vmatpush1.bf16.msra.mxu0 0
        %2158 = vmatprep.subr.bf16.mxu0 0
        %2159 = vmatpush1.bf16.msra.mxu0 0
        %2160 = vmatprep.subr.bf16.mxu0 0
        %2161 = vmatpush1.bf16.msra.mxu0 0
        %2162 = vmatprep.subr.bf16.mxu0 0
        %2163 = vmatpush1.bf16.msra.mxu0 0
        %2164 = vmatprep.subr.bf16.mxu0 0
        %2165 = vmatpush1.bf16.msra.mxu0 0
        %2166 = vmatprep.subr.bf16.mxu0 0
        %2167 = vmatpush1.bf16.msra.mxu0 0
        %2168 = vmatprep.subr.bf16.mxu0 0
        %2169 = vmatpush1.bf16.msra.mxu0 0
        %2170 = vmatprep.subr.bf16.mxu0 0
        %2171 = vmatpush1.bf16.msra.mxu0 0
        %2172 = vmatprep.subr.bf16.mxu0 0
        %2173 = vmatpush1.bf16.msra.mxu0 0
        %2174 = vmatprep.subr.bf16.mxu0 0
        %2175 = vmatpush1.bf16.msra.mxu0 0
        %2176 = vmatprep.subr.bf16.mxu0 0
        %2177 = vmatpush1.bf16.msra.mxu0 0
        %2178 = vmatprep.subr.bf16.mxu0 0
        %2179 = vmatpush1.bf16.msra.mxu0 0
        %2180 = vmatprep.subr.bf16.mxu0 0
        %2181 = vmatpush1.bf16.msra.mxu0 0
        %2182 = vmatprep.mubr.bf16.mxu0 0
        %2183 = vmatmul.mubr.bf16.gmra.mrb[0].mxu0 %v2148
        %v2184 = vpop.f32.mrb[0].mxu0
        %v2185 = vadd.f32 0.0, %v2184
        %v2186 = vpop.f32.mrb[0].mxu0
        %v2187 = vpop.f32.mrb[0].mxu0
        %v2188 = vpop.f32.mrb[0].mxu0
        %2189 = vdwg.mxu0
        %v2190 = vpack.c.bf16 %v2185, %v2185
        %v2192 = vunpack.c.l.b16 %v2190
        %v2193 = vpack.c.b16 %v2192, %v2192
        %2194 = vrot.lane.b32.xlu0 %v2193, 16
        %v2195 = vpop.permute.xlu0 %2194
        %2197 = vst.msk [vmem:[#allocation3] sm:$0xf] %vm1546, %v2195
        %2198 = vrot.lane.b32.xlu0 %v1849, 104
        %v2199 = vpop.permute.xlu0 %2198
        %2200 = vrot.lane.b32.xlu0 %v1850, 104
        %v2201 = vpop.permute.xlu0 %2200
        %v2203 = vsel %vm1191, %v2199, 0
        %v2206 = vsel %vm1191, %v2201, 0
        %2208 = vmatprep.subr.bf16.mxu0 0
        %2209 = vmatpush1.bf16.xpose.msra.mxu0 %v2206
        %2210 = vmatprep.subr.bf16.mxu0 0
        %2211 = vmatpush1.bf16.xpose.msra.mxu0 0
        %2212 = vmatprep.subr.bf16.mxu0 0
        %2213 = vmatpush1.bf16.xpose.msra.mxu0 0
        %2214 = vmatprep.subr.bf16.mxu0 0
        %2215 = vmatpush1.bf16.xpose.msra.mxu0 0
        %2216 = vmatprep.subr.bf16.mxu0 0
        %2217 = vmatpush1.bf16.xpose.msra.mxu0 0
        %2218 = vmatprep.subr.bf16.mxu0 0
        %2219 = vmatpush1.bf16.xpose.msra.mxu0 0
        %2220 = vmatprep.subr.bf16.mxu0 0
        %2221 = vmatpush1.bf16.xpose.msra.mxu0 0
        %2222 = vmatprep.subr.bf16.mxu0 0
        %2223 = vmatpush1.bf16.xpose.msra.mxu0 0
        %2224 = vmatprep.subr.bf16.mxu0 0
        %2225 = vmatpush1.bf16.xpose.msra.mxu0 0
        %2226 = vmatprep.subr.bf16.mxu0 0
        %2227 = vmatpush1.bf16.xpose.msra.mxu0 0
        %2228 = vmatprep.subr.bf16.mxu0 0
        %2229 = vmatpush1.bf16.xpose.msra.mxu0 0
        %2230 = vmatprep.subr.bf16.mxu0 0
        %2231 = vmatpush1.bf16.xpose.msra.mxu0 0
        %2232 = vmatprep.subr.bf16.mxu0 0
        %2233 = vmatpush1.bf16.xpose.msra.mxu0 0
        %2234 = vmatprep.subr.bf16.mxu0 0
        %2235 = vmatpush1.bf16.xpose.msra.mxu0 0
        %2236 = vmatprep.subr.bf16.mxu0 0
        %2237 = vmatpush1.bf16.xpose.msra.mxu0 0
        %2238 = vmatprep.subr.bf16.mxu0 0
        %2239 = vmatpush1.bf16.xpose.msra.mxu0 0
        %2240 = vmatprep.mubr.bf16.mxu0 0
        %2241 = vmatmul.mubr.bf16.gmra.mrb[0].mxu0 %v2203
        %v2242 = vpop.f32.mrb[0].mxu0
        %v2243 = vadd.f32 0.0, %v2242
        %v2244 = vpop.f32.mrb[0].mxu0
        %v2245 = vpop.f32.mrb[0].mxu0
        %v2246 = vpop.f32.mrb[0].mxu0
        %2247 = vdwg.mxu0
        %v2248 = vmul.f32 %v2243, 0.35355338
        %v2249 = vsel %vm1067, -1e+09, %v2248
        %v2250 = vsel %vm1899, %v2249, -inf
        %2251 = vmax.xlane.f32.xlu0 %v2250
        %v2252 = vpop.xlane.xlu0 %2251
        %v2253 = vsub.f32 %v2249, %v2252
        %v2254 = vmul.f32 %v2253, 1.442695
        %v2255 = vpow.pop %v2254
        %v2256 = vsel %vm1899, %v2255, 0.0
        %2257 = vadd.xlane.f32.xlu0 %v2256
        %v2258 = vpop.xlane.xlu0 %2257
        %v2259 = vrcp.pop %v2258
        %v2260 = vmul.f32 %v2255, %v2259
        %v2261 = vpack.c.bf16 %v2260, %v2260
        %2262 = vrot.lane.b32.xlu0 %v1850, 72
        %v2263 = vpop.permute.xlu0 %2262
        %v2266 = vsel %vm1899, %v2261, 0
        %2268 = vmatprep.subr.bf16.mxu0 0
        %2269 = vmatpush1.bf16.msra.mxu0 %v2263
        %2270 = vmatprep.subr.bf16.mxu0 0
        %2271 = vmatpush1.bf16.msra.mxu0 0
        %2272 = vmatprep.subr.bf16.mxu0 0
        %2273 = vmatpush1.bf16.msra.mxu0 0
        %2274 = vmatprep.subr.bf16.mxu0 0
        %2275 = vmatpush1.bf16.msra.mxu0 0
        %2276 = vmatprep.subr.bf16.mxu0 0
        %2277 = vmatpush1.bf16.msra.mxu0 0
        %2278 = vmatprep.subr.bf16.mxu0 0
        %2279 = vmatpush1.bf16.msra.mxu0 0
        %2280 = vmatprep.subr.bf16.mxu0 0
        %2281 = vmatpush1.bf16.msra.mxu0 0
        %2282 = vmatprep.subr.bf16.mxu0 0
        %2283 = vmatpush1.bf16.msra.mxu0 0
        %2284 = vmatprep.subr.bf16.mxu0 0
        %2285 = vmatpush1.bf16.msra.mxu0 0
        %2286 = vmatprep.subr.bf16.mxu0 0
        %2287 = vmatpush1.bf16.msra.mxu0 0
        %2288 = vmatprep.subr.bf16.mxu0 0
        %2289 = vmatpush1.bf16.msra.mxu0 0
        %2290 = vmatprep.subr.bf16.mxu0 0
        %2291 = vmatpush1.bf16.msra.mxu0 0
        %2292 = vmatprep.subr.bf16.mxu0 0
        %2293 = vmatpush1.bf16.msra.mxu0 0
        %2294 = vmatprep.subr.bf16.mxu0 0
        %2295 = vmatpush1.bf16.msra.mxu0 0
        %2296 = vmatprep.subr.bf16.mxu0 0
        %2297 = vmatpush1.bf16.msra.mxu0 0
        %2298 = vmatprep.subr.bf16.mxu0 0
        %2299 = vmatpush1.bf16.msra.mxu0 0
        %2300 = vmatprep.mubr.bf16.mxu0 0
        %2301 = vmatmul.mubr.bf16.gmra.mrb[0].mxu0 %v2266
        %v2302 = vpop.f32.mrb[0].mxu0
        %v2303 = vadd.f32 0.0, %v2302
        %v2304 = vpop.f32.mrb[0].mxu0
        %v2305 = vpop.f32.mrb[0].mxu0
        %v2306 = vpop.f32.mrb[0].mxu0
        %2307 = vdwg.mxu0
        %v2308 = vpack.c.bf16 %v2303, %v2303
        %v2310 = vunpack.c.l.b16 %v2308
        %v2311 = vpack.c.b16 %v2310, %v2310
        %2312 = vrot.lane.b32.xlu0 %v2311, 24
        %v2313 = vpop.permute.xlu0 %2312
        %2315 = vst.msk [vmem:[#allocation3] sm:$0xf] %vm1667, %v2313
        %v2316 = vld [vmem:[#allocation3] sm:$0xf]
        %v2318 = vsel %vm1087, %v2316, 0
        %2320 = vmatprep.subr.bf16.mxu0 0
        %2321 = vmatpush1.bf16.msra.mxu0 %v1684
        %2322 = vmatprep.subr.bf16.mxu0 0
        %2323 = vmatpush1.bf16.msra.mxu0 %v1685
        %2324 = vmatprep.subr.bf16.mxu0 0
        %2325 = vmatpush1.bf16.msra.mxu0 0
        %2326 = vmatprep.subr.bf16.mxu0 0
        %2327 = vmatpush1.bf16.msra.mxu0 0
        %2328 = vmatprep.subr.bf16.mxu0 0
        %2329 = vmatpush1.bf16.msra.mxu0 0
        %2330 = vmatprep.subr.bf16.mxu0 0
        %2331 = vmatpush1.bf16.msra.mxu0 0
        %2332 = vmatprep.subr.bf16.mxu0 0
        %2333 = vmatpush1.bf16.msra.mxu0 0
        %2334 = vmatprep.subr.bf16.mxu0 0
        %2335 = vmatpush1.bf16.msra.mxu0 0
        %2336 = vmatprep.subr.bf16.mxu0 0
        %2337 = vmatpush1.bf16.msra.mxu0 0
        %2338 = vmatprep.subr.bf16.mxu0 0
        %2339 = vmatpush1.bf16.msra.mxu0 0
        %2340 = vmatprep.subr.bf16.mxu0 0
        %2341 = vmatpush1.bf16.msra.mxu0 0
        %2342 = vmatprep.subr.bf16.mxu0 0
        %2343 = vmatpush1.bf16.msra.mxu0 0
        %2344 = vmatprep.subr.bf16.mxu0 0
        %2345 = vmatpush1.bf16.msra.mxu0 0
        %2346 = vmatprep.subr.bf16.mxu0 0
        %2347 = vmatpush1.bf16.msra.mxu0 0
        %2348 = vmatprep.subr.bf16.mxu0 0
        %2349 = vmatpush1.bf16.msra.mxu0 0
        %2350 = vmatprep.subr.bf16.mxu0 0
        %2351 = vmatpush1.bf16.msra.mxu0 0
        %2352 = vmatprep.mubr.bf16.mxu0 0
        %2353 = vmatmul.mubr.bf16.gmra.mrb[0].mxu0 %v2318
        %v2354 = vpop.f32.mrb[0].mxu0
        %v2355 = vadd.f32 %v1674, %v2354
        %v2356 = vpop.f32.mrb[0].mxu0
        %v2357 = vpop.f32.mrb[0].mxu0
        %v2358 = vpop.f32.mrb[0].mxu0
        %2359 = vdwg.mxu0
        %v2360 = vadd.f32 %v1759, %v2355
        %v2361 = vsel %vm1087, %v2360, 0.0
        %2362 = vadd.xlane.f32.xlu0 %v2361
        %v2363 = vpop.xlane.xlu0 %2362
        %v2364 = vmul.f32 %v2363, %v1735
        %v2365 = vsub.f32 %v2360, %v2364
        %v2366 = vmul.f32 %v2365, %v2365
        %v2367 = vsel %vm1087, %v2366, 0.0
        %2368 = vadd.xlane.f32.xlu0 %v2367
        %v2369 = vpop.xlane.xlu0 %2368
        %v2370 = vmul.f32 %v2369, %v1735
        %v2371 = vadd.f32 %v2370, 1e-05
        %v2372 = vrsqrt.pop %v2371
        %v2373 = vmul.f32 %v2365, %v2372
        %v2374 = vmul.f32 %v2373, %v1750
        %v2375 = vadd.f32 %v2374, %v1757
        %v2376 = vpack.c.bf16 %v2375, %v2375
        %v2378 = vlaneseq
        %v2379 = vshrl.u32 %v2378, 7
        %v2380 = vsub.s32 0, %v2379
        %v2381 = vrot.slane %v1045, %v2380
        %v2387 = vunpack.c.l.b16 %v1041
        %v2388 = vunpack.c.l.b16 %v1042
        %v2389 = vunpack.c.l.b16 %v1043
        %v2390 = vunpack.c.l.b16 %v1044
        %v2391 = vpack.c.b16 %v2388, %v2387
        %v2392 = vpack.c.b16 %v2390, %v2389
        %v2396 = vsel %vm1087, %v2376, 0
        %2398 = vmatprep.subr.bf16.mxu0 0
        %2399 = vmatpush1.bf16.msra.mxu0 %v2391
        %2400 = vmatprep.subr.bf16.mxu0 0
        %2401 = vmatpush1.bf16.msra.mxu0 %v2392
        %2402 = vmatprep.subr.bf16.mxu0 0
        %2403 = vmatpush1.bf16.msra.mxu0 0
        %2404 = vmatprep.subr.bf16.mxu0 0
        %2405 = vmatpush1.bf16.msra.mxu0 0
        %2406 = vmatprep.subr.bf16.mxu0 0
        %2407 = vmatpush1.bf16.msra.mxu0 0
        %2408 = vmatprep.subr.bf16.mxu0 0
        %2409 = vmatpush1.bf16.msra.mxu0 0
        %2410 = vmatprep.subr.bf16.mxu0 0
        %2411 = vmatpush1.bf16.msra.mxu0 0
        %2412 = vmatprep.subr.bf16.mxu0 0
        %2413 = vmatpush1.bf16.msra.mxu0 0
        %2414 = vmatprep.subr.bf16.mxu0 0
        %2415 = vmatpush1.bf16.msra.mxu0 0
        %2416 = vmatprep.subr.bf16.mxu0 0
        %2417 = vmatpush1.bf16.msra.mxu0 0
        %2418 = vmatprep.subr.bf16.mxu0 0
        %2419 = vmatpush1.bf16.msra.mxu0 0
        %2420 = vmatprep.subr.bf16.mxu0 0
        %2421 = vmatpush1.bf16.msra.mxu0 0
        %2422 = vmatprep.subr.bf16.mxu0 0
        %2423 = vmatpush1.bf16.msra.mxu0 0
        %2424 = vmatprep.subr.bf16.mxu0 0
        %2425 = vmatpush1.bf16.msra.mxu0 0
        %2426 = vmatprep.subr.bf16.mxu0 0
        %2427 = vmatpush1.bf16.msra.mxu0 0
        %2428 = vmatprep.subr.bf16.mxu0 0
        %2429 = vmatpush1.bf16.msra.mxu0 0
        %2430 = vmatprep.mubr.bf16.mxu0 0
        %2431 = vmatmul.mubr.bf16.gmra.mrb[0].mxu0 %v2396
        %v2432 = vpop.f32.mrb[0].mxu0
        %v2433 = vadd.f32 %v2381, %v2432
        %v2434 = vpop.f32.mrb[0].mxu0
        %v2435 = vpop.f32.mrb[0].mxu0
        %v2436 = vpop.f32.mrb[0].mxu0
        %2437 = vdwg.mxu0
        %v2438 = vmax.f32 %v2433, 0.0
        %v2439 = vpack.c.bf16 %v2438, %v2438
        %v2441 = vlaneseq
        %v2442 = vshrl.u32 %v2441, 7
        %v2443 = vsub.s32 0, %v2442
        %v2444 = vrot.slane %v1054, %v2443
        %v2454 = vunpack.c.l.b16 %v1046
        %v2455 = vunpack.c.l.b16 %v1047
        %v2456 = vunpack.c.l.b16 %v1048
        %v2457 = vunpack.c.l.b16 %v1049
        %v2458 = vunpack.c.l.b16 %v1050
        %v2459 = vunpack.c.l.b16 %v1051
        %v2460 = vunpack.c.l.b16 %v1052
        %v2461 = vunpack.c.l.b16 %v1053
        %v2462 = vpack.c.b16 %v2455, %v2454
        %v2463 = vpack.c.b16 %v2457, %v2456
        %v2464 = vpack.c.b16 %v2459, %v2458
        %v2465 = vpack.c.b16 %v2461, %v2460
        %vm2470 = vcmask 523264
        %v2472 = vsel %vm2470, %v2439, 0
        %2474 = vmatprep.subr.bf16.mxu0 0
        %2475 = vmatpush1.bf16.msra.mxu0 %v2462
        %2476 = vmatprep.subr.bf16.mxu0 0
        %2477 = vmatpush1.bf16.msra.mxu0 %v2463
        %2478 = vmatprep.subr.bf16.mxu0 0
        %2479 = vmatpush1.bf16.msra.mxu0 %v2464
        %2480 = vmatprep.subr.bf16.mxu0 0
        %2481 = vmatpush1.bf16.msra.mxu0 %v2465
        %2482 = vmatprep.subr.bf16.mxu0 0
        %2483 = vmatpush1.bf16.msra.mxu0 0
        %2484 = vmatprep.subr.bf16.mxu0 0
        %2485 = vmatpush1.bf16.msra.mxu0 0
        %2486 = vmatprep.subr.bf16.mxu0 0
        %2487 = vmatpush1.bf16.msra.mxu0 0
        %2488 = vmatprep.subr.bf16.mxu0 0
        %2489 = vmatpush1.bf16.msra.mxu0 0
        %2490 = vmatprep.subr.bf16.mxu0 0
        %2491 = vmatpush1.bf16.msra.mxu0 0
        %2492 = vmatprep.subr.bf16.mxu0 0
        %2493 = vmatpush1.bf16.msra.mxu0 0
        %2494 = vmatprep.subr.bf16.mxu0 0
        %2495 = vmatpush1.bf16.msra.mxu0 0
        %2496 = vmatprep.subr.bf16.mxu0 0
        %2497 = vmatpush1.bf16.msra.mxu0 0
        %2498 = vmatprep.subr.bf16.mxu0 0
        %2499 = vmatpush1.bf16.msra.mxu0 0
        %2500 = vmatprep.subr.bf16.mxu0 0
        %2501 = vmatpush1.bf16.msra.mxu0 0
        %2502 = vmatprep.subr.bf16.mxu0 0
        %2503 = vmatpush1.bf16.msra.mxu0 0
        %2504 = vmatprep.subr.bf16.mxu0 0
        %2505 = vmatpush1.bf16.msra.mxu0 0
        %2506 = vmatprep.mubr.bf16.mxu0 0
        %2507 = vmatmul.mubr.bf16.gmra.mrb[0].mxu0 %v2472
        %v2508 = vpop.f32.mrb[0].mxu0
        %v2509 = vadd.f32 %v2444, %v2508
        %v2510 = vpop.f32.mrb[0].mxu0
        %v2511 = vpop.f32.mrb[0].mxu0
        %v2512 = vpop.f32.mrb[0].mxu0
        %2513 = vdwg.mxu0
        %v2514 = vadd.f32 %v2375, %v2509
        %v2515 = vsel %vm1087, %v2514, 0.0
        %2516 = vadd.xlane.f32.xlu0 %v2515
        %v2517 = vpop.xlane.xlu0 %2516
        %v2518 = vmul.f32 %v2517, %v1735
        %v2519 = vsub.f32 %v2514, %v2518
        %v2520 = vmul.f32 %v2519, %v2519
        %v2521 = vsel %vm1087, %v2520, 0.0
        %2522 = vadd.xlane.f32.xlu0 %v2521
        %v2523 = vpop.xlane.xlu0 %2522
        %v2524 = vmul.f32 %v2523, %v1735
        %v2525 = vadd.f32 %v2524, 1e-05
        %v2526 = vrsqrt.pop %v2525
        %v2527 = vmul.f32 %v2519, %v2526
        %v2528 = vmul.f32 %v2527, %v1750
        %v2529 = vadd.f32 %v2528, %v1757
        %2530 = vst.msk [vmem:[#allocation2] sm:$0xff] %vm1087, %v2529
        %p2531 = scmp.eq.s32.totalorder %s58, 1
        // Predicated region
        $region145: #{tpu_custom_call.1} parent=79 // pred_check
          %p2532 = pneg %p2531
        $region146: #{tpu_custom_call.1} parent=79 // pred_check_branch
          %2534 = sbr.rel (%p2532) target = $region148
        $region147: #{tpu_custom_call.1} parent=79 // pred_region
          %v2535 = vpack.c.bf16 %v2529, %v2529
          %vm2536 = vcmask 257024
          %2537 = vst.msk [vmem:[%s1012] sm:$0xf] %vm2536, %v2535
        $region148: #{tpu_custom_call.1} parent=79 // pred_fallthru
          _
        %s2538 = sand.u32 %s463, 1
        %s2539 = scalar_lea.sflag [#allocation6], %s2538
        %s2540 = sand.u32 %s463, 1
        %s2541 = smul.addr %s2540, 4
        %s2542 = scalar_lea.vmem [#allocation28], %s2541
        // Predicated region
        $region149: #{tpu_custom_call.1} parent=79 // pred_check
          %p2543 = pneg %p473
        $region150: #{tpu_custom_call.1} parent=79 // pred_check_branch
          %2545 = sbr.rel (%p2543) target = $region152
        $region151: #{tpu_custom_call.1} parent=79 // pred_region
          %s2547 = ssub.s32 64, 64
          %2548 = vsyncadd %s2539, %s2547
          %s2549 = smul.addr %s57, 64
          %s2550 = scalar_lea.hbm %s15, %s2549
          %s2552 = sshll.u32 %s2542, 4
          %s2553 = int_to_ptr.vmem [resolvable:$true] %s2552
          %2555 = dma.vmem_to_hbm [thread:$0]  %s2553, 64, %s2550, %s2539
        $region152: #{tpu_custom_call.1} parent=79 // pred_fallthru
          _
      $region80: #{tpu_custom_call.1} parent=5 // pred_fallthru
        _
      %p2556 = scmp.le.s32.totalorder 2, %s48
      // Predicated region
      $region153: #{tpu_custom_call.1} parent=5 // pred_check
        %p2557 = pneg %p2556
      $region154: #{tpu_custom_call.1} parent=5 // pred_check_branch
        %2559 = sbr.rel (%p2557) target = $region156
      $region155: #{tpu_custom_call.1} parent=5 // pred_region
        %s2560 = ssub.s32 %s48, 2
        // Predicated region
        $region157: #{tpu_custom_call.1} parent=155 // pred_check
          %p2561 = pneg %p479
        $region158: #{tpu_custom_call.1} parent=155 // pred_check_branch
          %2563 = sbr.rel (%p2561) target = $region160
        $region159: #{tpu_custom_call.1} parent=155 // pred_region
          %s2564 = sand.u32 %s464, 1
          %s2565 = scalar_lea.sflag [#allocation6], %s2564
          %s2566 = sand.u32 %s464, 1
          %s2567 = smul.addr %s2566, 4
          %s2568 = scalar_lea.vmem [#allocation28], %s2567
          %2569 = dma.done %s2565, 64
        $region160: #{tpu_custom_call.1} parent=155 // pred_fallthru
          _
      $region156: #{tpu_custom_call.1} parent=5 // pred_fallthru
        _
    $region6: #{tpu_custom_call.1} parent=1 // loop_footer
      %s52 = sadd.s32 1, %s48
    $region7: #{tpu_custom_call.1} parent=1 // loop_footer_branch
      %47 = sbr.rel target = $region3
    $region8: #{tpu_custom_call.1} parent=1 // loop_exit
      _
    %2570 = vsyncpa [#allocation5], 1
    %s2571 = scalar_lea.sflag [#allocation5], 1
    %2572 = vsyncpa %s2571, 1
    %2573 = vsyncpa [#allocation8], 1
    %s2574 = scalar_lea.sflag [#allocation8], 1
    %2575 = vsyncpa %s2574, 1
    %2576 = vsyncpa [#allocation11], 1
    %s2577 = scalar_lea.sflag [#allocation11], 1
    %2578 = vsyncpa %s2577, 1
    %2579 = vsyncpa [#allocation14], 1
    %s2580 = scalar_lea.sflag [#allocation14], 1
    %2581 = vsyncpa %s2580, 1
    %2582 = vsyncpa [#allocation17], 1
    %s2583 = scalar_lea.sflag [#allocation17], 1
    %2584 = vsyncpa %s2583, 1
    %2585 = vsyncpa [#allocation20], 1
    %s2586 = scalar_lea.sflag [#allocation20], 1
    %2587 = vsyncpa %s2586, 1
    %2588 = vsyncpa [#allocation23], 1
    %s2589 = scalar_lea.sflag [#allocation23], 1
    %2590 = vsyncpa %s2589, 1
    %2591 = vsyncpa [#allocation26], 1
    %s2592 = scalar_lea.sflag [#allocation26], 1
    %2593 = vsyncpa %s2592, 1
    %2594 = vsyncpa [#allocation6], 1
    %s2595 = scalar_lea.sflag [#allocation6], 1
    %2596 = vsyncpa %s2595, 1

</llo_original>
